<compile_context>
chip_gen: v5e
topology: v5e:2x2
jax: 0.10.0
libtpu: 0.0.40
codegen_flags: <defaults>
</compile_context>

<pallas_src>
import math

import jax
import jax.numpy as jnp
from jax import lax
from jax.experimental import pallas as pl
from jax.experimental.pallas import tpu as pltpu

_EPS = 1e-12
_N_STATS = 9          # sv, s1x, s1y, Sxy, Sxx, Syy, Pxy, Pxx, Pyy
_STATS_ROWS = 16      # padded to a sublane-aligned row count


def _sqdist_tile(a, b):
    """Clamped squared Euclidean distances between COLUMNS of a (d,ta), b (d,tb)."""
    na = jnp.sum(a * a, axis=0)[:, None]                              # (ta, 1)
    nb = jnp.sum(b * b, axis=0)[None, :]                              # (1, tb)
    gram = lax.dot_general(a, b, (((0,), (0,)), ((), ())),
                           preferred_element_type=jnp.float32)        # (ta, tb)
    return jnp.maximum(na + nb - 2.0 * gram, 0.0)


def _make_cdcor_kernel(t, n, matmul_dtype):
    """Kernel for square tiles of size `t`; n (true sample count) is static."""

    def kernel(shift_ref, x_ref, y_ref, z_ref, o_ref,
               acc_ref, lhs_ref, wcache_ref, stats_ref):
        k = pl.program_id(0)
        i = pl.program_id(1)
        j = pl.program_id(2)
        last_i = pl.num_programs(1) - 1
        last_j = pl.num_programs(2) - 1

        i0 = pl.multiple_of(i * t, t)
        j0 = pl.multiple_of(j * t, t)
        k0 = pl.multiple_of(k * t, t)

        cx = shift_ref[0]          # constant distance shifts (exact no-op for
        cy = shift_ref[1]          # cdcor; they only improve bf16 conditioning)

        @pl.when(jnp.logical_and(i == 0, j == 0))
        def _zero_stats():
            stats_ref[...] = jnp.zeros_like(stats_ref)

        # --- KDE tile w[j, k]: built only once per k block (i == 0), cached
        #     in VMEM and reused for every i and for the per-(k,i) stats pass.
        #     z was pre-scaled so w = exp(-||zj - zk||^2); padded rows -> 0.
        @pl.when(i == 0)
        def _build_w():
            z_j = z_ref[:, pl.ds(j0, t)]
            z_k = z_ref[:, pl.ds(k0, t)]
            valid_j = (j0 + lax.broadcasted_iota(jnp.int32, (t, 1), 0)) < n
            w = jnp.where(valid_j, jnp.exp(-_sqdist_tile(z_j, z_k)), 0.0)
            wcache_ref[pl.ds(j0, t), :] = w.astype(matmul_dtype)

        w_mm = wcache_ref[pl.ds(j0, t), :]

        # --- distance tiles; all elementwise math in f32 (no bf16 VPU on v5e),
        #     only the MXU operands are cast.
        x_i = x_ref[:, pl.ds(i0, t)]
        x_j = x_ref[:, pl.ds(j0, t)]
        y_i = y_ref[:, pl.ds(i0, t)]
        y_j = y_ref[:, pl.ds(j0, t)]
        dx_t = jnp.sqrt(_sqdist_tile(x_i, x_j)) - cx       # (t, t)
        dy_t = jnp.sqrt(_sqdist_tile(y_i, y_j)) - cy

        # --- stage the 5 stacked LHS blocks (no concatenate) and issue ONE
        #     (5t,t)@(t,t) MXU matmul with an f32 accumulator.
        lhs_ref[0 * t:1 * t, :] = dx_t.astype(matmul_dtype)
        lhs_ref[1 * t:2 * t, :] = dy_t.astype(matmul_dtype)
        lhs_ref[2 * t:3 * t, :] = (dx_t * dy_t).astype(matmul_dtype)
        lhs_ref[3 * t:4 * t, :] = (dx_t * dx_t).astype(matmul_dtype)
        lhs_ref[4 * t:5 * t, :] = (dy_t * dy_t).astype(matmul_dtype)

        prod = jnp.dot(lhs_ref[...], w_mm, preferred_element_type=jnp.float32)

        @pl.when(j == 0)
        def _init_acc():                       # direct write: no zero + re-add
            acc_ref[...] = prod

        @pl.when(j > 0)
        def _add_acc():
            acc_ref[...] += prod

        @pl.when(j == last_j)
        def _accumulate_stats():
            # Cache rows for padded i are already zero, so no extra i-mask.
            w_ik = wcache_ref[pl.ds(i0, t), :].astype(jnp.float32)

            acc = acc_ref[...]
            dxw = acc[0 * t:1 * t, :]
            dyw = acc[1 * t:2 * t, :]
            pxyw = acc[2 * t:3 * t, :]
            pxxw = acc[3 * t:4 * t, :]
            pyyw = acc[4 * t:5 * t, :]

            wdx = w_ik * dxw
            wdy = w_ik * dyw

            def csum(m):                       # (t, t) -> (1, t)
                return jnp.sum(m, axis=0, keepdims=True)

            parts = jnp.concatenate(
                [csum(w_ik),            # sv
                 csum(wdx),             # s1x
                 csum(wdy),             # s1y
                 csum(wdx * dyw),       # Sxy
                 csum(wdx * dxw),       # Sxx
                 csum(wdy * dyw),       # Syy
                 csum(w_ik * pxyw),     # Pxy
                 csum(w_ik * pxxw),     # Pxx
                 csum(w_ik * pyyw),     # Pyy
                 jnp.zeros((_STATS_ROWS - _N_STATS, t), jnp.float32)],
                axis=0)
            stats_ref[...] += parts

        @pl.when(jnp.logical_and(i == last_i, j == last_j))
        def _finalize():
            st = stats_ref[...]
            sv, s1x, s1y = st[0:1, :], st[1:2, :], st[2:3, :]
            sxy, sxx, syy = st[3:4, :], st[4:5, :], st[5:6, :]
            pxy, pxx, pyy = st[6:7, :], st[7:8, :], st[8:9, :]

            # exact divide: the approx reciprocal's error would be amplified by
            # the cancellation below; it's only a (1,t) op once per k block.
            inv_sv = 1.0 / (sv + _EPS)
            cov_xy = pxy - 2.0 * sxy * inv_sv + s1x * s1y * inv_sv * inv_sv
            cov_xx = pxx - 2.0 * sxx * inv_sv + s1x * s1x * inv_sv * inv_sv
            cov_yy = pyy - 2.0 * syy * inv_sv + s1y * s1y * inv_sv * inv_sv

            dcor = cov_xy * lax.rsqrt(jnp.maximum(cov_xx * cov_yy, _EPS))
            valid_k = (k0 + lax.broadcasted_iota(jnp.int32, (1, t), 1)) < n
            o_ref[...] = jnp.where(valid_k, dcor, 0.0)

    return kernel


def _round_up(a, m):
    return ((a + m - 1) // m) * m


def _typical_distance(a):
    """Cheap O(n*d) estimate of the typical pairwise distance between rows."""
    c = a - jnp.mean(a, axis=0, keepdims=True)
    return jnp.sqrt(2.0 * jnp.mean(jnp.sum(c * c, axis=1)) + 1e-30)


def conditional_distance_correlation(x, y, z, bandwidth, *, tile=None,
                                     matmul_dtype=jnp.bfloat16):
    """JAX/Pallas equivalent of ConditionalDistanceCorrelation.forward.

    matmul_dtype=jnp.bfloat16 (default) runs the O(N^3) stacked matmul on the
    MXU's fast path; the in-kernel constant distance shift keeps the covariance
    reduction well-conditioned.  Pass matmul_dtype=jnp.float32 for a bit-exact
    (slower) path.
    """
    assert x.ndim < 3 and y.ndim < 3 and z.ndim < 3
    x = (x if x.ndim == 2 else x[:, None]).astype(jnp.float32)
    y = (y if y.ndim == 2 else y[:, None]).astype(jnp.float32)
    z = (z if z.ndim == 2 else z[:, None]).astype(jnp.float32)
    n = x.shape[0]

    # cdcor is invariant to scaling w by a constant: drop the Gaussian
    # normalisation and fold BOTH sigma and the 0.5 into z, so the kernel only
    # needs exp(-||zi - zj||^2).
    sigma = jnp.asarray(bandwidth, dtype=jnp.float32)
    z = z / (sigma * jnp.float32(math.sqrt(2.0)))

    # Tile selection: bigger tiles amortize the O(N^2 * nb) dx/dy recompute and
    # per-step overhead; VMEM budget below is capped under v7x's 64 MiB.
    if tile is not None:
        t = tile
    elif n <= 128:
        t = 128
    elif n <= 512:
        t = 256
    else:
        t = 512
    assert t % 128 == 0
    n_pad = _round_up(max(n, 1), t)
    nb = n_pad // t

    # Lane-dense (d, N_pad) layout: avoids the ~32x lane padding of resident
    # (N, d<128) f32 arrays in VMEM.
    def prep(a):
        return jnp.pad(jnp.transpose(a), ((0, 0), (0, n_pad - n)))

    x_t, y_t, z_t = prep(x), prep(y), prep(z)

    # Constant shifts subtracted from dx/dy in-kernel (exact no-op for cdcor).
    shifts = jnp.stack([_typical_distance(x),
                        _typical_distance(y)]).astype(jnp.float32)

    mm_bytes = jnp.dtype(matmul_dtype).itemsize

    def _subl(d):
        return _round_up(d, 8)

    est_vmem = (5 * t * t * 4                          # f32 accumulator
                + 5 * t * t * mm_bytes                 # staged stacked LHS
                + n_pad * t * mm_bytes                 # w[j,k] cache (one k block)
                + _STATS_ROWS * t * 4                  # column stats
                + 2 * 4 * n_pad * (_subl(x.shape[1]) + _subl(y.shape[1])
                                   + _subl(z.shape[1])))   # double-buffered inputs
    # Cap below v7x's 64 MiB physical VMEM; for very large N with f32 matmuls
    # pass a smaller `tile` explicitly.
    vmem_limit = min(max(32 * 1024 * 1024, int(est_vmem * 1.5)),
                     56 * 1024 * 1024)

    grid_spec = pltpu.PrefetchScalarGridSpec(
        num_scalar_prefetch=0,
        grid=(nb, nb, nb),                 # (k, i, j); j is the MXU contraction
        in_specs=[
            pl.BlockSpec(memory_space=pltpu.MemorySpace.SMEM),          # shifts
            pl.BlockSpec((x_t.shape[0], n_pad), lambda k, i, j: (0, 0)),
            pl.BlockSpec((y_t.shape[0], n_pad), lambda k, i, j: (0, 0)),
            pl.BlockSpec((z_t.shape[0], n_pad), lambda k, i, j: (0, 0)),
        ],
        out_specs=pl.BlockSpec((1, t), lambda k, i, j: (0, k)),
        scratch_shapes=[
            pltpu.VMEM((5 * t, t), jnp.float32),        # stacked matmul acc
            pltpu.VMEM((5 * t, t), matmul_dtype),       # staged stacked LHS
            pltpu.VMEM((n_pad, t), matmul_dtype),       # per-k-block w[j,k] cache
            pltpu.VMEM((_STATS_ROWS, t), jnp.float32),  # per-k column stats
        ],
    )

    dcor = pl.pallas_call(
        _make_cdcor_kernel(t, n, matmul_dtype),
        out_shape=jax.ShapeDtypeStruct((1, n_pad), jnp.float32),
        grid_spec=grid_spec,
        compiler_params=pltpu.CompilerParams(
            dimension_semantics=("parallel", "arbitrary", "arbitrary"),
            vmem_limit_bytes=vmem_limit,
        ),
    )(shifts, x_t, y_t, z_t)

    # Padded k columns were masked to 0 in-kernel: mean over the n real ones.
    return jnp.sum(dcor) / n


def _reference(x, y, z, bandwidth):
    """Direct (O(N^3) tensor) pure-JAX port of the PyTorch code, for checking."""
    x = x if x.ndim == 2 else x[:, None]
    y = y if y.ndim == 2 else y[:, None]
    z = z if z.ndim == 2 else z[:, None]

    def edm(a):
        n2 = jnp.sum(a * a, axis=1)
        d2 = n2[:, None] + n2[None, :] - 2.0 * a @ a.T
        return jnp.sqrt(jnp.maximum(d2, 0.0))

    dx, dy = edm(x), edm(y)
    n, d = z.shape
    n2 = jnp.sum(z * z, axis=1)
    kz = jnp.maximum(n2[:, None] + n2[None, :] - 2.0 * z @ z.T, 0.0)
    sigma = jnp.float32(bandwidth)
    norm = 1.0 / (math.pow(2.0 * math.pi, d / 2.0) * float(bandwidth) ** d)
    w = jnp.exp(-0.5 * kz / (sigma * sigma)) * norm

    def centered(dm):
        ws = jnp.sum(w, axis=1, keepdims=True)                    # (N,1)
        marg = dm @ w.T / (ws.T + 1e-12)                          # (N,N)
        wds = jnp.sum(marg * w.T, axis=0) / (ws[:, 0] + 1e-12)    # (N,)
        return dm[:, :, None] - marg[:, None, :] - marg[None, :, :] + wds

    ax, ay = centered(dx), centered(dy)
    wt = w[None, :, :] * w[:, None, :]
    cxy = jnp.sum(ax * ay * wt, axis=(0, 1))
    cxx = jnp.sum(ax * ax * wt, axis=(0, 1))
    cyy = jnp.sum(ay * ay * wt, axis=(0, 1))
    dcor = cxy / jnp.sqrt(jnp.maximum(cxx * cyy, 1e-12))
    return jnp.mean(dcor)


if __name__ == "__main__":
    key = jax.random.PRNGKey(0)
    k1, k2, k3, k4, k5, k6 = jax.random.split(key, 6)

    def check(out, ref, atol, rtol):
        assert bool(jnp.isfinite(out)), out
        err = abs(float(out) - float(ref))
        assert err <= atol + rtol * abs(float(ref)), (float(out), float(ref), err)

    # Case 1: tiny (pads 16 -> 128, single-tile grid); bf16 default + f32 path.
    n1 = 16
    x1 = jax.random.normal(k1, (n1, 4), dtype=jnp.float32)
    y1 = jax.random.normal(k2, (n1, 4), dtype=jnp.float32)
    z1 = jax.random.normal(k3, (n1, 2), dtype=jnp.float32)
    ref1 = jax.block_until_ready(_reference(x1, y1, z1, 1.0))
    out1_bf16 = jax.block_until_ready(
        conditional_distance_correlation(x1, y1, z1, 1.0))
    check(out1_bf16, ref1, atol=5e-3, rtol=2e-2)
    out1_f32 = jax.block_until_ready(
        conditional_distance_correlation(x1, y1, z1, 1.0,
                                         matmul_dtype=jnp.float32))
    check(out1_f32, ref1, atol=2e-3, rtol=0.0)

    # Case 2: non-tile-aligned n > tile with tile=128 -> grid (2, 2, 2):
    # exercises padding masks, the w[j,k] cache reuse and multi-block accum.
    n2 = 200
    x2 = jax.random.normal(k4, (n2, 4), dtype=jnp.float32)
    y2 = jax.random.normal(k5, (n2, 3), dtype=jnp.float32)
    z2 = jax.random.normal(k6, (n2,), dtype=jnp.float32)      # 1-D branch
    ref2 = jax.block_until_ready(_reference(x2, y2, z2, 0.7))
    out2_bf16 = jax.block_until_ready(
        conditional_distance_correlation(x2, y2, z2, 0.7, tile=128))
    check(out2_bf16, ref2, atol=5e-3, rtol=2e-2)
    out2_f32 = jax.block_until_ready(
        conditional_distance_correlation(x2, y2, z2, 0.7, tile=128,
                                         matmul_dtype=jnp.float32))
    check(out2_f32, ref2, atol=5e-3, rtol=0.0)

    print("KERNEL_OK")
</pallas_src>

<mosaic_0001>
module attributes {stable_mosaic.version = 11 : i64} {
  func.func @kernel(%arg0: i32, %arg1: i32, %arg2: i32, %arg3: memref<2xf32, #tpu.memory_space<smem>>, %arg4: memref<4x128xf32, #tpu.memory_space<vmem>>, %arg5: memref<4x128xf32, #tpu.memory_space<vmem>>, %arg6: memref<2x128xf32, #tpu.memory_space<vmem>>, %arg7: memref<1x128xf32, #tpu.memory_space<vmem>>, %arg8: memref<640x128xf32, #tpu.memory_space<vmem>>, %arg9: memref<640x128xbf16, #tpu.memory_space<vmem>>, %arg10: memref<128x128xbf16, #tpu.memory_space<vmem>>, %arg11: memref<16x128xf32, #tpu.memory_space<vmem>>) attributes {dimension_semantics = [#tpu.dimension_semantics<parallel>, #tpu.dimension_semantics<arbitrary>, #tpu.dimension_semantics<arbitrary>], iteration_bounds = array<i64: 1, 1, 1>, scalar_prefetch = 0 : i64, scratch_operands = 4 : i64, tpu.core_type = #tpu.core_type<tc>, window_params = [{transform_indices = @transform_0, window_bounds = array<i64: 2>}, {pipeline_mode = #tpu.pipeline_mode<synchronous>, transform_indices = @transform_1, window_bounds = array<i64: 4, 128>}, {pipeline_mode = #tpu.pipeline_mode<synchronous>, transform_indices = @transform_2, window_bounds = array<i64: 4, 128>}, {pipeline_mode = #tpu.pipeline_mode<synchronous>, transform_indices = @transform_3, window_bounds = array<i64: 2, 128>}, {transform_indices = @transform_4, window_bounds = array<i64: 1, 128>}]} {
    %c128_i32 = arith.constant 128 : i32
    %0 = arith.muli %arg1, %c128_i32 : i32
    %1 = tpu.assume_multiple %0, 128 : i32
    %c128_i32_0 = arith.constant 128 : i32
    %2 = arith.muli %arg2, %c128_i32_0 : i32
    %3 = tpu.assume_multiple %2, 128 : i32
    %c128_i32_1 = arith.constant 128 : i32
    %4 = arith.muli %arg0, %c128_i32_1 : i32
    %5 = tpu.assume_multiple %4, 128 : i32
    %c0 = arith.constant 0 : index
    %6 = memref.load %arg3[%c0] : memref<2xf32, #tpu.memory_space<smem>>
    %c1 = arith.constant 1 : index
    %7 = memref.load %arg3[%c1] : memref<2xf32, #tpu.memory_space<smem>>
    %c0_i32 = arith.constant 0 : i32
    %8 = arith.cmpi eq, %arg1, %c0_i32 : i32
    %c0_i32_2 = arith.constant 0 : i32
    %9 = arith.cmpi eq, %arg2, %c0_i32_2 : i32
    %10 = arith.andi %8, %9 : i1
    %11 = arith.extui %10 : i1 to i32
    %c0_i32_3 = arith.constant 0 : i32
    %12 = arith.cmpi ne, %11, %c0_i32_3 : i32
    scf.if %12 {
      %cst_38 = arith.constant 0.000000e+00 : f32
      %91 = vector.broadcast %cst_38 : f32 to vector<16x128xf32>
      %c0_39 = arith.constant 0 : index
      %c0_40 = arith.constant 0 : index
      %92 = vector.load %arg11[%c0_39, %c0_40] : memref<16x128xf32, #tpu.memory_space<vmem>>, vector<16x128xf32>
      tpu.vector_store %arg11[%c0_39, %c0_40], %91 {strides = array<i32>} : memref<16x128xf32, #tpu.memory_space<vmem>>, vector<16x128xf32>,
    } else {
    }
    %c0_i32_4 = arith.constant 0 : i32
    %13 = arith.cmpi eq, %arg1, %c0_i32_4 : i32
    %14 = arith.extui %13 : i1 to i32
    %c0_i32_5 = arith.constant 0 : i32
    %15 = arith.cmpi ne, %14, %c0_i32_5 : i32
    scf.if %15 {
      %c0_38 = arith.constant 0 : index
      %91 = arith.index_cast %3 : i32 to index
      %92 = vector.load %arg6[%c0_38, %91] : memref<2x128xf32, #tpu.memory_space<vmem>>, vector<2x128xf32>
      %c0_39 = arith.constant 0 : index
      %93 = arith.index_cast %5 : i32 to index
      %94 = vector.load %arg6[%c0_39, %93] : memref<2x128xf32, #tpu.memory_space<vmem>>, vector<2x128xf32>
      %95 = tpu.iota {dimensions = array<i32: 0>} : vector<128x1xi32>
      %96 = vector.broadcast %3 : i32 to vector<128x1xi32>
      %97 = arith.addi %96, %95 : vector<128x1xi32>
      %c16_i32 = arith.constant 16 : i32
      %98 = vector.broadcast %c16_i32 : i32 to vector<128x1xi32>
      %99 = arith.cmpi slt, %97, %98 : vector<128x1xi32>
      %100 = arith.mulf %92, %92 : vector<2x128xf32>
      %cst_40 = arith.constant dense<0.000000e+00> : vector<128xf32>
      %101 = vector.multi_reduction <add>, %100, %cst_40 [0] : vector<2x128xf32> to vector<128xf32>
      %102 = vector.shape_cast %101 : vector<128xf32> to vector<128x1xf32>
      %103 = arith.mulf %94, %94 : vector<2x128xf32>
      %cst_41 = arith.constant dense<0.000000e+00> : vector<128xf32>
      %104 = vector.multi_reduction <add>, %103, %cst_41 [0] : vector<2x128xf32> to vector<128xf32>
      %105 = vector.shape_cast %104 : vector<128xf32> to vector<1x128xf32>
      %cst_42 = arith.constant dense<0.000000e+00> : vector<128x128xf32>
      %106 = tpu.matmul %92, %94, %cst_42 {dimension_numbers = #tpu.dot_dimension_numbers<[0], [0], [1], [1], [0, 1, 1, 1], [], []>} : vector<2x128xf32>, vector<2x128xf32>, vector<128x128xf32> -> vector<128x128xf32>
      %107 = vector.broadcast %102 : vector<128x1xf32> to vector<128x128xf32>
      %108 = vector.broadcast %105 : vector<1x128xf32> to vector<128x128xf32>
      %109 = arith.addf %107, %108 : vector<128x128xf32>
      %cst_43 = arith.constant 2.000000e+00 : f32
      %110 = vector.broadcast %cst_43 : f32 to vector<128x128xf32>
      %111 = arith.mulf %110, %106 : vector<128x128xf32>
      %112 = arith.subf %109, %111 : vector<128x128xf32>
      %cst_44 = arith.constant 0.000000e+00 : f32
      %113 = vector.broadcast %cst_44 : f32 to vector<128x128xf32>
      %114 = arith.maximumf %112, %113 : vector<128x128xf32>
      %cst_45 = arith.constant 0.000000e+00 : f32
      %115 = vector.broadcast %cst_45 : f32 to vector<128x128xf32>
      %116 = arith.subf %115, %114 : vector<128x128xf32>
      %117 = math.exp %116 : vector<128x128xf32>
      %cst_46 = arith.constant 0.000000e+00 : f32
      %118 = vector.shape_cast %99 : vector<128x1xi1> to vector<128x1xi1>
      %119 = vector.broadcast %118 : vector<128x1xi1> to vector<128x128xi1>
      %120 = vector.broadcast %cst_46 : f32 to vector<128x128xf32>
      %121 = arith.select %119, %117, %120 : vector<128x128xi1>, vector<128x128xf32>
      %122 = arith.truncf %121 : vector<128x128xf32> to vector<128x128xbf16>
      %123 = arith.index_cast %3 : i32 to index
      %c0_47 = arith.constant 0 : index
      %124 = vector.load %arg10[%123, %c0_47] : memref<128x128xbf16, #tpu.memory_space<vmem>>, vector<128x128xbf16>
      tpu.vector_store %arg10[%123, %c0_47], %122 {strides = array<i32>} : memref<128x128xbf16, #tpu.memory_space<vmem>>, vector<128x128xbf16>,
    } else {
    }
    %16 = arith.index_cast %3 : i32 to index
    %c0_6 = arith.constant 0 : index
    %17 = vector.load %arg10[%16, %c0_6] : memref<128x128xbf16, #tpu.memory_space<vmem>>, vector<128x128xbf16>
    %c0_7 = arith.constant 0 : index
    %18 = arith.index_cast %1 : i32 to index
    %19 = vector.load %arg4[%c0_7, %18] : memref<4x128xf32, #tpu.memory_space<vmem>>, vector<4x128xf32>
    %c0_8 = arith.constant 0 : index
    %20 = arith.index_cast %3 : i32 to index
    %21 = vector.load %arg4[%c0_8, %20] : memref<4x128xf32, #tpu.memory_space<vmem>>, vector<4x128xf32>
    %c0_9 = arith.constant 0 : index
    %22 = arith.index_cast %1 : i32 to index
    %23 = vector.load %arg5[%c0_9, %22] : memref<4x128xf32, #tpu.memory_space<vmem>>, vector<4x128xf32>
    %c0_10 = arith.constant 0 : index
    %24 = arith.index_cast %3 : i32 to index
    %25 = vector.load %arg5[%c0_10, %24] : memref<4x128xf32, #tpu.memory_space<vmem>>, vector<4x128xf32>
    %26 = arith.mulf %19, %19 : vector<4x128xf32>
    %cst = arith.constant dense<0.000000e+00> : vector<128xf32>
    %27 = vector.multi_reduction <add>, %26, %cst [0] : vector<4x128xf32> to vector<128xf32>
    %28 = vector.shape_cast %27 : vector<128xf32> to vector<128x1xf32>
    %29 = arith.mulf %21, %21 : vector<4x128xf32>
    %cst_11 = arith.constant dense<0.000000e+00> : vector<128xf32>
    %30 = vector.multi_reduction <add>, %29, %cst_11 [0] : vector<4x128xf32> to vector<128xf32>
    %31 = vector.shape_cast %30 : vector<128xf32> to vector<1x128xf32>
    %cst_12 = arith.constant dense<0.000000e+00> : vector<128x128xf32>
    %32 = tpu.matmul %19, %21, %cst_12 {dimension_numbers = #tpu.dot_dimension_numbers<[0], [0], [1], [1], [0, 1, 1, 1], [], []>} : vector<4x128xf32>, vector<4x128xf32>, vector<128x128xf32> -> vector<128x128xf32>
    %33 = vector.broadcast %28 : vector<128x1xf32> to vector<128x128xf32>
    %34 = vector.broadcast %31 : vector<1x128xf32> to vector<128x128xf32>
    %35 = arith.addf %33, %34 : vector<128x128xf32>
    %cst_13 = arith.constant 2.000000e+00 : f32
    %36 = vector.broadcast %cst_13 : f32 to vector<128x128xf32>
    %37 = arith.mulf %36, %32 : vector<128x128xf32>
    %38 = arith.subf %35, %37 : vector<128x128xf32>
    %cst_14 = arith.constant 0.000000e+00 : f32
    %39 = vector.broadcast %cst_14 : f32 to vector<128x128xf32>
    %40 = arith.maximumf %38, %39 : vector<128x128xf32>
    %41 = math.sqrt %40 : vector<128x128xf32>
    %42 = vector.broadcast %6 : f32 to vector<128x128xf32>
    %43 = arith.subf %41, %42 : vector<128x128xf32>
    %44 = arith.mulf %23, %23 : vector<4x128xf32>
    %cst_15 = arith.constant dense<0.000000e+00> : vector<128xf32>
    %45 = vector.multi_reduction <add>, %44, %cst_15 [0] : vector<4x128xf32> to vector<128xf32>
    %46 = vector.shape_cast %45 : vector<128xf32> to vector<128x1xf32>
    %47 = arith.mulf %25, %25 : vector<4x128xf32>
    %cst_16 = arith.constant dense<0.000000e+00> : vector<128xf32>
    %48 = vector.multi_reduction <add>, %47, %cst_16 [0] : vector<4x128xf32> to vector<128xf32>
    %49 = vector.shape_cast %48 : vector<128xf32> to vector<1x128xf32>
    %cst_17 = arith.constant dense<0.000000e+00> : vector<128x128xf32>
    %50 = tpu.matmul %23, %25, %cst_17 {dimension_numbers = #tpu.dot_dimension_numbers<[0], [0], [1], [1], [0, 1, 1, 1], [], []>} : vector<4x128xf32>, vector<4x128xf32>, vector<128x128xf32> -> vector<128x128xf32>
    %51 = vector.broadcast %46 : vector<128x1xf32> to vector<128x128xf32>
    %52 = vector.broadcast %49 : vector<1x128xf32> to vector<128x128xf32>
    %53 = arith.addf %51, %52 : vector<128x128xf32>
    %cst_18 = arith.constant 2.000000e+00 : f32
    %54 = vector.broadcast %cst_18 : f32 to vector<128x128xf32>
    %55 = arith.mulf %54, %50 : vector<128x128xf32>
    %56 = arith.subf %53, %55 : vector<128x128xf32>
    %cst_19 = arith.constant 0.000000e+00 : f32
    %57 = vector.broadcast %cst_19 : f32 to vector<128x128xf32>
    %58 = arith.maximumf %56, %57 : vector<128x128xf32>
    %59 = math.sqrt %58 : vector<128x128xf32>
    %60 = vector.broadcast %7 : f32 to vector<128x128xf32>
    %61 = arith.subf %59, %60 : vector<128x128xf32>
    %62 = arith.truncf %43 : vector<128x128xf32> to vector<128x128xbf16>
    %c0_20 = arith.constant 0 : index
    %c0_21 = arith.constant 0 : index
    %63 = vector.load %arg9[%c0_20, %c0_21] : memref<640x128xbf16, #tpu.memory_space<vmem>>, vector<128x128xbf16>
    tpu.vector_store %arg9[%c0_20, %c0_21], %62 {strides = array<i32>} : memref<640x128xbf16, #tpu.memory_space<vmem>>, vector<128x128xbf16>,
    %64 = arith.truncf %61 : vector<128x128xf32> to vector<128x128xbf16>
    %c128 = arith.constant 128 : index
    %c0_22 = arith.constant 0 : index
    %65 = vector.load %arg9[%c128, %c0_22] : memref<640x128xbf16, #tpu.memory_space<vmem>>, vector<128x128xbf16>
    tpu.vector_store %arg9[%c128, %c0_22], %64 {strides = array<i32>} : memref<640x128xbf16, #tpu.memory_space<vmem>>, vector<128x128xbf16>,
    %66 = arith.mulf %43, %61 : vector<128x128xf32>
    %67 = arith.truncf %66 : vector<128x128xf32> to vector<128x128xbf16>
    %c256 = arith.constant 256 : index
    %c0_23 = arith.constant 0 : index
    %68 = vector.load %arg9[%c256, %c0_23] : memref<640x128xbf16, #tpu.memory_space<vmem>>, vector<128x128xbf16>
    tpu.vector_store %arg9[%c256, %c0_23], %67 {strides = array<i32>} : memref<640x128xbf16, #tpu.memory_space<vmem>>, vector<128x128xbf16>,
    %69 = arith.mulf %43, %43 : vector<128x128xf32>
    %70 = arith.truncf %69 : vector<128x128xf32> to vector<128x128xbf16>
    %c384 = arith.constant 384 : index
    %c0_24 = arith.constant 0 : index
    %71 = vector.load %arg9[%c384, %c0_24] : memref<640x128xbf16, #tpu.memory_space<vmem>>, vector<128x128xbf16>
    tpu.vector_store %arg9[%c384, %c0_24], %70 {strides = array<i32>} : memref<640x128xbf16, #tpu.memory_space<vmem>>, vector<128x128xbf16>,
    %72 = arith.mulf %61, %61 : vector<128x128xf32>
    %73 = arith.truncf %72 : vector<128x128xf32> to vector<128x128xbf16>
    %c512 = arith.constant 512 : index
    %c0_25 = arith.constant 0 : index
    %74 = vector.load %arg9[%c512, %c0_25] : memref<640x128xbf16, #tpu.memory_space<vmem>>, vector<128x128xbf16>
    tpu.vector_store %arg9[%c512, %c0_25], %73 {strides = array<i32>} : memref<640x128xbf16, #tpu.memory_space<vmem>>, vector<128x128xbf16>,
    %c0_26 = arith.constant 0 : index
    %c0_27 = arith.constant 0 : index
    %75 = vector.load %arg9[%c0_26, %c0_27] : memref<640x128xbf16, #tpu.memory_space<vmem>>, vector<640x128xbf16>
    %cst_28 = arith.constant dense<0.000000e+00> : vector<640x128xf32>
    %76 = tpu.matmul %75, %17, %cst_28 {dimension_numbers = #tpu.dot_dimension_numbers<[1], [0], [0], [1], [0, 0, 1, 1], [], []>} : vector<640x128xbf16>, vector<128x128xbf16>, vector<640x128xf32> -> vector<640x128xf32>
    %c0_i32_29 = arith.constant 0 : i32
    %77 = arith.cmpi eq, %arg2, %c0_i32_29 : i32
    %78 = arith.extui %77 : i1 to i32
    %c0_i32_30 = arith.constant 0 : i32
    %79 = arith.cmpi ne, %78, %c0_i32_30 : i32
    scf.if %79 {
      %c0_38 = arith.constant 0 : index
      %c0_39 = arith.constant 0 : index
      %91 = vector.load %arg8[%c0_38, %c0_39] : memref<640x128xf32, #tpu.memory_space<vmem>>, vector<640x128xf32>
      tpu.vector_store %arg8[%c0_38, %c0_39], %76 {strides = array<i32>} : memref<640x128xf32, #tpu.memory_space<vmem>>, vector<640x128xf32>,
    } else {
    }
    %c0_i32_31 = arith.constant 0 : i32
    %80 = arith.cmpi sgt, %arg2, %c0_i32_31 : i32
    %81 = arith.extui %80 : i1 to i32
    %c0_i32_32 = arith.constant 0 : i32
    %82 = arith.cmpi ne, %81, %c0_i32_32 : i32
    scf.if %82 {
      %c0_38 = arith.constant 0 : index
      %c0_39 = arith.constant 0 : index
      %91 = vector.load %arg8[%c0_38, %c0_39] : memref<640x128xf32, #tpu.memory_space<vmem>>, vector<640x128xf32>
      %92 = arith.addf %91, %76 : vector<640x128xf32>
      %c0_40 = arith.constant 0 : index
      %c0_41 = arith.constant 0 : index
      %93 = vector.load %arg8[%c0_40, %c0_41] : memref<640x128xf32, #tpu.memory_space<vmem>>, vector<640x128xf32>
      tpu.vector_store %arg8[%c0_40, %c0_41], %92 {strides = array<i32>} : memref<640x128xf32, #tpu.memory_space<vmem>>, vector<640x128xf32>,
    } else {
    }
    %c0_i32_33 = arith.constant 0 : i32
    %83 = arith.cmpi eq, %arg2, %c0_i32_33 : i32
    %84 = arith.extui %83 : i1 to i32
    %c0_i32_34 = arith.constant 0 : i32
    %85 = arith.cmpi ne, %84, %c0_i32_34 : i32
    scf.if %85 {
      %91 = arith.index_cast %1 : i32 to index
      %c0_38 = arith.constant 0 : index
      %92 = vector.load %arg10[%91, %c0_38] : memref<128x128xbf16, #tpu.memory_space<vmem>>, vector<128x128xbf16>
      %93 = arith.extf %92 : vector<128x128xbf16> to vector<128x128xf32>
      %c0_39 = arith.constant 0 : index
      %c0_40 = arith.constant 0 : index
      %94 = vector.load %arg8[%c0_39, %c0_40] : memref<640x128xf32, #tpu.memory_space<vmem>>, vector<640x128xf32>
      %95 = vector.extract_strided_slice %94 {offsets = [0, 0], sizes = [128, 128], strides = [1, 1]} : vector<640x128xf32> to vector<128x128xf32>
      %96 = vector.extract_strided_slice %94 {offsets = [128, 0], sizes = [128, 128], strides = [1, 1]} : vector<640x128xf32> to vector<128x128xf32>
      %97 = vector.extract_strided_slice %94 {offsets = [256, 0], sizes = [128, 128], strides = [1, 1]} : vector<640x128xf32> to vector<128x128xf32>
      %98 = vector.extract_strided_slice %94 {offsets = [384, 0], sizes = [128, 128], strides = [1, 1]} : vector<640x128xf32> to vector<128x128xf32>
      %99 = vector.extract_strided_slice %94 {offsets = [512, 0], sizes = [128, 128], strides = [1, 1]} : vector<640x128xf32> to vector<128x128xf32>
      %100 = arith.mulf %93, %95 : vector<128x128xf32>
      %101 = arith.mulf %93, %96 : vector<128x128xf32>
      %cst_41 = arith.constant dense<0.000000e+00> : vector<128xf32>
      %102 = vector.multi_reduction <add>, %93, %cst_41 [0] : vector<128x128xf32> to vector<128xf32>
      %103 = vector.shape_cast %102 : vector<128xf32> to vector<1x128xf32>
      %cst_42 = arith.constant dense<0.000000e+00> : vector<128xf32>
      %104 = vector.multi_reduction <add>, %100, %cst_42 [0] : vector<128x128xf32> to vector<128xf32>
      %105 = vector.shape_cast %104 : vector<128xf32> to vector<1x128xf32>
      %cst_43 = arith.constant dense<0.000000e+00> : vector<128xf32>
      %106 = vector.multi_reduction <add>, %101, %cst_43 [0] : vector<128x128xf32> to vector<128xf32>
      %107 = vector.shape_cast %106 : vector<128xf32> to vector<1x128xf32>
      %108 = arith.mulf %100, %96 : vector<128x128xf32>
      %cst_44 = arith.constant dense<0.000000e+00> : vector<128xf32>
      %109 = vector.multi_reduction <add>, %108, %cst_44 [0] : vector<128x128xf32> to vector<128xf32>
      %110 = vector.shape_cast %109 : vector<128xf32> to vector<1x128xf32>
      %111 = arith.mulf %100, %95 : vector<128x128xf32>
      %cst_45 = arith.constant dense<0.000000e+00> : vector<128xf32>
      %112 = vector.multi_reduction <add>, %111, %cst_45 [0] : vector<128x128xf32> to vector<128xf32>
      %113 = vector.shape_cast %112 : vector<128xf32> to vector<1x128xf32>
      %114 = arith.mulf %101, %96 : vector<128x128xf32>
      %cst_46 = arith.constant dense<0.000000e+00> : vector<128xf32>
      %115 = vector.multi_reduction <add>, %114, %cst_46 [0] : vector<128x128xf32> to vector<128xf32>
      %116 = vector.shape_cast %115 : vector<128xf32> to vector<1x128xf32>
      %117 = arith.mulf %93, %97 : vector<128x128xf32>
      %cst_47 = arith.constant dense<0.000000e+00> : vector<128xf32>
      %118 = vector.multi_reduction <add>, %117, %cst_47 [0] : vector<128x128xf32> to vector<128xf32>
      %119 = vector.shape_cast %118 : vector<128xf32> to vector<1x128xf32>
      %120 = arith.mulf %93, %98 : vector<128x128xf32>
      %cst_48 = arith.constant dense<0.000000e+00> : vector<128xf32>
      %121 = vector.multi_reduction <add>, %120, %cst_48 [0] : vector<128x128xf32> to vector<128xf32>
      %122 = vector.shape_cast %121 : vector<128xf32> to vector<1x128xf32>
      %123 = arith.mulf %93, %99 : vector<128x128xf32>
      %cst_49 = arith.constant dense<0.000000e+00> : vector<128xf32>
      %124 = vector.multi_reduction <add>, %123, %cst_49 [0] : vector<128x128xf32> to vector<128xf32>
      %125 = vector.shape_cast %124 : vector<128xf32> to vector<1x128xf32>
      %cst_50 = arith.constant 0.000000e+00 : f32
      %126 = vector.broadcast %cst_50 : f32 to vector<7x128xf32>
      %127 = tpu.concatenate %103, %105, %107, %110, %113, %116, %119, %122, %125, %126 in 0 : vector<1x128xf32>, vector<1x128xf32>, vector<1x128xf32>, vector<1x128xf32>, vector<1x128xf32>, vector<1x128xf32>, vector<1x128xf32>, vector<1x128xf32>, vector<1x128xf32>, vector<7x128xf32> -> vector<16x128xf32>
      %c0_51 = arith.constant 0 : index
      %c0_52 = arith.constant 0 : index
      %128 = vector.load %arg11[%c0_51, %c0_52] : memref<16x128xf32, #tpu.memory_space<vmem>>, vector<16x128xf32>
      %129 = arith.addf %128, %127 : vector<16x128xf32>
      %c0_53 = arith.constant 0 : index
      %c0_54 = arith.constant 0 : index
      %130 = vector.load %arg11[%c0_53, %c0_54] : memref<16x128xf32, #tpu.memory_space<vmem>>, vector<16x128xf32>
      tpu.vector_store %arg11[%c0_53, %c0_54], %129 {strides = array<i32>} : memref<16x128xf32, #tpu.memory_space<vmem>>, vector<16x128xf32>,
    } else {
    }
    %c0_i32_35 = arith.constant 0 : i32
    %86 = arith.cmpi eq, %arg1, %c0_i32_35 : i32
    %c0_i32_36 = arith.constant 0 : i32
    %87 = arith.cmpi eq, %arg2, %c0_i32_36 : i32
    %88 = arith.andi %86, %87 : i1
    %89 = arith.extui %88 : i1 to i32
    %c0_i32_37 = arith.constant 0 : i32
    %90 = arith.cmpi ne, %89, %c0_i32_37 : i32
    scf.if %90 {
      %c0_38 = arith.constant 0 : index
      %c0_39 = arith.constant 0 : index
      %91 = vector.load %arg11[%c0_38, %c0_39] : memref<16x128xf32, #tpu.memory_space<vmem>>, vector<16x128xf32>
      %92 = vector.extract_strided_slice %91 {offsets = [0, 0], sizes = [1, 128], strides = [1, 1]} : vector<16x128xf32> to vector<1x128xf32>
      %93 = vector.extract_strided_slice %91 {offsets = [1, 0], sizes = [1, 128], strides = [1, 1]} : vector<16x128xf32> to vector<1x128xf32>
      %94 = vector.extract_strided_slice %91 {offsets = [2, 0], sizes = [1, 128], strides = [1, 1]} : vector<16x128xf32> to vector<1x128xf32>
      %95 = vector.extract_strided_slice %91 {offsets = [3, 0], sizes = [1, 128], strides = [1, 1]} : vector<16x128xf32> to vector<1x128xf32>
      %96 = vector.extract_strided_slice %91 {offsets = [4, 0], sizes = [1, 128], strides = [1, 1]} : vector<16x128xf32> to vector<1x128xf32>
      %97 = vector.extract_strided_slice %91 {offsets = [5, 0], sizes = [1, 128], strides = [1, 1]} : vector<16x128xf32> to vector<1x128xf32>
      %98 = vector.extract_strided_slice %91 {offsets = [6, 0], sizes = [1, 128], strides = [1, 1]} : vector<16x128xf32> to vector<1x128xf32>
      %99 = vector.extract_strided_slice %91 {offsets = [7, 0], sizes = [1, 128], strides = [1, 1]} : vector<16x128xf32> to vector<1x128xf32>
      %100 = vector.extract_strided_slice %91 {offsets = [8, 0], sizes = [1, 128], strides = [1, 1]} : vector<16x128xf32> to vector<1x128xf32>
      %cst_40 = arith.constant 9.99999996E-13 : f32
      %101 = vector.broadcast %cst_40 : f32 to vector<1x128xf32>
      %102 = arith.addf %92, %101 : vector<1x128xf32>
      %cst_41 = arith.constant 1.000000e+00 : f32
      %103 = vector.broadcast %cst_41 : f32 to vector<1x128xf32>
      %104 = arith.divf %103, %102 : vector<1x128xf32>
      %cst_42 = arith.constant 2.000000e+00 : f32
      %105 = vector.broadcast %cst_42 : f32 to vector<1x128xf32>
      %106 = arith.mulf %105, %95 : vector<1x128xf32>
      %107 = arith.mulf %106, %104 : vector<1x128xf32>
      %108 = arith.subf %98, %107 : vector<1x128xf32>
      %109 = arith.mulf %93, %94 : vector<1x128xf32>
      %110 = arith.mulf %109, %104 : vector<1x128xf32>
      %111 = arith.mulf %110, %104 : vector<1x128xf32>
      %112 = arith.addf %108, %111 : vector<1x128xf32>
      %cst_43 = arith.constant 2.000000e+00 : f32
      %113 = vector.broadcast %cst_43 : f32 to vector<1x128xf32>
      %114 = arith.mulf %113, %96 : vector<1x128xf32>
      %115 = arith.mulf %114, %104 : vector<1x128xf32>
      %116 = arith.subf %99, %115 : vector<1x128xf32>
      %117 = arith.mulf %93, %93 : vector<1x128xf32>
      %118 = arith.mulf %117, %104 : vector<1x128xf32>
      %119 = arith.mulf %118, %104 : vector<1x128xf32>
      %120 = arith.addf %116, %119 : vector<1x128xf32>
      %cst_44 = arith.constant 2.000000e+00 : f32
      %121 = vector.broadcast %cst_44 : f32 to vector<1x128xf32>
      %122 = arith.mulf %121, %97 : vector<1x128xf32>
      %123 = arith.mulf %122, %104 : vector<1x128xf32>
      %124 = arith.subf %100, %123 : vector<1x128xf32>
      %125 = arith.mulf %94, %94 : vector<1x128xf32>
      %126 = arith.mulf %125, %104 : vector<1x128xf32>
      %127 = arith.mulf %126, %104 : vector<1x128xf32>
      %128 = arith.addf %124, %127 : vector<1x128xf32>
      %129 = arith.mulf %120, %128 : vector<1x128xf32>
      %cst_45 = arith.constant 9.99999996E-13 : f32
      %130 = vector.broadcast %cst_45 : f32 to vector<1x128xf32>
      %131 = arith.maximumf %129, %130 : vector<1x128xf32>
      %132 = math.rsqrt %131 : vector<1x128xf32>
      %133 = arith.mulf %112, %132 : vector<1x128xf32>
      %134 = tpu.iota {dimensions = array<i32: 1>} : vector<1x128xi32>
      %135 = vector.broadcast %5 : i32 to vector<1x128xi32>
      %136 = arith.addi %135, %134 : vector<1x128xi32>
      %c16_i32 = arith.constant 16 : i32
      %137 = vector.broadcast %c16_i32 : i32 to vector<1x128xi32>
      %138 = arith.cmpi slt, %136, %137 : vector<1x128xi32>
      %cst_46 = arith.constant 0.000000e+00 : f32
      %139 = vector.broadcast %cst_46 : f32 to vector<1x128xf32>
      %140 = arith.select %138, %133, %139 : vector<1x128xi1>, vector<1x128xf32>
      %c0_47 = arith.constant 0 : index
      %c0_48 = arith.constant 0 : index
      %141 = vector.load %arg7[%c0_47, %c0_48] : memref<1x128xf32, #tpu.memory_space<vmem>>, vector<1x128xf32>
      tpu.vector_store %arg7[%c0_47, %c0_48], %140 {strides = array<i32>} : memref<1x128xf32, #tpu.memory_space<vmem>>, vector<1x128xf32>,
    } else {
    }
    return
  }
  func.func @transform_0(%arg0: i32, %arg1: i32, %arg2: i32) -> i32 {
    %c0_i32 = arith.constant 0 : i32
    %c0_i32_0 = arith.constant 0 : i32
    return %c0_i32 : i32
  }
  func.func @transform_1(%arg0: i32, %arg1: i32, %arg2: i32) -> (i32, i32) {
    %c0_i32 = arith.constant 0 : i32
    %c0_i32_0 = arith.constant 0 : i32
    %c0_i32_1 = arith.constant 0 : i32
    return %c0_i32, %c0_i32_0 : i32, i32
  }
  func.func @transform_2(%arg0: i32, %arg1: i32, %arg2: i32) -> (i32, i32) {
    %c0_i32 = arith.constant 0 : i32
    %c0_i32_0 = arith.constant 0 : i32
    %c0_i32_1 = arith.constant 0 : i32
    return %c0_i32, %c0_i32_0 : i32, i32
  }
  func.func @transform_3(%arg0: i32, %arg1: i32, %arg2: i32) -> (i32, i32) {
    %c0_i32 = arith.constant 0 : i32
    %c0_i32_0 = arith.constant 0 : i32
    %c0_i32_1 = arith.constant 0 : i32
    return %c0_i32, %c0_i32_0 : i32, i32
  }
  func.func @transform_4(%arg0: i32, %arg1: i32, %arg2: i32) -> (i32, i32) {
    %c0_i32 = arith.constant 0 : i32
    %c0_i32_0 = arith.constant 0 : i32
    return %c0_i32, %arg0 : i32, i32
  }
}

</mosaic_0001>

<llo_original>
// kernel: tpu_custom_call.1
$region0: #{tpu_custom_call.1}
  #allocation0 [shape = 'u32[]', space=smem, size = 0x4, offset = 0x4, fixed_abs, tag = 'smem constant byte address 0x4 - core index']
  #allocation1 [shape = 'u32[72,128]{1,0:T(1,128)}', space=vmem, size = 0x9000, scoped, tag = 'internal scratch']
  #allocation2 [shape = 'f32[640,128]{1,0:T(8,128)}', space=vmem, size = 0x50000, scoped, tag = 'scratch operand']
  #allocation3 [shape = 'bf16[640,128]{1,0:T(8,128)(2,1)}', space=vmem, size = 0x28000, scoped, tag = 'scratch operand']
  #allocation4 [shape = 'bf16[128,128]{1,0:T(8,128)(2,1)}', space=vmem, size = 0x8000, scoped, tag = 'scratch operand']
  #allocation5 [shape = 'f32[16,128]{1,0:T(8,128)}', space=vmem, size = 0x2000, scoped, tag = 'scratch operand']
  %s0 = inlined_call_operand.hbm [shape: f32[2], index: 0, kind: input, shape index: {}]
  %s1 = inlined_call_operand.hbm [shape: f32[4,128], index: 1, kind: input, shape index: {}]
  %s2 = inlined_call_operand.hbm [shape: f32[4,128], index: 2, kind: input, shape index: {}]
  %s3 = inlined_call_operand.vmem [shape: f32[2,128], index: 3, kind: input, shape index: {}]
  %s4 = inlined_call_operand.hbm [shape: f32[1,128], index: 4, kind: output, shape index: {}]
  %s5 = sld [smem:[#allocation0]]
  $region62: #{tpu_custom_call.1} parent=0
    _
  %s7 = ssub.s32 1, %s5
  %s8 = scalar_select 0, %s7, %s5
  $region1: #{tpu_custom_call.1} parent=0
    #allocation6 [shape = 'u8[512]{0}', space=smem, size = 0x200, scoped, tag = 'input window, operand 0, single buffered']
    #allocation7 [shape = 's32[1]{0}', space=sflag, size = 0x4, scoped, tag = 'scoped memory for tpu_custom_call.1']
    #allocation8 [shape = 's32[1]{0}', space=sflag, size = 0x4, scoped, tag = 'scoped memory for tpu_custom_call.1']
    #allocation9 [shape = 's32[1]{0}', space=sflag, size = 0x4, scoped, tag = 'scoped memory for tpu_custom_call.1']
    #allocation10 [shape = 'u8[2048]{0}', space=vmem, size = 0x800, scoped, tag = 'input window, operand 1, single buffered']
    #allocation11 [shape = 'u8[2048]{0}', space=vmem, size = 0x800, scoped, tag = 'input window, operand 2, single buffered']
    #allocation12 [shape = 's32[1]{0}', space=sflag, size = 0x4, scoped, tag = 'scoped memory for tpu_custom_call.1']
    #allocation13 [shape = 'u8[512]{0}', space=vmem, size = 0x400, scoped, tag = 'output window, operand 0, single buffered']
    %9 = vsyncpa [#allocation9], 0
    %10 = vsyncpa [#allocation7], 0
    %11 = vsyncpa [#allocation12], 0
    %12 = vsyncpa [#allocation8], 0
    // Predicated region
    $region2: #{tpu_custom_call.1} parent=1 // pred_check
      _
    $region3: #{tpu_custom_call.1} parent=1 // pred_check_branch
      %14 = sbr.rel (0) target = $region5
    $region4: #{tpu_custom_call.1} parent=1 // pred_region
      %16 = vsyncadd [#allocation9], 0
      %s18 = sshll.u32 %s0, 4
      %s19 = int_to_ptr.hbm [resolvable:$true] %s18
      %21 = dma.hbm_to_smem %s19, 16, [#allocation6], [#allocation9]
    $region5: #{tpu_custom_call.1} parent=1 // pred_fallthru
      _
    // Predicated region
    $region6: #{tpu_custom_call.1} parent=1 // pred_check
      _
    $region7: #{tpu_custom_call.1} parent=1 // pred_check_branch
      %23 = sbr.rel (0) target = $region9
    $region8: #{tpu_custom_call.1} parent=1 // pred_region
      %25 = vsyncadd [#allocation7], 0
      %s27 = sshll.u32 %s1, 4
      %s28 = int_to_ptr.hbm [resolvable:$true] %s27
      %s29 = sshll.u32 [#allocation10], 4
      %s30 = int_to_ptr.vmem [resolvable:$true] %s29
      %32 = dma.hbm_to_vmem [thread:$0]  %s28, 64, %s30, [#allocation7]
    $region9: #{tpu_custom_call.1} parent=1 // pred_fallthru
      _
    // Predicated region
    $region10: #{tpu_custom_call.1} parent=1 // pred_check
      _
    $region11: #{tpu_custom_call.1} parent=1 // pred_check_branch
      %34 = sbr.rel (0) target = $region13
    $region12: #{tpu_custom_call.1} parent=1 // pred_region
      %36 = vsyncadd [#allocation12], 0
      %s38 = sshll.u32 %s2, 4
      %s39 = int_to_ptr.hbm [resolvable:$true] %s38
      %s40 = sshll.u32 [#allocation11], 4
      %s41 = int_to_ptr.vmem [resolvable:$true] %s40
      %43 = dma.hbm_to_vmem [thread:$0]  %s39, 64, %s41, [#allocation12]
    $region13: #{tpu_custom_call.1} parent=1 // pred_fallthru
      _
    // Predicated region
    $region14: #{tpu_custom_call.1} parent=1 // pred_check
      _
    $region15: #{tpu_custom_call.1} parent=1 // pred_check_branch
      %45 = sbr.rel (0) target = $region17
    $region16: #{tpu_custom_call.1} parent=1 // pred_region
      _
    $region17: #{tpu_custom_call.1} parent=1 // pred_fallthru
      _
    // Predicated region
    $region18: #{tpu_custom_call.1} parent=1 // pred_check
      _
    $region19: #{tpu_custom_call.1} parent=1 // pred_check_branch
      %47 = sbr.rel (0) target = $region21
    $region20: #{tpu_custom_call.1} parent=1 // pred_region
      %49 = dma.done [#allocation9], 16
    $region21: #{tpu_custom_call.1} parent=1 // pred_fallthru
      _
    // Predicated region
    $region22: #{tpu_custom_call.1} parent=1 // pred_check
      _
    $region23: #{tpu_custom_call.1} parent=1 // pred_check_branch
      %51 = sbr.rel (0) target = $region25
    $region24: #{tpu_custom_call.1} parent=1 // pred_region
      %53 = dma.done [#allocation7], 64
    $region25: #{tpu_custom_call.1} parent=1 // pred_fallthru
      _
    // Predicated region
    $region26: #{tpu_custom_call.1} parent=1 // pred_check
      _
    $region27: #{tpu_custom_call.1} parent=1 // pred_check_branch
      %55 = sbr.rel (0) target = $region29
    $region28: #{tpu_custom_call.1} parent=1 // pred_region
      %57 = dma.done [#allocation12], 64
    $region29: #{tpu_custom_call.1} parent=1 // pred_fallthru
      _
    %58 = sfence
    %s59 = smul.u32 0, 128
    %s60 = smul.u32 0, 128
    %s61 = smul.u32 0, 128
    %s62 = sld [smem:[#allocation6]]
    %s63 = sld [smem:[#allocation6 + $0x1]]
    %p64 = scmp.eq.s32.totalorder 0, 0
    %p65 = scmp.eq.s32.totalorder 0, 0
    %p66 = pnand %p64, %p65
    %p67 = pneg %p66
    // Predicated region
    $region30: #{tpu_custom_call.1} parent=1 // pred_check
      _
    $region31: #{tpu_custom_call.1} parent=1 // pred_check_branch
      %69 = sbr.rel (%p66) target = $region33
    $region32: #{tpu_custom_call.1} parent=1 // pred_region
      %70 = vst [vmem:[#allocation5] sm:$0xff] 0.0
      %71 = vst [vmem:[#allocation5 + $0x8] sm:$0xff] 0.0
    $region33: #{tpu_custom_call.1} parent=1 // pred_fallthru
      _
    // Predicated region
    $region34: #{tpu_custom_call.1} parent=1 // pred_check
      %p72 = pneg %p64
    $region35: #{tpu_custom_call.1} parent=1 // pred_check_branch
      %74 = sbr.rel (%p72) target = $region37
    $region36: #{tpu_custom_call.1} parent=1 // pred_region
      %s75 = sshra.s32 %s60, 7
      %s76 = sand.u32 %s60, 127
      %s77 = scalar_lea.vmem %s3, %s75
      %v78 = vld [vmem:[%s77] sm:$0x3]
      %s79 = sshra.s32 %s61, 7
      %s80 = sand.u32 %s61, 127
      %s81 = scalar_lea.vmem %s3, %s79
      %v82 = vld [vmem:[%s81] sm:$0x3]
      %v83 = vlaneseq
      %v84 = vshrl.u32 %v83, 7
      %v85 = vadd.s32 %v84, 8
      %v86 = vadd.s32 %v84, 16
      %v87 = vadd.s32 %v84, 24
      %v88 = vadd.s32 %v84, 32
      %v89 = vadd.s32 %v84, 40
      %v90 = vadd.s32 %v84, 48
      %v91 = vadd.s32 %v84, 56
      %v92 = vadd.s32 %v84, 64
      %v93 = vadd.s32 %v84, 72
      %v94 = vadd.s32 %v84, 80
      %v95 = vadd.s32 %v84, 88
      %v96 = vadd.s32 %v84, 96
      %v97 = vadd.s32 %v84, 104
      %v98 = vadd.s32 %v84, 112
      %v99 = vadd.s32 %v84, 120
      %v100 = vstv %s60
      %v101 = vadd.s32 %v100, %v84
      %v102 = vadd.s32 %v100, %v85
      %v103 = vadd.s32 %v100, %v86
      %v104 = vadd.s32 %v100, %v87
      %v105 = vadd.s32 %v100, %v88
      %v106 = vadd.s32 %v100, %v89
      %v107 = vadd.s32 %v100, %v90
      %v108 = vadd.s32 %v100, %v91
      %v109 = vadd.s32 %v100, %v92
      %v110 = vadd.s32 %v100, %v93
      %v111 = vadd.s32 %v100, %v94
      %v112 = vadd.s32 %v100, %v95
      %v113 = vadd.s32 %v100, %v96
      %v114 = vadd.s32 %v100, %v97
      %v115 = vadd.s32 %v100, %v98
      %v116 = vadd.s32 %v100, %v99
      %vm117 = vcmp.lt.s32.totalorder %v101, 16
      %vm118 = vcmp.lt.s32.totalorder %v102, 16
      %vm119 = vcmp.lt.s32.totalorder %v103, 16
      %vm120 = vcmp.lt.s32.totalorder %v104, 16
      %vm121 = vcmp.lt.s32.totalorder %v105, 16
      %vm122 = vcmp.lt.s32.totalorder %v106, 16
      %vm123 = vcmp.lt.s32.totalorder %v107, 16
      %vm124 = vcmp.lt.s32.totalorder %v108, 16
      %vm125 = vcmp.lt.s32.totalorder %v109, 16
      %vm126 = vcmp.lt.s32.totalorder %v110, 16
      %vm127 = vcmp.lt.s32.totalorder %v111, 16
      %vm128 = vcmp.lt.s32.totalorder %v112, 16
      %vm129 = vcmp.lt.s32.totalorder %v113, 16
      %vm130 = vcmp.lt.s32.totalorder %v114, 16
      %vm131 = vcmp.lt.s32.totalorder %v115, 16
      %vm132 = vcmp.lt.s32.totalorder %v116, 16
      %v133 = vmul.f32 %v78, %v78
      %vm134 = vcmask 1041408
      %v135 = vsel %vm134, %v133, 0.0
      %v136 = vrot.slane %v135, 4
      %v137 = vadd.f32 %v135, %v136
      %v138 = vrot.slane %v137, 2
      %v139 = vadd.f32 %v137, %v138
      %v140 = vrot.slane %v139, 1
      %v141 = vadd.f32 %v139, %v140
      %v142 = vlaneseq
      %v143 = vshrl.u32 %v142, 7
      %145 = vset.pattern.permute.xlu0 %v143
      %146 = vperm.xlu0 %145, %v141
      %v147 = vpop.permute.xlu0 %146
      %v148 = vlaneseq
      %v149 = vshrl.u32 %v148, 7
      %v150 = vadd.s32 %v149, 8
      %151 = vset.pattern.permute.xlu0 %v150
      %152 = vperm.xlu0 %151, %v141
      %v153 = vpop.permute.xlu0 %152
      %v154 = vlaneseq
      %v155 = vshrl.u32 %v154, 7
      %v156 = vadd.s32 %v155, 16
      %157 = vset.pattern.permute.xlu0 %v156
      %158 = vperm.xlu0 %157, %v141
      %v159 = vpop.permute.xlu0 %158
      %v160 = vlaneseq
      %v161 = vshrl.u32 %v160, 7
      %v162 = vadd.s32 %v161, 24
      %163 = vset.pattern.permute.xlu0 %v162
      %164 = vperm.xlu0 %163, %v141
      %v165 = vpop.permute.xlu0 %164
      %v166 = vlaneseq
      %v167 = vshrl.u32 %v166, 7
      %v168 = vadd.s32 %v167, 32
      %169 = vset.pattern.permute.xlu0 %v168
      %170 = vperm.xlu0 %169, %v141
      %v171 = vpop.permute.xlu0 %170
      %v172 = vlaneseq
      %v173 = vshrl.u32 %v172, 7
      %v174 = vadd.s32 %v173, 40
      %175 = vset.pattern.permute.xlu0 %v174
      %176 = vperm.xlu0 %175, %v141
      %v177 = vpop.permute.xlu0 %176
      %v178 = vlaneseq
      %v179 = vshrl.u32 %v178, 7
      %v180 = vadd.s32 %v179, 48
      %181 = vset.pattern.permute.xlu0 %v180
      %182 = vperm.xlu0 %181, %v141
      %v183 = vpop.permute.xlu0 %182
      %v184 = vlaneseq
      %v185 = vshrl.u32 %v184, 7
      %v186 = vadd.s32 %v185, 56
      %187 = vset.pattern.permute.xlu0 %v186
      %188 = vperm.xlu0 %187, %v141
      %v189 = vpop.permute.xlu0 %188
      %v190 = vlaneseq
      %v191 = vshrl.u32 %v190, 7
      %v192 = vadd.s32 %v191, 64
      %193 = vset.pattern.permute.xlu0 %v192
      %194 = vperm.xlu0 %193, %v141
      %v195 = vpop.permute.xlu0 %194
      %v196 = vlaneseq
      %v197 = vshrl.u32 %v196, 7
      %v198 = vadd.s32 %v197, 72
      %199 = vset.pattern.permute.xlu0 %v198
      %200 = vperm.xlu0 %199, %v141
      %v201 = vpop.permute.xlu0 %200
      %v202 = vlaneseq
      %v203 = vshrl.u32 %v202, 7
      %v204 = vadd.s32 %v203, 80
      %205 = vset.pattern.permute.xlu0 %v204
      %206 = vperm.xlu0 %205, %v141
      %v207 = vpop.permute.xlu0 %206
      %v208 = vlaneseq
      %v209 = vshrl.u32 %v208, 7
      %v210 = vadd.s32 %v209, 88
      %211 = vset.pattern.permute.xlu0 %v210
      %212 = vperm.xlu0 %211, %v141
      %v213 = vpop.permute.xlu0 %212
      %v214 = vlaneseq
      %v215 = vshrl.u32 %v214, 7
      %v216 = vadd.s32 %v215, 96
      %217 = vset.pattern.permute.xlu0 %v216
      %218 = vperm.xlu0 %217, %v141
      %v219 = vpop.permute.xlu0 %218
      %v220 = vlaneseq
      %v221 = vshrl.u32 %v220, 7
      %v222 = vadd.s32 %v221, 104
      %223 = vset.pattern.permute.xlu0 %v222
      %224 = vperm.xlu0 %223, %v141
      %v225 = vpop.permute.xlu0 %224
      %v226 = vlaneseq
      %v227 = vshrl.u32 %v226, 7
      %v228 = vadd.s32 %v227, 112
      %229 = vset.pattern.permute.xlu0 %v228
      %230 = vperm.xlu0 %229, %v141
      %v231 = vpop.permute.xlu0 %230
      %v232 = vlaneseq
      %v233 = vshrl.u32 %v232, 7
      %v234 = vadd.s32 %v233, 120
      %235 = vset.pattern.permute.xlu0 %v234
      %236 = vperm.xlu0 %235, %v141
      %v237 = vpop.permute.xlu0 %236
      %v238 = vmul.f32 %v82, %v82
      %v239 = vsel %vm134, %v238, 0.0
      %v240 = vrot.slane %v239, 4
      %v241 = vadd.f32 %v239, %v240
      %v242 = vrot.slane %v241, 2
      %v243 = vadd.f32 %v241, %v242
      %v244 = vrot.slane %v243, 1
      %v245 = vadd.f32 %v243, %v244
      %246 = vxpose.xlu0.b32.start [1/16] %v78, 128
      %247 = vxpose.xlu0.b32.cont [2/16] 0.0, 128
      %248 = vxpose.xlu0.b32.cont [3/16] 0.0, 128
      %249 = vxpose.xlu0.b32.cont [4/16] 0.0, 128
      %250 = vxpose.xlu0.b32.cont [5/16] 0.0, 128
      %251 = vxpose.xlu0.b32.cont [6/16] 0.0, 128
      %252 = vxpose.xlu0.b32.cont [7/16] 0.0, 128
      %253 = vxpose.xlu0.b32.cont [8/16] 0.0, 128
      %254 = vxpose.xlu0.b32.cont [9/16] 0.0, 128
      %255 = vxpose.xlu0.b32.cont [10/16] 0.0, 128
      %256 = vxpose.xlu0.b32.cont [11/16] 0.0, 128
      %257 = vxpose.xlu0.b32.cont [12/16] 0.0, 128
      %258 = vxpose.xlu0.b32.cont [13/16] 0.0, 128
      %259 = vxpose.xlu0.b32.cont [14/16] 0.0, 128
      %260 = vxpose.xlu0.b32.cont [15/16] 0.0, 128
      %261 = vxpose.xlu0.b32.end [16/16] 0.0, 128
      %v262 = vpop.trf.xlu0
      %v263 = vpop.trf.xlu0
      %v264 = vpop.trf.xlu0
      %v265 = vpop.trf.xlu0
      %v266 = vpop.trf.xlu0
      %v267 = vpop.trf.xlu0
      %v268 = vpop.trf.xlu0
      %v269 = vpop.trf.xlu0
      %v270 = vpop.trf.xlu0
      %v271 = vpop.trf.xlu0
      %v272 = vpop.trf.xlu0
      %v273 = vpop.trf.xlu0
      %v274 = vpop.trf.xlu0
      %v275 = vpop.trf.xlu0
      %v276 = vpop.trf.xlu0
      %v277 = vpop.trf.xlu0
      %vm278 = vcmask 15360
      %v280 = vsel %vm278, %v262, 0
      %v283 = vsel %vm278, %v263, 0
      %v286 = vsel %vm278, %v264, 0
      %v289 = vsel %vm278, %v265, 0
      %v292 = vsel %vm278, %v266, 0
      %v295 = vsel %vm278, %v267, 0
      %v298 = vsel %vm278, %v268, 0
      %v301 = vsel %vm278, %v269, 0
      %v304 = vsel %vm278, %v270, 0
      %v307 = vsel %vm278, %v271, 0
      %v310 = vsel %vm278, %v272, 0
      %v313 = vsel %vm278, %v273, 0
      %v316 = vsel %vm278, %v274, 0
      %v319 = vsel %vm278, %v275, 0
      %v322 = vsel %vm278, %v276, 0
      %v325 = vsel %vm278, %v277, 0
      %v328 = vsel %vm134, %v82, 0
      %330 = vmatpush.msra.mxu0 0.0
      %331 = vmatpush.msra.mxu0 0.0
      %332 = vmatpush.msra.mxu0 0.0
      %333 = vmatpush.msra.mxu0 0.0
      %334 = vmatpush.msra.mxu0 0.0
      %335 = vmatpush.msra.mxu0 0.0
      %336 = vmatpush.msra.mxu0 0.0
      %337 = vmatpush.msra.mxu0 0.0
      %338 = vmatpush.msra.mxu0 0.0
      %339 = vmatpush.msra.mxu0 0.0
      %340 = vmatpush.msra.mxu0 0.0
      %341 = vmatpush.msra.mxu0 0.0
      %342 = vmatpush.msra.mxu0 0.0
      %343 = vmatpush.msra.mxu0 0.0
      %344 = vmatpush.msra.mxu0 0.0
      %345 = vmatpush.msra.mxu0 %v328
      %346 = vmatmul.f32.gmra.mxu0 %v280
      %v347 = vpop.f32.mrf.mxu0
      %v348 = vadd.f32 0.0, %v347
      %349 = vmatmul.f32.gmra.mxu0 %v283
      %v350 = vpop.f32.mrf.mxu0
      %v351 = vadd.f32 0.0, %v350
      %352 = vmatmul.f32.gmra.mxu0 %v286
      %v353 = vpop.f32.mrf.mxu0
      %v354 = vadd.f32 0.0, %v353
      %355 = vmatmul.f32.gmra.mxu0 %v289
      %v356 = vpop.f32.mrf.mxu0
      %v357 = vadd.f32 0.0, %v356
      %358 = vmatmul.f32.gmra.mxu0 %v292
      %v359 = vpop.f32.mrf.mxu0
      %v360 = vadd.f32 0.0, %v359
      %361 = vmatmul.f32.gmra.mxu0 %v295
      %v362 = vpop.f32.mrf.mxu0
      %v363 = vadd.f32 0.0, %v362
      %364 = vmatmul.f32.gmra.mxu0 %v298
      %v365 = vpop.f32.mrf.mxu0
      %v366 = vadd.f32 0.0, %v365
      %367 = vmatmul.f32.gmra.mxu0 %v301
      %v368 = vpop.f32.mrf.mxu0
      %v369 = vadd.f32 0.0, %v368
      %370 = vmatmul.f32.gmra.mxu0 %v304
      %v371 = vpop.f32.mrf.mxu0
      %v372 = vadd.f32 0.0, %v371
      %373 = vmatmul.f32.gmra.mxu0 %v307
      %v374 = vpop.f32.mrf.mxu0
      %v375 = vadd.f32 0.0, %v374
      %376 = vmatmul.f32.gmra.mxu0 %v310
      %v377 = vpop.f32.mrf.mxu0
      %v378 = vadd.f32 0.0, %v377
      %379 = vmatmul.f32.gmra.mxu0 %v313
      %v380 = vpop.f32.mrf.mxu0
      %v381 = vadd.f32 0.0, %v380
      %382 = vmatmul.f32.gmra.mxu0 %v316
      %v383 = vpop.f32.mrf.mxu0
      %v384 = vadd.f32 0.0, %v383
      %385 = vmatmul.f32.gmra.mxu0 %v319
      %v386 = vpop.f32.mrf.mxu0
      %v387 = vadd.f32 0.0, %v386
      %388 = vmatmul.f32.gmra.mxu0 %v322
      %v389 = vpop.f32.mrf.mxu0
      %v390 = vadd.f32 0.0, %v389
      %391 = vmatmul.f32.gmra.mxu0 %v325
      %v392 = vpop.f32.mrf.mxu0
      %v393 = vadd.f32 0.0, %v392
      %394 = vdwg.mxu0
      %v395 = vadd.f32 %v147, %v245
      %v396 = vadd.f32 %v153, %v245
      %v397 = vadd.f32 %v159, %v245
      %v398 = vadd.f32 %v165, %v245
      %v399 = vadd.f32 %v171, %v245
      %v400 = vadd.f32 %v177, %v245
      %v401 = vadd.f32 %v183, %v245
      %v402 = vadd.f32 %v189, %v245
      %v403 = vadd.f32 %v195, %v245
      %v404 = vadd.f32 %v201, %v245
      %v405 = vadd.f32 %v207, %v245
      %v406 = vadd.f32 %v213, %v245
      %v407 = vadd.f32 %v219, %v245
      %v408 = vadd.f32 %v225, %v245
      %v409 = vadd.f32 %v231, %v245
      %v410 = vadd.f32 %v237, %v245
      %v411 = vmul.f32 %v348, 2.0
      %v412 = vmul.f32 %v351, 2.0
      %v413 = vmul.f32 %v354, 2.0
      %v414 = vmul.f32 %v357, 2.0
      %v415 = vmul.f32 %v360, 2.0
      %v416 = vmul.f32 %v363, 2.0
      %v417 = vmul.f32 %v366, 2.0
      %v418 = vmul.f32 %v369, 2.0
      %v419 = vmul.f32 %v372, 2.0
      %v420 = vmul.f32 %v375, 2.0
      %v421 = vmul.f32 %v378, 2.0
      %v422 = vmul.f32 %v381, 2.0
      %v423 = vmul.f32 %v384, 2.0
      %v424 = vmul.f32 %v387, 2.0
      %v425 = vmul.f32 %v390, 2.0
      %v426 = vmul.f32 %v393, 2.0
      %v427 = vsub.f32 %v395, %v411
      %v428 = vsub.f32 %v396, %v412
      %v429 = vsub.f32 %v397, %v413
      %v430 = vsub.f32 %v398, %v414
      %v431 = vsub.f32 %v399, %v415
      %v432 = vsub.f32 %v400, %v416
      %v433 = vsub.f32 %v401, %v417
      %v434 = vsub.f32 %v402, %v418
      %v435 = vsub.f32 %v403, %v419
      %v436 = vsub.f32 %v404, %v420
      %v437 = vsub.f32 %v405, %v421
      %v438 = vsub.f32 %v406, %v422
      %v439 = vsub.f32 %v407, %v423
      %v440 = vsub.f32 %v408, %v424
      %v441 = vsub.f32 %v409, %v425
      %v442 = vsub.f32 %v410, %v426
      %v443 = vmax.f32 %v427, 0.0
      %v444 = vmax.f32 %v428, 0.0
      %v445 = vmax.f32 %v429, 0.0
      %v446 = vmax.f32 %v430, 0.0
      %v447 = vmax.f32 %v431, 0.0
      %v448 = vmax.f32 %v432, 0.0
      %v449 = vmax.f32 %v433, 0.0
      %v450 = vmax.f32 %v434, 0.0
      %v451 = vmax.f32 %v435, 0.0
      %v452 = vmax.f32 %v436, 0.0
      %v453 = vmax.f32 %v437, 0.0
      %v454 = vmax.f32 %v438, 0.0
      %v455 = vmax.f32 %v439, 0.0
      %v456 = vmax.f32 %v440, 0.0
      %v457 = vmax.f32 %v441, 0.0
      %v458 = vmax.f32 %v442, 0.0
      %v459 = vsub.f32 0.0, %v443
      %v460 = vsub.f32 0.0, %v444
      %v461 = vsub.f32 0.0, %v445
      %v462 = vsub.f32 0.0, %v446
      %v463 = vsub.f32 0.0, %v447
      %v464 = vsub.f32 0.0, %v448
      %v465 = vsub.f32 0.0, %v449
      %v466 = vsub.f32 0.0, %v450
      %v467 = vsub.f32 0.0, %v451
      %v468 = vsub.f32 0.0, %v452
      %v469 = vsub.f32 0.0, %v453
      %v470 = vsub.f32 0.0, %v454
      %v471 = vsub.f32 0.0, %v455
      %v472 = vsub.f32 0.0, %v456
      %v473 = vsub.f32 0.0, %v457
      %v474 = vsub.f32 0.0, %v458
      %v475 = vmul.f32 %v459, 1.442695
      %v476 = vpow.pop %v475
      %v477 = vmul.f32 %v460, 1.442695
      %v478 = vpow.pop %v477
      %v479 = vmul.f32 %v461, 1.442695
      %v480 = vpow.pop %v479
      %v481 = vmul.f32 %v462, 1.442695
      %v482 = vpow.pop %v481
      %v483 = vmul.f32 %v463, 1.442695
      %v484 = vpow.pop %v483
      %v485 = vmul.f32 %v464, 1.442695
      %v486 = vpow.pop %v485
      %v487 = vmul.f32 %v465, 1.442695
      %v488 = vpow.pop %v487
      %v489 = vmul.f32 %v466, 1.442695
      %v490 = vpow.pop %v489
      %v491 = vmul.f32 %v467, 1.442695
      %v492 = vpow.pop %v491
      %v493 = vmul.f32 %v468, 1.442695
      %v494 = vpow.pop %v493
      %v495 = vmul.f32 %v469, 1.442695
      %v496 = vpow.pop %v495
      %v497 = vmul.f32 %v470, 1.442695
      %v498 = vpow.pop %v497
      %v499 = vmul.f32 %v471, 1.442695
      %v500 = vpow.pop %v499
      %v501 = vmul.f32 %v472, 1.442695
      %v502 = vpow.pop %v501
      %v503 = vmul.f32 %v473, 1.442695
      %v504 = vpow.pop %v503
      %v505 = vmul.f32 %v474, 1.442695
      %v506 = vpow.pop %v505
      %v507 = vsel %vm117, 1, 0
      %v508 = vsel %vm118, 1, 0
      %v509 = vsel %vm119, 1, 0
      %v510 = vsel %vm120, 1, 0
      %v511 = vsel %vm121, 1, 0
      %v512 = vsel %vm122, 1, 0
      %v513 = vsel %vm123, 1, 0
      %v514 = vsel %vm124, 1, 0
      %v515 = vsel %vm125, 1, 0
      %v516 = vsel %vm126, 1, 0
      %v517 = vsel %vm127, 1, 0
      %v518 = vsel %vm128, 1, 0
      %v519 = vsel %vm129, 1, 0
      %v520 = vsel %vm130, 1, 0
      %v521 = vsel %vm131, 1, 0
      %v522 = vsel %vm132, 1, 0
      %vm523 = vcmp.eq.s32.totalorder %v507, 1
      %vm524 = vcmp.eq.s32.totalorder %v508, 1
      %vm525 = vcmp.eq.s32.totalorder %v509, 1
      %vm526 = vcmp.eq.s32.totalorder %v510, 1
      %vm527 = vcmp.eq.s32.totalorder %v511, 1
      %vm528 = vcmp.eq.s32.totalorder %v512, 1
      %vm529 = vcmp.eq.s32.totalorder %v513, 1
      %vm530 = vcmp.eq.s32.totalorder %v514, 1
      %vm531 = vcmp.eq.s32.totalorder %v515, 1
      %vm532 = vcmp.eq.s32.totalorder %v516, 1
      %vm533 = vcmp.eq.s32.totalorder %v517, 1
      %vm534 = vcmp.eq.s32.totalorder %v518, 1
      %vm535 = vcmp.eq.s32.totalorder %v519, 1
      %vm536 = vcmp.eq.s32.totalorder %v520, 1
      %vm537 = vcmp.eq.s32.totalorder %v521, 1
      %vm538 = vcmp.eq.s32.totalorder %v522, 1
      %v539 = vsel %vm523, %v476, 0.0
      %v540 = vsel %vm524, %v478, 0.0
      %v541 = vsel %vm525, %v480, 0.0
      %v542 = vsel %vm526, %v482, 0.0
      %v543 = vsel %vm527, %v484, 0.0
      %v544 = vsel %vm528, %v486, 0.0
      %v545 = vsel %vm529, %v488, 0.0
      %v546 = vsel %vm530, %v490, 0.0
      %v547 = vsel %vm531, %v492, 0.0
      %v548 = vsel %vm532, %v494, 0.0
      %v549 = vsel %vm533, %v496, 0.0
      %v550 = vsel %vm534, %v498, 0.0
      %v551 = vsel %vm535, %v500, 0.0
      %v552 = vsel %vm536, %v502, 0.0
      %v553 = vsel %vm537, %v504, 0.0
      %v554 = vsel %vm538, %v506, 0.0
      %v555 = vpack.c.bf16 %v539, %v539
      %v556 = vpack.c.bf16 %v540, %v540
      %v557 = vpack.c.bf16 %v541, %v541
      %v558 = vpack.c.bf16 %v542, %v542
      %v559 = vpack.c.bf16 %v543, %v543
      %v560 = vpack.c.bf16 %v544, %v544
      %v561 = vpack.c.bf16 %v545, %v545
      %v562 = vpack.c.bf16 %v546, %v546
      %v563 = vpack.c.bf16 %v547, %v547
      %v564 = vpack.c.bf16 %v548, %v548
      %v565 = vpack.c.bf16 %v549, %v549
      %v566 = vpack.c.bf16 %v550, %v550
      %v567 = vpack.c.bf16 %v551, %v551
      %v568 = vpack.c.bf16 %v552, %v552
      %v569 = vpack.c.bf16 %v553, %v553
      %v570 = vpack.c.bf16 %v554, %v554
      %s571 = sshra.s32 %s60, 3
      %s572 = sand.u32 %s60, 7
      %s573 = smul.addr %s571, 4
      %s574 = scalar_lea.vmem [#allocation4], %s573
      %575 = vst [vmem:[%s574] sm:$0xf] %v555
      %576 = vst [vmem:[%s574 + $0x4] sm:$0xf] %v556
      %577 = vst [vmem:[%s574 + $0x8] sm:$0xf] %v557
      %578 = vst [vmem:[%s574 + $0xc] sm:$0xf] %v558
      %579 = vst [vmem:[%s574 + $0x10] sm:$0xf] %v559
      %580 = vst [vmem:[%s574 + $0x14] sm:$0xf] %v560
      %581 = vst [vmem:[%s574 + $0x18] sm:$0xf] %v561
      %582 = vst [vmem:[%s574 + $0x1c] sm:$0xf] %v562
      %583 = vst [vmem:[%s574 + $0x20] sm:$0xf] %v563
      %584 = vst [vmem:[%s574 + $0x24] sm:$0xf] %v564
      %585 = vst [vmem:[%s574 + $0x28] sm:$0xf] %v565
      %586 = vst [vmem:[%s574 + $0x2c] sm:$0xf] %v566
      %587 = vst [vmem:[%s574 + $0x30] sm:$0xf] %v567
      %588 = vst [vmem:[%s574 + $0x34] sm:$0xf] %v568
      %589 = vst [vmem:[%s574 + $0x38] sm:$0xf] %v569
      %590 = vst [vmem:[%s574 + $0x3c] sm:$0xf] %v570
    $region37: #{tpu_custom_call.1} parent=1 // pred_fallthru
      _
    %s591 = sshra.s32 %s60, 3
    %s592 = sand.u32 %s60, 7
    %s593 = smul.addr %s591, 4
    %s594 = scalar_lea.vmem [#allocation4], %s593
    %v595 = vld [vmem:[%s594] sm:$0xf]
    %v596 = vld [vmem:[%s594 + $0x4] sm:$0xf]
    %v597 = vld [vmem:[%s594 + $0x8] sm:$0xf]
    %v598 = vld [vmem:[%s594 + $0xc] sm:$0xf]
    %v599 = vld [vmem:[%s594 + $0x10] sm:$0xf]
    %v600 = vld [vmem:[%s594 + $0x14] sm:$0xf]
    %v601 = vld [vmem:[%s594 + $0x18] sm:$0xf]
    %v602 = vld [vmem:[%s594 + $0x1c] sm:$0xf]
    %v603 = vld [vmem:[%s594 + $0x20] sm:$0xf]
    %v604 = vld [vmem:[%s594 + $0x24] sm:$0xf]
    %v605 = vld [vmem:[%s594 + $0x28] sm:$0xf]
    %v606 = vld [vmem:[%s594 + $0x2c] sm:$0xf]
    %v607 = vld [vmem:[%s594 + $0x30] sm:$0xf]
    %v608 = vld [vmem:[%s594 + $0x34] sm:$0xf]
    %v609 = vld [vmem:[%s594 + $0x38] sm:$0xf]
    %v610 = vld [vmem:[%s594 + $0x3c] sm:$0xf]
    %s611 = sshra.s32 %s59, 7
    %s612 = sand.u32 %s59, 127
    %s613 = scalar_lea.vmem [#allocation10], %s611
    %v614 = vld [vmem:[%s613] sm:$0xf]
    %s615 = sshra.s32 %s60, 7
    %s616 = sand.u32 %s60, 127
    %s617 = scalar_lea.vmem [#allocation10], %s615
    %v618 = vld [vmem:[%s617] sm:$0xf]
    %s619 = scalar_lea.vmem [#allocation11], %s611
    %v620 = vld [vmem:[%s619] sm:$0xf]
    %s621 = scalar_lea.vmem [#allocation11], %s615
    %v622 = vld [vmem:[%s621] sm:$0xf]
    %v623 = vmul.f32 %v614, %v614
    %vm624 = vcmask 1043456
    %v625 = vsel %vm624, %v623, 0.0
    %v626 = vrot.slane %v625, 4
    %v627 = vadd.f32 %v625, %v626
    %v628 = vrot.slane %v627, 2
    %v629 = vadd.f32 %v627, %v628
    %v630 = vrot.slane %v629, 1
    %v631 = vadd.f32 %v629, %v630
    %v632 = vlaneseq
    %v633 = vshrl.u32 %v632, 7
    %635 = vset.pattern.permute.xlu0 %v633
    %636 = vperm.xlu0 %635, %v631
    %v637 = vpop.permute.xlu0 %636
    %v638 = vlaneseq
    %v639 = vshrl.u32 %v638, 7
    %v640 = vadd.s32 %v639, 8
    %641 = vset.pattern.permute.xlu0 %v640
    %642 = vperm.xlu0 %641, %v631
    %v643 = vpop.permute.xlu0 %642
    %v644 = vlaneseq
    %v645 = vshrl.u32 %v644, 7
    %v646 = vadd.s32 %v645, 16
    %647 = vset.pattern.permute.xlu0 %v646
    %648 = vperm.xlu0 %647, %v631
    %v649 = vpop.permute.xlu0 %648
    %v650 = vlaneseq
    %v651 = vshrl.u32 %v650, 7
    %v652 = vadd.s32 %v651, 24
    %653 = vset.pattern.permute.xlu0 %v652
    %654 = vperm.xlu0 %653, %v631
    %v655 = vpop.permute.xlu0 %654
    %v656 = vlaneseq
    %v657 = vshrl.u32 %v656, 7
    %v658 = vadd.s32 %v657, 32
    %659 = vset.pattern.permute.xlu0 %v658
    %660 = vperm.xlu0 %659, %v631
    %v661 = vpop.permute.xlu0 %660
    %v662 = vlaneseq
    %v663 = vshrl.u32 %v662, 7
    %v664 = vadd.s32 %v663, 40
    %665 = vset.pattern.permute.xlu0 %v664
    %666 = vperm.xlu0 %665, %v631
    %v667 = vpop.permute.xlu0 %666
    %v668 = vlaneseq
    %v669 = vshrl.u32 %v668, 7
    %v670 = vadd.s32 %v669, 48
    %671 = vset.pattern.permute.xlu0 %v670
    %672 = vperm.xlu0 %671, %v631
    %v673 = vpop.permute.xlu0 %672
    %v674 = vlaneseq
    %v675 = vshrl.u32 %v674, 7
    %v676 = vadd.s32 %v675, 56
    %677 = vset.pattern.permute.xlu0 %v676
    %678 = vperm.xlu0 %677, %v631
    %v679 = vpop.permute.xlu0 %678
    %v680 = vlaneseq
    %v681 = vshrl.u32 %v680, 7
    %v682 = vadd.s32 %v681, 64
    %683 = vset.pattern.permute.xlu0 %v682
    %684 = vperm.xlu0 %683, %v631
    %v685 = vpop.permute.xlu0 %684
    %v686 = vlaneseq
    %v687 = vshrl.u32 %v686, 7
    %v688 = vadd.s32 %v687, 72
    %689 = vset.pattern.permute.xlu0 %v688
    %690 = vperm.xlu0 %689, %v631
    %v691 = vpop.permute.xlu0 %690
    %v692 = vlaneseq
    %v693 = vshrl.u32 %v692, 7
    %v694 = vadd.s32 %v693, 80
    %695 = vset.pattern.permute.xlu0 %v694
    %696 = vperm.xlu0 %695, %v631
    %v697 = vpop.permute.xlu0 %696
    %v698 = vlaneseq
    %v699 = vshrl.u32 %v698, 7
    %v700 = vadd.s32 %v699, 88
    %701 = vset.pattern.permute.xlu0 %v700
    %702 = vperm.xlu0 %701, %v631
    %v703 = vpop.permute.xlu0 %702
    %v704 = vlaneseq
    %v705 = vshrl.u32 %v704, 7
    %v706 = vadd.s32 %v705, 96
    %707 = vset.pattern.permute.xlu0 %v706
    %708 = vperm.xlu0 %707, %v631
    %v709 = vpop.permute.xlu0 %708
    %v710 = vlaneseq
    %v711 = vshrl.u32 %v710, 7
    %v712 = vadd.s32 %v711, 104
    %713 = vset.pattern.permute.xlu0 %v712
    %714 = vperm.xlu0 %713, %v631
    %v715 = vpop.permute.xlu0 %714
    %v716 = vlaneseq
    %v717 = vshrl.u32 %v716, 7
    %v718 = vadd.s32 %v717, 112
    %719 = vset.pattern.permute.xlu0 %v718
    %720 = vperm.xlu0 %719, %v631
    %v721 = vpop.permute.xlu0 %720
    %v722 = vlaneseq
    %v723 = vshrl.u32 %v722, 7
    %v724 = vadd.s32 %v723, 120
    %725 = vset.pattern.permute.xlu0 %v724
    %726 = vperm.xlu0 %725, %v631
    %v727 = vpop.permute.xlu0 %726
    %v728 = vmul.f32 %v618, %v618
    %v729 = vsel %vm624, %v728, 0.0
    %v730 = vrot.slane %v729, 4
    %v731 = vadd.f32 %v729, %v730
    %v732 = vrot.slane %v731, 2
    %v733 = vadd.f32 %v731, %v732
    %v734 = vrot.slane %v733, 1
    %v735 = vadd.f32 %v733, %v734
    %736 = vxpose.xlu0.b32.start [1/16] %v614, 128
    %737 = vxpose.xlu0.b32.cont [2/16] 0.0, 128
    %738 = vxpose.xlu0.b32.cont [3/16] 0.0, 128
    %739 = vxpose.xlu0.b32.cont [4/16] 0.0, 128
    %740 = vxpose.xlu0.b32.cont [5/16] 0.0, 128
    %741 = vxpose.xlu0.b32.cont [6/16] 0.0, 128
    %742 = vxpose.xlu0.b32.cont [7/16] 0.0, 128
    %743 = vxpose.xlu0.b32.cont [8/16] 0.0, 128
    %744 = vxpose.xlu0.b32.cont [9/16] 0.0, 128
    %745 = vxpose.xlu0.b32.cont [10/16] 0.0, 128
    %746 = vxpose.xlu0.b32.cont [11/16] 0.0, 128
    %747 = vxpose.xlu0.b32.cont [12/16] 0.0, 128
    %748 = vxpose.xlu0.b32.cont [13/16] 0.0, 128
    %749 = vxpose.xlu0.b32.cont [14/16] 0.0, 128
    %750 = vxpose.xlu0.b32.cont [15/16] 0.0, 128
    %751 = vxpose.xlu0.b32.end [16/16] 0.0, 128
    %v752 = vpop.trf.xlu0
    %v753 = vpop.trf.xlu0
    %v754 = vpop.trf.xlu0
    %v755 = vpop.trf.xlu0
    %v756 = vpop.trf.xlu0
    %v757 = vpop.trf.xlu0
    %v758 = vpop.trf.xlu0
    %v759 = vpop.trf.xlu0
    %v760 = vpop.trf.xlu0
    %v761 = vpop.trf.xlu0
    %v762 = vpop.trf.xlu0
    %v763 = vpop.trf.xlu0
    %v764 = vpop.trf.xlu0
    %v765 = vpop.trf.xlu0
    %v766 = vpop.trf.xlu0
    %v767 = vpop.trf.xlu0
    %vm768 = vcmask 31744
    %v770 = vsel %vm768, %v752, 0
    %v773 = vsel %vm768, %v753, 0
    %v776 = vsel %vm768, %v754, 0
    %v779 = vsel %vm768, %v755, 0
    %v782 = vsel %vm768, %v756, 0
    %v785 = vsel %vm768, %v757, 0
    %v788 = vsel %vm768, %v758, 0
    %v791 = vsel %vm768, %v759, 0
    %v794 = vsel %vm768, %v760, 0
    %v797 = vsel %vm768, %v761, 0
    %v800 = vsel %vm768, %v762, 0
    %v803 = vsel %vm768, %v763, 0
    %v806 = vsel %vm768, %v764, 0
    %v809 = vsel %vm768, %v765, 0
    %v812 = vsel %vm768, %v766, 0
    %v815 = vsel %vm768, %v767, 0
    %v818 = vsel %vm624, %v618, 0
    %820 = vmatpush.msra.mxu0 0.0
    %821 = vmatpush.msra.mxu0 0.0
    %822 = vmatpush.msra.mxu0 0.0
    %823 = vmatpush.msra.mxu0 0.0
    %824 = vmatpush.msra.mxu0 0.0
    %825 = vmatpush.msra.mxu0 0.0
    %826 = vmatpush.msra.mxu0 0.0
    %827 = vmatpush.msra.mxu0 0.0
    %828 = vmatpush.msra.mxu0 0.0
    %829 = vmatpush.msra.mxu0 0.0
    %830 = vmatpush.msra.mxu0 0.0
    %831 = vmatpush.msra.mxu0 0.0
    %832 = vmatpush.msra.mxu0 0.0
    %833 = vmatpush.msra.mxu0 0.0
    %834 = vmatpush.msra.mxu0 0.0
    %835 = vmatpush.msra.mxu0 %v818
    %836 = vmatmul.f32.gmra.mxu0 %v770
    %v837 = vpop.f32.mrf.mxu0
    %v838 = vadd.f32 0.0, %v837
    %839 = vmatmul.f32.gmra.mxu0 %v773
    %v840 = vpop.f32.mrf.mxu0
    %v841 = vadd.f32 0.0, %v840
    %842 = vmatmul.f32.gmra.mxu0 %v776
    %v843 = vpop.f32.mrf.mxu0
    %v844 = vadd.f32 0.0, %v843
    %845 = vmatmul.f32.gmra.mxu0 %v779
    %v846 = vpop.f32.mrf.mxu0
    %v847 = vadd.f32 0.0, %v846
    %848 = vmatmul.f32.gmra.mxu0 %v782
    %v849 = vpop.f32.mrf.mxu0
    %v850 = vadd.f32 0.0, %v849
    %851 = vmatmul.f32.gmra.mxu0 %v785
    %v852 = vpop.f32.mrf.mxu0
    %v853 = vadd.f32 0.0, %v852
    %854 = vmatmul.f32.gmra.mxu0 %v788
    %v855 = vpop.f32.mrf.mxu0
    %v856 = vadd.f32 0.0, %v855
    %857 = vmatmul.f32.gmra.mxu0 %v791
    %v858 = vpop.f32.mrf.mxu0
    %v859 = vadd.f32 0.0, %v858
    %860 = vmatmul.f32.gmra.mxu0 %v794
    %v861 = vpop.f32.mrf.mxu0
    %v862 = vadd.f32 0.0, %v861
    %863 = vmatmul.f32.gmra.mxu0 %v797
    %v864 = vpop.f32.mrf.mxu0
    %v865 = vadd.f32 0.0, %v864
    %866 = vmatmul.f32.gmra.mxu0 %v800
    %v867 = vpop.f32.mrf.mxu0
    %v868 = vadd.f32 0.0, %v867
    %869 = vmatmul.f32.gmra.mxu0 %v803
    %v870 = vpop.f32.mrf.mxu0
    %v871 = vadd.f32 0.0, %v870
    %872 = vmatmul.f32.gmra.mxu0 %v806
    %v873 = vpop.f32.mrf.mxu0
    %v874 = vadd.f32 0.0, %v873
    %875 = vmatmul.f32.gmra.mxu0 %v809
    %v876 = vpop.f32.mrf.mxu0
    %v877 = vadd.f32 0.0, %v876
    %878 = vmatmul.f32.gmra.mxu0 %v812
    %v879 = vpop.f32.mrf.mxu0
    %v880 = vadd.f32 0.0, %v879
    %881 = vmatmul.f32.gmra.mxu0 %v815
    %v882 = vpop.f32.mrf.mxu0
    %v883 = vadd.f32 0.0, %v882
    %884 = vdwg.mxu0
    %v885 = vadd.f32 %v637, %v735
    %v886 = vadd.f32 %v643, %v735
    %v887 = vadd.f32 %v649, %v735
    %v888 = vadd.f32 %v655, %v735
    %v889 = vadd.f32 %v661, %v735
    %v890 = vadd.f32 %v667, %v735
    %v891 = vadd.f32 %v673, %v735
    %v892 = vadd.f32 %v679, %v735
    %v893 = vadd.f32 %v685, %v735
    %v894 = vadd.f32 %v691, %v735
    %v895 = vadd.f32 %v697, %v735
    %v896 = vadd.f32 %v703, %v735
    %v897 = vadd.f32 %v709, %v735
    %v898 = vadd.f32 %v715, %v735
    %v899 = vadd.f32 %v721, %v735
    %v900 = vadd.f32 %v727, %v735
    %v901 = vmul.f32 %v838, 2.0
    %v902 = vmul.f32 %v841, 2.0
    %v903 = vmul.f32 %v844, 2.0
    %v904 = vmul.f32 %v847, 2.0
    %v905 = vmul.f32 %v850, 2.0
    %v906 = vmul.f32 %v853, 2.0
    %v907 = vmul.f32 %v856, 2.0
    %v908 = vmul.f32 %v859, 2.0
    %v909 = vmul.f32 %v862, 2.0
    %v910 = vmul.f32 %v865, 2.0
    %v911 = vmul.f32 %v868, 2.0
    %v912 = vmul.f32 %v871, 2.0
    %v913 = vmul.f32 %v874, 2.0
    %v914 = vmul.f32 %v877, 2.0
    %v915 = vmul.f32 %v880, 2.0
    %v916 = vmul.f32 %v883, 2.0
    %v917 = vsub.f32 %v885, %v901
    %v918 = vsub.f32 %v886, %v902
    %v919 = vsub.f32 %v887, %v903
    %v920 = vsub.f32 %v888, %v904
    %v921 = vsub.f32 %v889, %v905
    %v922 = vsub.f32 %v890, %v906
    %v923 = vsub.f32 %v891, %v907
    %v924 = vsub.f32 %v892, %v908
    %v925 = vsub.f32 %v893, %v909
    %v926 = vsub.f32 %v894, %v910
    %v927 = vsub.f32 %v895, %v911
    %v928 = vsub.f32 %v896, %v912
    %v929 = vsub.f32 %v897, %v913
    %v930 = vsub.f32 %v898, %v914
    %v931 = vsub.f32 %v899, %v915
    %v932 = vsub.f32 %v900, %v916
    %v933 = vmax.f32 %v917, 0.0
    %v934 = vmax.f32 %v918, 0.0
    %v935 = vmax.f32 %v919, 0.0
    %v936 = vmax.f32 %v920, 0.0
    %v937 = vmax.f32 %v921, 0.0
    %v938 = vmax.f32 %v922, 0.0
    %v939 = vmax.f32 %v923, 0.0
    %v940 = vmax.f32 %v924, 0.0
    %v941 = vmax.f32 %v925, 0.0
    %v942 = vmax.f32 %v926, 0.0
    %v943 = vmax.f32 %v927, 0.0
    %v944 = vmax.f32 %v928, 0.0
    %v945 = vmax.f32 %v929, 0.0
    %v946 = vmax.f32 %v930, 0.0
    %v947 = vmax.f32 %v931, 0.0
    %v948 = vmax.f32 %v932, 0.0
    %v949 = vrsqrt.pop %v933
    %v950 = vmul.f32 %v949, %v933
    %v951 = vmul.f32 %v950, %v949
    %v952 = vmul.f32 0.5, %v951
    %v953 = vsub.f32 1.5, %v952
    %v954 = vmul.f32 %v949, %v953
    %v955 = vmul.f32 %v933, %v954
    %vm956 = vcmp.eq.f32.partialorder %v933, inf
    %v957 = vsel %vm956, %v933, %v955
    %vm958 = vcmp.eq.f32.partialorder %v933, 0.0
    %v959 = vand.u32 %v933, 2147483648
    %v960 = vsel %vm958, %v959, %v957
    %v961 = vrsqrt.pop %v934
    %v962 = vmul.f32 %v961, %v934
    %v963 = vmul.f32 %v962, %v961
    %v964 = vmul.f32 0.5, %v963
    %v965 = vsub.f32 1.5, %v964
    %v966 = vmul.f32 %v961, %v965
    %v967 = vmul.f32 %v934, %v966
    %vm968 = vcmp.eq.f32.partialorder %v934, inf
    %v969 = vsel %vm968, %v934, %v967
    %vm970 = vcmp.eq.f32.partialorder %v934, 0.0
    %v971 = vand.u32 %v934, 2147483648
    %v972 = vsel %vm970, %v971, %v969
    %v973 = vrsqrt.pop %v935
    %v974 = vmul.f32 %v973, %v935
    %v975 = vmul.f32 %v974, %v973
    %v976 = vmul.f32 0.5, %v975
    %v977 = vsub.f32 1.5, %v976
    %v978 = vmul.f32 %v973, %v977
    %v979 = vmul.f32 %v935, %v978
    %vm980 = vcmp.eq.f32.partialorder %v935, inf
    %v981 = vsel %vm980, %v935, %v979
    %vm982 = vcmp.eq.f32.partialorder %v935, 0.0
    %v983 = vand.u32 %v935, 2147483648
    %v984 = vsel %vm982, %v983, %v981
    %v985 = vrsqrt.pop %v936
    %v986 = vmul.f32 %v985, %v936
    %v987 = vmul.f32 %v986, %v985
    %v988 = vmul.f32 0.5, %v987
    %v989 = vsub.f32 1.5, %v988
    %v990 = vmul.f32 %v985, %v989
    %v991 = vmul.f32 %v936, %v990
    %vm992 = vcmp.eq.f32.partialorder %v936, inf
    %v993 = vsel %vm992, %v936, %v991
    %vm994 = vcmp.eq.f32.partialorder %v936, 0.0
    %v995 = vand.u32 %v936, 2147483648
    %v996 = vsel %vm994, %v995, %v993
    %v997 = vrsqrt.pop %v937
    %v998 = vmul.f32 %v997, %v937
    %v999 = vmul.f32 %v998, %v997
    %v1000 = vmul.f32 0.5, %v999
    %v1001 = vsub.f32 1.5, %v1000
    %v1002 = vmul.f32 %v997, %v1001
    %v1003 = vmul.f32 %v937, %v1002
    %vm1004 = vcmp.eq.f32.partialorder %v937, inf
    %v1005 = vsel %vm1004, %v937, %v1003
    %vm1006 = vcmp.eq.f32.partialorder %v937, 0.0
    %v1007 = vand.u32 %v937, 2147483648
    %v1008 = vsel %vm1006, %v1007, %v1005
    %v1009 = vrsqrt.pop %v938
    %v1010 = vmul.f32 %v1009, %v938
    %v1011 = vmul.f32 %v1010, %v1009
    %v1012 = vmul.f32 0.5, %v1011
    %v1013 = vsub.f32 1.5, %v1012
    %v1014 = vmul.f32 %v1009, %v1013
    %v1015 = vmul.f32 %v938, %v1014
    %vm1016 = vcmp.eq.f32.partialorder %v938, inf
    %v1017 = vsel %vm1016, %v938, %v1015
    %vm1018 = vcmp.eq.f32.partialorder %v938, 0.0
    %v1019 = vand.u32 %v938, 2147483648
    %v1020 = vsel %vm1018, %v1019, %v1017
    %v1021 = vrsqrt.pop %v939
    %v1022 = vmul.f32 %v1021, %v939
    %v1023 = vmul.f32 %v1022, %v1021
    %v1024 = vmul.f32 0.5, %v1023
    %v1025 = vsub.f32 1.5, %v1024
    %v1026 = vmul.f32 %v1021, %v1025
    %v1027 = vmul.f32 %v939, %v1026
    %vm1028 = vcmp.eq.f32.partialorder %v939, inf
    %v1029 = vsel %vm1028, %v939, %v1027
    %vm1030 = vcmp.eq.f32.partialorder %v939, 0.0
    %v1031 = vand.u32 %v939, 2147483648
    %v1032 = vsel %vm1030, %v1031, %v1029
    %v1033 = vrsqrt.pop %v940
    %v1034 = vmul.f32 %v1033, %v940
    %v1035 = vmul.f32 %v1034, %v1033
    %v1036 = vmul.f32 0.5, %v1035
    %v1037 = vsub.f32 1.5, %v1036
    %v1038 = vmul.f32 %v1033, %v1037
    %v1039 = vmul.f32 %v940, %v1038
    %vm1040 = vcmp.eq.f32.partialorder %v940, inf
    %v1041 = vsel %vm1040, %v940, %v1039
    %vm1042 = vcmp.eq.f32.partialorder %v940, 0.0
    %v1043 = vand.u32 %v940, 2147483648
    %v1044 = vsel %vm1042, %v1043, %v1041
    %v1045 = vrsqrt.pop %v941
    %v1046 = vmul.f32 %v1045, %v941
    %v1047 = vmul.f32 %v1046, %v1045
    %v1048 = vmul.f32 0.5, %v1047
    %v1049 = vsub.f32 1.5, %v1048
    %v1050 = vmul.f32 %v1045, %v1049
    %v1051 = vmul.f32 %v941, %v1050
    %vm1052 = vcmp.eq.f32.partialorder %v941, inf
    %v1053 = vsel %vm1052, %v941, %v1051
    %vm1054 = vcmp.eq.f32.partialorder %v941, 0.0
    %v1055 = vand.u32 %v941, 2147483648
    %v1056 = vsel %vm1054, %v1055, %v1053
    %v1057 = vrsqrt.pop %v942
    %v1058 = vmul.f32 %v1057, %v942
    %v1059 = vmul.f32 %v1058, %v1057
    %v1060 = vmul.f32 0.5, %v1059
    %v1061 = vsub.f32 1.5, %v1060
    %v1062 = vmul.f32 %v1057, %v1061
    %v1063 = vmul.f32 %v942, %v1062
    %vm1064 = vcmp.eq.f32.partialorder %v942, inf
    %v1065 = vsel %vm1064, %v942, %v1063
    %vm1066 = vcmp.eq.f32.partialorder %v942, 0.0
    %v1067 = vand.u32 %v942, 2147483648
    %v1068 = vsel %vm1066, %v1067, %v1065
    %v1069 = vrsqrt.pop %v943
    %v1070 = vmul.f32 %v1069, %v943
    %v1071 = vmul.f32 %v1070, %v1069
    %v1072 = vmul.f32 0.5, %v1071
    %v1073 = vsub.f32 1.5, %v1072
    %v1074 = vmul.f32 %v1069, %v1073
    %v1075 = vmul.f32 %v943, %v1074
    %vm1076 = vcmp.eq.f32.partialorder %v943, inf
    %v1077 = vsel %vm1076, %v943, %v1075
    %vm1078 = vcmp.eq.f32.partialorder %v943, 0.0
    %v1079 = vand.u32 %v943, 2147483648
    %v1080 = vsel %vm1078, %v1079, %v1077
    %v1081 = vrsqrt.pop %v944
    %v1082 = vmul.f32 %v1081, %v944
    %v1083 = vmul.f32 %v1082, %v1081
    %v1084 = vmul.f32 0.5, %v1083
    %v1085 = vsub.f32 1.5, %v1084
    %v1086 = vmul.f32 %v1081, %v1085
    %v1087 = vmul.f32 %v944, %v1086
    %vm1088 = vcmp.eq.f32.partialorder %v944, inf
    %v1089 = vsel %vm1088, %v944, %v1087
    %vm1090 = vcmp.eq.f32.partialorder %v944, 0.0
    %v1091 = vand.u32 %v944, 2147483648
    %v1092 = vsel %vm1090, %v1091, %v1089
    %v1093 = vrsqrt.pop %v945
    %v1094 = vmul.f32 %v1093, %v945
    %v1095 = vmul.f32 %v1094, %v1093
    %v1096 = vmul.f32 0.5, %v1095
    %v1097 = vsub.f32 1.5, %v1096
    %v1098 = vmul.f32 %v1093, %v1097
    %v1099 = vmul.f32 %v945, %v1098
    %vm1100 = vcmp.eq.f32.partialorder %v945, inf
    %v1101 = vsel %vm1100, %v945, %v1099
    %vm1102 = vcmp.eq.f32.partialorder %v945, 0.0
    %v1103 = vand.u32 %v945, 2147483648
    %v1104 = vsel %vm1102, %v1103, %v1101
    %v1105 = vrsqrt.pop %v946
    %v1106 = vmul.f32 %v1105, %v946
    %v1107 = vmul.f32 %v1106, %v1105
    %v1108 = vmul.f32 0.5, %v1107
    %v1109 = vsub.f32 1.5, %v1108
    %v1110 = vmul.f32 %v1105, %v1109
    %v1111 = vmul.f32 %v946, %v1110
    %vm1112 = vcmp.eq.f32.partialorder %v946, inf
    %v1113 = vsel %vm1112, %v946, %v1111
    %vm1114 = vcmp.eq.f32.partialorder %v946, 0.0
    %v1115 = vand.u32 %v946, 2147483648
    %v1116 = vsel %vm1114, %v1115, %v1113
    %v1117 = vrsqrt.pop %v947
    %v1118 = vmul.f32 %v1117, %v947
    %v1119 = vmul.f32 %v1118, %v1117
    %v1120 = vmul.f32 0.5, %v1119
    %v1121 = vsub.f32 1.5, %v1120
    %v1122 = vmul.f32 %v1117, %v1121
    %v1123 = vmul.f32 %v947, %v1122
    %vm1124 = vcmp.eq.f32.partialorder %v947, inf
    %v1125 = vsel %vm1124, %v947, %v1123
    %vm1126 = vcmp.eq.f32.partialorder %v947, 0.0
    %v1127 = vand.u32 %v947, 2147483648
    %v1128 = vsel %vm1126, %v1127, %v1125
    %v1129 = vrsqrt.pop %v948
    %v1130 = vmul.f32 %v1129, %v948
    %v1131 = vmul.f32 %v1130, %v1129
    %v1132 = vmul.f32 0.5, %v1131
    %v1133 = vsub.f32 1.5, %v1132
    %v1134 = vmul.f32 %v1129, %v1133
    %v1135 = vmul.f32 %v948, %v1134
    %vm1136 = vcmp.eq.f32.partialorder %v948, inf
    %v1137 = vsel %vm1136, %v948, %v1135
    %vm1138 = vcmp.eq.f32.partialorder %v948, 0.0
    %v1139 = vand.u32 %v948, 2147483648
    %v1140 = vsel %vm1138, %v1139, %v1137
    %v1141 = vstv %s62
    %v1142 = vsub.f32 %v960, %v1141
    %v1143 = vsub.f32 %v972, %v1141
    %v1144 = vsub.f32 %v984, %v1141
    %v1145 = vsub.f32 %v996, %v1141
    %v1146 = vsub.f32 %v1008, %v1141
    %v1147 = vsub.f32 %v1020, %v1141
    %v1148 = vsub.f32 %v1032, %v1141
    %v1149 = vsub.f32 %v1044, %v1141
    %v1150 = vsub.f32 %v1056, %v1141
    %v1151 = vsub.f32 %v1068, %v1141
    %v1152 = vsub.f32 %v1080, %v1141
    %v1153 = vsub.f32 %v1092, %v1141
    %v1154 = vsub.f32 %v1104, %v1141
    %v1155 = vsub.f32 %v1116, %v1141
    %v1156 = vsub.f32 %v1128, %v1141
    %v1157 = vsub.f32 %v1140, %v1141
    %v1158 = vmul.f32 %v620, %v620
    %v1159 = vsel %vm624, %v1158, 0.0
    %v1160 = vrot.slane %v1159, 4
    %v1161 = vadd.f32 %v1159, %v1160
    %v1162 = vrot.slane %v1161, 2
    %v1163 = vadd.f32 %v1161, %v1162
    %v1164 = vrot.slane %v1163, 1
    %v1165 = vadd.f32 %v1163, %v1164
    %v1166 = vlaneseq
    %v1167 = vshrl.u32 %v1166, 7
    %1169 = vset.pattern.permute.xlu0 %v1167
    %1170 = vperm.xlu0 %1169, %v1165
    %v1171 = vpop.permute.xlu0 %1170
    %v1172 = vlaneseq
    %v1173 = vshrl.u32 %v1172, 7
    %v1174 = vadd.s32 %v1173, 8
    %1175 = vset.pattern.permute.xlu0 %v1174
    %1176 = vperm.xlu0 %1175, %v1165
    %v1177 = vpop.permute.xlu0 %1176
    %v1178 = vlaneseq
    %v1179 = vshrl.u32 %v1178, 7
    %v1180 = vadd.s32 %v1179, 16
    %1181 = vset.pattern.permute.xlu0 %v1180
    %1182 = vperm.xlu0 %1181, %v1165
    %v1183 = vpop.permute.xlu0 %1182
    %v1184 = vlaneseq
    %v1185 = vshrl.u32 %v1184, 7
    %v1186 = vadd.s32 %v1185, 24
    %1187 = vset.pattern.permute.xlu0 %v1186
    %1188 = vperm.xlu0 %1187, %v1165
    %v1189 = vpop.permute.xlu0 %1188
    %v1190 = vlaneseq
    %v1191 = vshrl.u32 %v1190, 7
    %v1192 = vadd.s32 %v1191, 32
    %1193 = vset.pattern.permute.xlu0 %v1192
    %1194 = vperm.xlu0 %1193, %v1165
    %v1195 = vpop.permute.xlu0 %1194
    %v1196 = vlaneseq
    %v1197 = vshrl.u32 %v1196, 7
    %v1198 = vadd.s32 %v1197, 40
    %1199 = vset.pattern.permute.xlu0 %v1198
    %1200 = vperm.xlu0 %1199, %v1165
    %v1201 = vpop.permute.xlu0 %1200
    %v1202 = vlaneseq
    %v1203 = vshrl.u32 %v1202, 7
    %v1204 = vadd.s32 %v1203, 48
    %1205 = vset.pattern.permute.xlu0 %v1204
    %1206 = vperm.xlu0 %1205, %v1165
    %v1207 = vpop.permute.xlu0 %1206
    %v1208 = vlaneseq
    %v1209 = vshrl.u32 %v1208, 7
    %v1210 = vadd.s32 %v1209, 56
    %1211 = vset.pattern.permute.xlu0 %v1210
    %1212 = vperm.xlu0 %1211, %v1165
    %v1213 = vpop.permute.xlu0 %1212
    %v1214 = vlaneseq
    %v1215 = vshrl.u32 %v1214, 7
    %v1216 = vadd.s32 %v1215, 64
    %1217 = vset.pattern.permute.xlu0 %v1216
    %1218 = vperm.xlu0 %1217, %v1165
    %v1219 = vpop.permute.xlu0 %1218
    %v1220 = vlaneseq
    %v1221 = vshrl.u32 %v1220, 7
    %v1222 = vadd.s32 %v1221, 72
    %1223 = vset.pattern.permute.xlu0 %v1222
    %1224 = vperm.xlu0 %1223, %v1165
    %v1225 = vpop.permute.xlu0 %1224
    %v1226 = vlaneseq
    %v1227 = vshrl.u32 %v1226, 7
    %v1228 = vadd.s32 %v1227, 80
    %1229 = vset.pattern.permute.xlu0 %v1228
    %1230 = vperm.xlu0 %1229, %v1165
    %v1231 = vpop.permute.xlu0 %1230
    %v1232 = vlaneseq
    %v1233 = vshrl.u32 %v1232, 7
    %v1234 = vadd.s32 %v1233, 88
    %1235 = vset.pattern.permute.xlu0 %v1234
    %1236 = vperm.xlu0 %1235, %v1165
    %v1237 = vpop.permute.xlu0 %1236
    %v1238 = vlaneseq
    %v1239 = vshrl.u32 %v1238, 7
    %v1240 = vadd.s32 %v1239, 96
    %1241 = vset.pattern.permute.xlu0 %v1240
    %1242 = vperm.xlu0 %1241, %v1165
    %v1243 = vpop.permute.xlu0 %1242
    %v1244 = vlaneseq
    %v1245 = vshrl.u32 %v1244, 7
    %v1246 = vadd.s32 %v1245, 104
    %1247 = vset.pattern.permute.xlu0 %v1246
    %1248 = vperm.xlu0 %1247, %v1165
    %v1249 = vpop.permute.xlu0 %1248
    %v1250 = vlaneseq
    %v1251 = vshrl.u32 %v1250, 7
    %v1252 = vadd.s32 %v1251, 112
    %1253 = vset.pattern.permute.xlu0 %v1252
    %1254 = vperm.xlu0 %1253, %v1165
    %v1255 = vpop.permute.xlu0 %1254
    %v1256 = vlaneseq
    %v1257 = vshrl.u32 %v1256, 7
    %v1258 = vadd.s32 %v1257, 120
    %1259 = vset.pattern.permute.xlu0 %v1258
    %1260 = vperm.xlu0 %1259, %v1165
    %v1261 = vpop.permute.xlu0 %1260
    %v1262 = vmul.f32 %v622, %v622
    %v1263 = vsel %vm624, %v1262, 0.0
    %v1264 = vrot.slane %v1263, 4
    %v1265 = vadd.f32 %v1263, %v1264
    %v1266 = vrot.slane %v1265, 2
    %v1267 = vadd.f32 %v1265, %v1266
    %v1268 = vrot.slane %v1267, 1
    %v1269 = vadd.f32 %v1267, %v1268
    %1270 = vxpose.xlu0.b32.start [1/16] %v620, 128
    %1271 = vxpose.xlu0.b32.cont [2/16] 0.0, 128
    %1272 = vxpose.xlu0.b32.cont [3/16] 0.0, 128
    %1273 = vxpose.xlu0.b32.cont [4/16] 0.0, 128
    %1274 = vxpose.xlu0.b32.cont [5/16] 0.0, 128
    %1275 = vxpose.xlu0.b32.cont [6/16] 0.0, 128
    %1276 = vxpose.xlu0.b32.cont [7/16] 0.0, 128
    %1277 = vxpose.xlu0.b32.cont [8/16] 0.0, 128
    %1278 = vxpose.xlu0.b32.cont [9/16] 0.0, 128
    %1279 = vxpose.xlu0.b32.cont [10/16] 0.0, 128
    %1280 = vxpose.xlu0.b32.cont [11/16] 0.0, 128
    %1281 = vxpose.xlu0.b32.cont [12/16] 0.0, 128
    %1282 = vxpose.xlu0.b32.cont [13/16] 0.0, 128
    %1283 = vxpose.xlu0.b32.cont [14/16] 0.0, 128
    %1284 = vxpose.xlu0.b32.cont [15/16] 0.0, 128
    %1285 = vxpose.xlu0.b32.end [16/16] 0.0, 128
    %v1286 = vpop.trf.xlu0
    %v1287 = vpop.trf.xlu0
    %v1288 = vpop.trf.xlu0
    %v1289 = vpop.trf.xlu0
    %v1290 = vpop.trf.xlu0
    %v1291 = vpop.trf.xlu0
    %v1292 = vpop.trf.xlu0
    %v1293 = vpop.trf.xlu0
    %v1294 = vpop.trf.xlu0
    %v1295 = vpop.trf.xlu0
    %v1296 = vpop.trf.xlu0
    %v1297 = vpop.trf.xlu0
    %v1298 = vpop.trf.xlu0
    %v1299 = vpop.trf.xlu0
    %v1300 = vpop.trf.xlu0
    %v1301 = vpop.trf.xlu0
    %v1303 = vsel %vm768, %v1286, 0
    %v1306 = vsel %vm768, %v1287, 0
    %v1309 = vsel %vm768, %v1288, 0
    %v1312 = vsel %vm768, %v1289, 0
    %v1315 = vsel %vm768, %v1290, 0
    %v1318 = vsel %vm768, %v1291, 0
    %v1321 = vsel %vm768, %v1292, 0
    %v1324 = vsel %vm768, %v1293, 0
    %v1327 = vsel %vm768, %v1294, 0
    %v1330 = vsel %vm768, %v1295, 0
    %v1333 = vsel %vm768, %v1296, 0
    %v1336 = vsel %vm768, %v1297, 0
    %v1339 = vsel %vm768, %v1298, 0
    %v1342 = vsel %vm768, %v1299, 0
    %v1345 = vsel %vm768, %v1300, 0
    %v1348 = vsel %vm768, %v1301, 0
    %v1351 = vsel %vm624, %v622, 0
    %1353 = vmatpush.msra.mxu0 0.0
    %1354 = vmatpush.msra.mxu0 0.0
    %1355 = vmatpush.msra.mxu0 0.0
    %1356 = vmatpush.msra.mxu0 0.0
    %1357 = vmatpush.msra.mxu0 0.0
    %1358 = vmatpush.msra.mxu0 0.0
    %1359 = vmatpush.msra.mxu0 0.0
    %1360 = vmatpush.msra.mxu0 0.0
    %1361 = vmatpush.msra.mxu0 0.0
    %1362 = vmatpush.msra.mxu0 0.0
    %1363 = vmatpush.msra.mxu0 0.0
    %1364 = vmatpush.msra.mxu0 0.0
    %1365 = vmatpush.msra.mxu0 0.0
    %1366 = vmatpush.msra.mxu0 0.0
    %1367 = vmatpush.msra.mxu0 0.0
    %1368 = vmatpush.msra.mxu0 %v1351
    %1369 = vmatmul.f32.gmra.mxu0 %v1303
    %v1370 = vpop.f32.mrf.mxu0
    %v1371 = vadd.f32 0.0, %v1370
    %1372 = vmatmul.f32.gmra.mxu0 %v1306
    %v1373 = vpop.f32.mrf.mxu0
    %v1374 = vadd.f32 0.0, %v1373
    %1375 = vmatmul.f32.gmra.mxu0 %v1309
    %v1376 = vpop.f32.mrf.mxu0
    %v1377 = vadd.f32 0.0, %v1376
    %1378 = vmatmul.f32.gmra.mxu0 %v1312
    %v1379 = vpop.f32.mrf.mxu0
    %v1380 = vadd.f32 0.0, %v1379
    %1381 = vmatmul.f32.gmra.mxu0 %v1315
    %v1382 = vpop.f32.mrf.mxu0
    %v1383 = vadd.f32 0.0, %v1382
    %1384 = vmatmul.f32.gmra.mxu0 %v1318
    %v1385 = vpop.f32.mrf.mxu0
    %v1386 = vadd.f32 0.0, %v1385
    %1387 = vmatmul.f32.gmra.mxu0 %v1321
    %v1388 = vpop.f32.mrf.mxu0
    %v1389 = vadd.f32 0.0, %v1388
    %1390 = vmatmul.f32.gmra.mxu0 %v1324
    %v1391 = vpop.f32.mrf.mxu0
    %v1392 = vadd.f32 0.0, %v1391
    %1393 = vmatmul.f32.gmra.mxu0 %v1327
    %v1394 = vpop.f32.mrf.mxu0
    %v1395 = vadd.f32 0.0, %v1394
    %1396 = vmatmul.f32.gmra.mxu0 %v1330
    %v1397 = vpop.f32.mrf.mxu0
    %v1398 = vadd.f32 0.0, %v1397
    %1399 = vmatmul.f32.gmra.mxu0 %v1333
    %v1400 = vpop.f32.mrf.mxu0
    %v1401 = vadd.f32 0.0, %v1400
    %1402 = vmatmul.f32.gmra.mxu0 %v1336
    %v1403 = vpop.f32.mrf.mxu0
    %v1404 = vadd.f32 0.0, %v1403
    %1405 = vmatmul.f32.gmra.mxu0 %v1339
    %v1406 = vpop.f32.mrf.mxu0
    %v1407 = vadd.f32 0.0, %v1406
    %1408 = vmatmul.f32.gmra.mxu0 %v1342
    %v1409 = vpop.f32.mrf.mxu0
    %v1410 = vadd.f32 0.0, %v1409
    %1411 = vmatmul.f32.gmra.mxu0 %v1345
    %v1412 = vpop.f32.mrf.mxu0
    %v1413 = vadd.f32 0.0, %v1412
    %1414 = vmatmul.f32.gmra.mxu0 %v1348
    %v1415 = vpop.f32.mrf.mxu0
    %v1416 = vadd.f32 0.0, %v1415
    %1417 = vdwg.mxu0
    %v1418 = vadd.f32 %v1171, %v1269
    %v1419 = vadd.f32 %v1177, %v1269
    %v1420 = vadd.f32 %v1183, %v1269
    %v1421 = vadd.f32 %v1189, %v1269
    %v1422 = vadd.f32 %v1195, %v1269
    %v1423 = vadd.f32 %v1201, %v1269
    %v1424 = vadd.f32 %v1207, %v1269
    %v1425 = vadd.f32 %v1213, %v1269
    %v1426 = vadd.f32 %v1219, %v1269
    %v1427 = vadd.f32 %v1225, %v1269
    %v1428 = vadd.f32 %v1231, %v1269
    %v1429 = vadd.f32 %v1237, %v1269
    %v1430 = vadd.f32 %v1243, %v1269
    %v1431 = vadd.f32 %v1249, %v1269
    %v1432 = vadd.f32 %v1255, %v1269
    %v1433 = vadd.f32 %v1261, %v1269
    %v1434 = vmul.f32 %v1371, 2.0
    %v1435 = vmul.f32 %v1374, 2.0
    %v1436 = vmul.f32 %v1377, 2.0
    %v1437 = vmul.f32 %v1380, 2.0
    %v1438 = vmul.f32 %v1383, 2.0
    %v1439 = vmul.f32 %v1386, 2.0
    %v1440 = vmul.f32 %v1389, 2.0
    %v1441 = vmul.f32 %v1392, 2.0
    %v1442 = vmul.f32 %v1395, 2.0
    %v1443 = vmul.f32 %v1398, 2.0
    %v1444 = vmul.f32 %v1401, 2.0
    %v1445 = vmul.f32 %v1404, 2.0
    %v1446 = vmul.f32 %v1407, 2.0
    %v1447 = vmul.f32 %v1410, 2.0
    %v1448 = vmul.f32 %v1413, 2.0
    %v1449 = vmul.f32 %v1416, 2.0
    %v1450 = vsub.f32 %v1418, %v1434
    %v1451 = vsub.f32 %v1419, %v1435
    %v1452 = vsub.f32 %v1420, %v1436
    %v1453 = vsub.f32 %v1421, %v1437
    %v1454 = vsub.f32 %v1422, %v1438
    %v1455 = vsub.f32 %v1423, %v1439
    %v1456 = vsub.f32 %v1424, %v1440
    %v1457 = vsub.f32 %v1425, %v1441
    %v1458 = vsub.f32 %v1426, %v1442
    %v1459 = vsub.f32 %v1427, %v1443
    %v1460 = vsub.f32 %v1428, %v1444
    %v1461 = vsub.f32 %v1429, %v1445
    %v1462 = vsub.f32 %v1430, %v1446
    %v1463 = vsub.f32 %v1431, %v1447
    %v1464 = vsub.f32 %v1432, %v1448
    %v1465 = vsub.f32 %v1433, %v1449
    %v1466 = vmax.f32 %v1450, 0.0
    %v1467 = vmax.f32 %v1451, 0.0
    %v1468 = vmax.f32 %v1452, 0.0
    %v1469 = vmax.f32 %v1453, 0.0
    %v1470 = vmax.f32 %v1454, 0.0
    %v1471 = vmax.f32 %v1455, 0.0
    %v1472 = vmax.f32 %v1456, 0.0
    %v1473 = vmax.f32 %v1457, 0.0
    %v1474 = vmax.f32 %v1458, 0.0
    %v1475 = vmax.f32 %v1459, 0.0
    %v1476 = vmax.f32 %v1460, 0.0
    %v1477 = vmax.f32 %v1461, 0.0
    %v1478 = vmax.f32 %v1462, 0.0
    %v1479 = vmax.f32 %v1463, 0.0
    %v1480 = vmax.f32 %v1464, 0.0
    %v1481 = vmax.f32 %v1465, 0.0
    %v1482 = vrsqrt.pop %v1466
    %v1483 = vmul.f32 %v1482, %v1466
    %v1484 = vmul.f32 %v1483, %v1482
    %v1485 = vmul.f32 0.5, %v1484
    %v1486 = vsub.f32 1.5, %v1485
    %v1487 = vmul.f32 %v1482, %v1486
    %v1488 = vmul.f32 %v1466, %v1487
    %vm1489 = vcmp.eq.f32.partialorder %v1466, inf
    %v1490 = vsel %vm1489, %v1466, %v1488
    %vm1491 = vcmp.eq.f32.partialorder %v1466, 0.0
    %v1492 = vand.u32 %v1466, 2147483648
    %v1493 = vsel %vm1491, %v1492, %v1490
    %v1494 = vrsqrt.pop %v1467
    %v1495 = vmul.f32 %v1494, %v1467
    %v1496 = vmul.f32 %v1495, %v1494
    %v1497 = vmul.f32 0.5, %v1496
    %v1498 = vsub.f32 1.5, %v1497
    %v1499 = vmul.f32 %v1494, %v1498
    %v1500 = vmul.f32 %v1467, %v1499
    %vm1501 = vcmp.eq.f32.partialorder %v1467, inf
    %v1502 = vsel %vm1501, %v1467, %v1500
    %vm1503 = vcmp.eq.f32.partialorder %v1467, 0.0
    %v1504 = vand.u32 %v1467, 2147483648
    %v1505 = vsel %vm1503, %v1504, %v1502
    %v1506 = vrsqrt.pop %v1468
    %v1507 = vmul.f32 %v1506, %v1468
    %v1508 = vmul.f32 %v1507, %v1506
    %v1509 = vmul.f32 0.5, %v1508
    %v1510 = vsub.f32 1.5, %v1509
    %v1511 = vmul.f32 %v1506, %v1510
    %v1512 = vmul.f32 %v1468, %v1511
    %vm1513 = vcmp.eq.f32.partialorder %v1468, inf
    %v1514 = vsel %vm1513, %v1468, %v1512
    %vm1515 = vcmp.eq.f32.partialorder %v1468, 0.0
    %v1516 = vand.u32 %v1468, 2147483648
    %v1517 = vsel %vm1515, %v1516, %v1514
    %v1518 = vrsqrt.pop %v1469
    %v1519 = vmul.f32 %v1518, %v1469
    %v1520 = vmul.f32 %v1519, %v1518
    %v1521 = vmul.f32 0.5, %v1520
    %v1522 = vsub.f32 1.5, %v1521
    %v1523 = vmul.f32 %v1518, %v1522
    %v1524 = vmul.f32 %v1469, %v1523
    %vm1525 = vcmp.eq.f32.partialorder %v1469, inf
    %v1526 = vsel %vm1525, %v1469, %v1524
    %vm1527 = vcmp.eq.f32.partialorder %v1469, 0.0
    %v1528 = vand.u32 %v1469, 2147483648
    %v1529 = vsel %vm1527, %v1528, %v1526
    %v1530 = vrsqrt.pop %v1470
    %v1531 = vmul.f32 %v1530, %v1470
    %v1532 = vmul.f32 %v1531, %v1530
    %v1533 = vmul.f32 0.5, %v1532
    %v1534 = vsub.f32 1.5, %v1533
    %v1535 = vmul.f32 %v1530, %v1534
    %v1536 = vmul.f32 %v1470, %v1535
    %vm1537 = vcmp.eq.f32.partialorder %v1470, inf
    %v1538 = vsel %vm1537, %v1470, %v1536
    %vm1539 = vcmp.eq.f32.partialorder %v1470, 0.0
    %v1540 = vand.u32 %v1470, 2147483648
    %v1541 = vsel %vm1539, %v1540, %v1538
    %v1542 = vrsqrt.pop %v1471
    %v1543 = vmul.f32 %v1542, %v1471
    %v1544 = vmul.f32 %v1543, %v1542
    %v1545 = vmul.f32 0.5, %v1544
    %v1546 = vsub.f32 1.5, %v1545
    %v1547 = vmul.f32 %v1542, %v1546
    %v1548 = vmul.f32 %v1471, %v1547
    %vm1549 = vcmp.eq.f32.partialorder %v1471, inf
    %v1550 = vsel %vm1549, %v1471, %v1548
    %vm1551 = vcmp.eq.f32.partialorder %v1471, 0.0
    %v1552 = vand.u32 %v1471, 2147483648
    %v1553 = vsel %vm1551, %v1552, %v1550
    %v1554 = vrsqrt.pop %v1472
    %v1555 = vmul.f32 %v1554, %v1472
    %v1556 = vmul.f32 %v1555, %v1554
    %v1557 = vmul.f32 0.5, %v1556
    %v1558 = vsub.f32 1.5, %v1557
    %v1559 = vmul.f32 %v1554, %v1558
    %v1560 = vmul.f32 %v1472, %v1559
    %vm1561 = vcmp.eq.f32.partialorder %v1472, inf
    %v1562 = vsel %vm1561, %v1472, %v1560
    %vm1563 = vcmp.eq.f32.partialorder %v1472, 0.0
    %v1564 = vand.u32 %v1472, 2147483648
    %v1565 = vsel %vm1563, %v1564, %v1562
    %v1566 = vrsqrt.pop %v1473
    %v1567 = vmul.f32 %v1566, %v1473
    %v1568 = vmul.f32 %v1567, %v1566
    %v1569 = vmul.f32 0.5, %v1568
    %v1570 = vsub.f32 1.5, %v1569
    %v1571 = vmul.f32 %v1566, %v1570
    %v1572 = vmul.f32 %v1473, %v1571
    %vm1573 = vcmp.eq.f32.partialorder %v1473, inf
    %v1574 = vsel %vm1573, %v1473, %v1572
    %vm1575 = vcmp.eq.f32.partialorder %v1473, 0.0
    %v1576 = vand.u32 %v1473, 2147483648
    %v1577 = vsel %vm1575, %v1576, %v1574
    %v1578 = vrsqrt.pop %v1474
    %v1579 = vmul.f32 %v1578, %v1474
    %v1580 = vmul.f32 %v1579, %v1578
    %v1581 = vmul.f32 0.5, %v1580
    %v1582 = vsub.f32 1.5, %v1581
    %v1583 = vmul.f32 %v1578, %v1582
    %v1584 = vmul.f32 %v1474, %v1583
    %vm1585 = vcmp.eq.f32.partialorder %v1474, inf
    %v1586 = vsel %vm1585, %v1474, %v1584
    %vm1587 = vcmp.eq.f32.partialorder %v1474, 0.0
    %v1588 = vand.u32 %v1474, 2147483648
    %v1589 = vsel %vm1587, %v1588, %v1586
    %v1590 = vrsqrt.pop %v1475
    %v1591 = vmul.f32 %v1590, %v1475
    %v1592 = vmul.f32 %v1591, %v1590
    %v1593 = vmul.f32 0.5, %v1592
    %v1594 = vsub.f32 1.5, %v1593
    %v1595 = vmul.f32 %v1590, %v1594
    %v1596 = vmul.f32 %v1475, %v1595
    %vm1597 = vcmp.eq.f32.partialorder %v1475, inf
    %v1598 = vsel %vm1597, %v1475, %v1596
    %vm1599 = vcmp.eq.f32.partialorder %v1475, 0.0
    %v1600 = vand.u32 %v1475, 2147483648
    %v1601 = vsel %vm1599, %v1600, %v1598
    %v1602 = vrsqrt.pop %v1476
    %v1603 = vmul.f32 %v1602, %v1476
    %v1604 = vmul.f32 %v1603, %v1602
    %v1605 = vmul.f32 0.5, %v1604
    %v1606 = vsub.f32 1.5, %v1605
    %v1607 = vmul.f32 %v1602, %v1606
    %v1608 = vmul.f32 %v1476, %v1607
    %vm1609 = vcmp.eq.f32.partialorder %v1476, inf
    %v1610 = vsel %vm1609, %v1476, %v1608
    %vm1611 = vcmp.eq.f32.partialorder %v1476, 0.0
    %v1612 = vand.u32 %v1476, 2147483648
    %v1613 = vsel %vm1611, %v1612, %v1610
    %v1614 = vrsqrt.pop %v1477
    %v1615 = vmul.f32 %v1614, %v1477
    %v1616 = vmul.f32 %v1615, %v1614
    %v1617 = vmul.f32 0.5, %v1616
    %v1618 = vsub.f32 1.5, %v1617
    %v1619 = vmul.f32 %v1614, %v1618
    %v1620 = vmul.f32 %v1477, %v1619
    %vm1621 = vcmp.eq.f32.partialorder %v1477, inf
    %v1622 = vsel %vm1621, %v1477, %v1620
    %vm1623 = vcmp.eq.f32.partialorder %v1477, 0.0
    %v1624 = vand.u32 %v1477, 2147483648
    %v1625 = vsel %vm1623, %v1624, %v1622
    %v1626 = vrsqrt.pop %v1478
    %v1627 = vmul.f32 %v1626, %v1478
    %v1628 = vmul.f32 %v1627, %v1626
    %v1629 = vmul.f32 0.5, %v1628
    %v1630 = vsub.f32 1.5, %v1629
    %v1631 = vmul.f32 %v1626, %v1630
    %v1632 = vmul.f32 %v1478, %v1631
    %vm1633 = vcmp.eq.f32.partialorder %v1478, inf
    %v1634 = vsel %vm1633, %v1478, %v1632
    %vm1635 = vcmp.eq.f32.partialorder %v1478, 0.0
    %v1636 = vand.u32 %v1478, 2147483648
    %v1637 = vsel %vm1635, %v1636, %v1634
    %v1638 = vrsqrt.pop %v1479
    %v1639 = vmul.f32 %v1638, %v1479
    %v1640 = vmul.f32 %v1639, %v1638
    %v1641 = vmul.f32 0.5, %v1640
    %v1642 = vsub.f32 1.5, %v1641
    %v1643 = vmul.f32 %v1638, %v1642
    %v1644 = vmul.f32 %v1479, %v1643
    %vm1645 = vcmp.eq.f32.partialorder %v1479, inf
    %v1646 = vsel %vm1645, %v1479, %v1644
    %vm1647 = vcmp.eq.f32.partialorder %v1479, 0.0
    %v1648 = vand.u32 %v1479, 2147483648
    %v1649 = vsel %vm1647, %v1648, %v1646
    %v1650 = vrsqrt.pop %v1480
    %v1651 = vmul.f32 %v1650, %v1480
    %v1652 = vmul.f32 %v1651, %v1650
    %v1653 = vmul.f32 0.5, %v1652
    %v1654 = vsub.f32 1.5, %v1653
    %v1655 = vmul.f32 %v1650, %v1654
    %v1656 = vmul.f32 %v1480, %v1655
    %vm1657 = vcmp.eq.f32.partialorder %v1480, inf
    %v1658 = vsel %vm1657, %v1480, %v1656
    %vm1659 = vcmp.eq.f32.partialorder %v1480, 0.0
    %v1660 = vand.u32 %v1480, 2147483648
    %v1661 = vsel %vm1659, %v1660, %v1658
    %v1662 = vrsqrt.pop %v1481
    %v1663 = vmul.f32 %v1662, %v1481
    %v1664 = vmul.f32 %v1663, %v1662
    %v1665 = vmul.f32 0.5, %v1664
    %v1666 = vsub.f32 1.5, %v1665
    %v1667 = vmul.f32 %v1662, %v1666
    %v1668 = vmul.f32 %v1481, %v1667
    %vm1669 = vcmp.eq.f32.partialorder %v1481, inf
    %v1670 = vsel %vm1669, %v1481, %v1668
    %vm1671 = vcmp.eq.f32.partialorder %v1481, 0.0
    %v1672 = vand.u32 %v1481, 2147483648
    %v1673 = vsel %vm1671, %v1672, %v1670
    %v1674 = vstv %s63
    %v1675 = vsub.f32 %v1493, %v1674
    %v1676 = vsub.f32 %v1505, %v1674
    %v1677 = vsub.f32 %v1517, %v1674
    %v1678 = vsub.f32 %v1529, %v1674
    %v1679 = vsub.f32 %v1541, %v1674
    %v1680 = vsub.f32 %v1553, %v1674
    %v1681 = vsub.f32 %v1565, %v1674
    %v1682 = vsub.f32 %v1577, %v1674
    %v1683 = vsub.f32 %v1589, %v1674
    %v1684 = vsub.f32 %v1601, %v1674
    %v1685 = vsub.f32 %v1613, %v1674
    %v1686 = vsub.f32 %v1625, %v1674
    %v1687 = vsub.f32 %v1637, %v1674
    %v1688 = vsub.f32 %v1649, %v1674
    %v1689 = vsub.f32 %v1661, %v1674
    %v1690 = vsub.f32 %v1673, %v1674
    %v1691 = vpack.c.bf16 %v1142, %v1142
    %v1692 = vpack.c.bf16 %v1143, %v1143
    %v1693 = vpack.c.bf16 %v1144, %v1144
    %v1694 = vpack.c.bf16 %v1145, %v1145
    %v1695 = vpack.c.bf16 %v1146, %v1146
    %v1696 = vpack.c.bf16 %v1147, %v1147
    %v1697 = vpack.c.bf16 %v1148, %v1148
    %v1698 = vpack.c.bf16 %v1149, %v1149
    %v1699 = vpack.c.bf16 %v1150, %v1150
    %v1700 = vpack.c.bf16 %v1151, %v1151
    %v1701 = vpack.c.bf16 %v1152, %v1152
    %v1702 = vpack.c.bf16 %v1153, %v1153
    %v1703 = vpack.c.bf16 %v1154, %v1154
    %v1704 = vpack.c.bf16 %v1155, %v1155
    %v1705 = vpack.c.bf16 %v1156, %v1156
    %v1706 = vpack.c.bf16 %v1157, %v1157
    %1707 = vst [vmem:[#allocation3] sm:$0xf] %v1691
    %1708 = vst [vmem:[#allocation3 + $0x4] sm:$0xf] %v1692
    %1709 = vst [vmem:[#allocation3 + $0x8] sm:$0xf] %v1693
    %1710 = vst [vmem:[#allocation3 + $0xc] sm:$0xf] %v1694
    %1711 = vst [vmem:[#allocation3 + $0x10] sm:$0xf] %v1695
    %1712 = vst [vmem:[#allocation3 + $0x14] sm:$0xf] %v1696
    %1713 = vst [vmem:[#allocation3 + $0x18] sm:$0xf] %v1697
    %1714 = vst [vmem:[#allocation3 + $0x1c] sm:$0xf] %v1698
    %1715 = vst [vmem:[#allocation3 + $0x20] sm:$0xf] %v1699
    %1716 = vst [vmem:[#allocation3 + $0x24] sm:$0xf] %v1700
    %1717 = vst [vmem:[#allocation3 + $0x28] sm:$0xf] %v1701
    %1718 = vst [vmem:[#allocation3 + $0x2c] sm:$0xf] %v1702
    %1719 = vst [vmem:[#allocation3 + $0x30] sm:$0xf] %v1703
    %1720 = vst [vmem:[#allocation3 + $0x34] sm:$0xf] %v1704
    %1721 = vst [vmem:[#allocation3 + $0x38] sm:$0xf] %v1705
    %1722 = vst [vmem:[#allocation3 + $0x3c] sm:$0xf] %v1706
    %v1723 = vpack.c.bf16 %v1675, %v1675
    %v1724 = vpack.c.bf16 %v1676, %v1676
    %v1725 = vpack.c.bf16 %v1677, %v1677
    %v1726 = vpack.c.bf16 %v1678, %v1678
    %v1727 = vpack.c.bf16 %v1679, %v1679
    %v1728 = vpack.c.bf16 %v1680, %v1680
    %v1729 = vpack.c.bf16 %v1681, %v1681
    %v1730 = vpack.c.bf16 %v1682, %v1682
    %v1731 = vpack.c.bf16 %v1683, %v1683
    %v1732 = vpack.c.bf16 %v1684, %v1684
    %v1733 = vpack.c.bf16 %v1685, %v1685
    %v1734 = vpack.c.bf16 %v1686, %v1686
    %v1735 = vpack.c.bf16 %v1687, %v1687
    %v1736 = vpack.c.bf16 %v1688, %v1688
    %v1737 = vpack.c.bf16 %v1689, %v1689
    %v1738 = vpack.c.bf16 %v1690, %v1690
    %1739 = vst [vmem:[#allocation3 + $0x40] sm:$0xf] %v1723
    %1740 = vst [vmem:[#allocation3 + $0x44] sm:$0xf] %v1724
    %1741 = vst [vmem:[#allocation3 + $0x48] sm:$0xf] %v1725
    %1742 = vst [vmem:[#allocation3 + $0x4c] sm:$0xf] %v1726
    %1743 = vst [vmem:[#allocation3 + $0x50] sm:$0xf] %v1727
    %1744 = vst [vmem:[#allocation3 + $0x54] sm:$0xf] %v1728
    %1745 = vst [vmem:[#allocation3 + $0x58] sm:$0xf] %v1729
    %1746 = vst [vmem:[#allocation3 + $0x5c] sm:$0xf] %v1730
    %1747 = vst [vmem:[#allocation3 + $0x60] sm:$0xf] %v1731
    %1748 = vst [vmem:[#allocation3 + $0x64] sm:$0xf] %v1732
    %1749 = vst [vmem:[#allocation3 + $0x68] sm:$0xf] %v1733
    %1750 = vst [vmem:[#allocation3 + $0x6c] sm:$0xf] %v1734
    %1751 = vst [vmem:[#allocation3 + $0x70] sm:$0xf] %v1735
    %1752 = vst [vmem:[#allocation3 + $0x74] sm:$0xf] %v1736
    %1753 = vst [vmem:[#allocation3 + $0x78] sm:$0xf] %v1737
    %1754 = vst [vmem:[#allocation3 + $0x7c] sm:$0xf] %v1738
    %v1755 = vmul.f32 %v1142, %v1675
    %v1756 = vmul.f32 %v1143, %v1676
    %v1757 = vmul.f32 %v1144, %v1677
    %v1758 = vmul.f32 %v1145, %v1678
    %v1759 = vmul.f32 %v1146, %v1679
    %v1760 = vmul.f32 %v1147, %v1680
    %v1761 = vmul.f32 %v1148, %v1681
    %v1762 = vmul.f32 %v1149, %v1682
    %v1763 = vmul.f32 %v1150, %v1683
    %v1764 = vmul.f32 %v1151, %v1684
    %v1765 = vmul.f32 %v1152, %v1685
    %v1766 = vmul.f32 %v1153, %v1686
    %v1767 = vmul.f32 %v1154, %v1687
    %v1768 = vmul.f32 %v1155, %v1688
    %v1769 = vmul.f32 %v1156, %v1689
    %v1770 = vmul.f32 %v1157, %v1690
    %v1771 = vpack.c.bf16 %v1755, %v1755
    %v1772 = vpack.c.bf16 %v1756, %v1756
    %v1773 = vpack.c.bf16 %v1757, %v1757
    %v1774 = vpack.c.bf16 %v1758, %v1758
    %v1775 = vpack.c.bf16 %v1759, %v1759
    %v1776 = vpack.c.bf16 %v1760, %v1760
    %v1777 = vpack.c.bf16 %v1761, %v1761
    %v1778 = vpack.c.bf16 %v1762, %v1762
    %v1779 = vpack.c.bf16 %v1763, %v1763
    %v1780 = vpack.c.bf16 %v1764, %v1764
    %v1781 = vpack.c.bf16 %v1765, %v1765
    %v1782 = vpack.c.bf16 %v1766, %v1766
    %v1783 = vpack.c.bf16 %v1767, %v1767
    %v1784 = vpack.c.bf16 %v1768, %v1768
    %v1785 = vpack.c.bf16 %v1769, %v1769
    %v1786 = vpack.c.bf16 %v1770, %v1770
    %1787 = vst [vmem:[#allocation3 + $0x80] sm:$0xf] %v1771
    %1788 = vst [vmem:[#allocation3 + $0x84] sm:$0xf] %v1772
    %1789 = vst [vmem:[#allocation3 + $0x88] sm:$0xf] %v1773
    %1790 = vst [vmem:[#allocation3 + $0x8c] sm:$0xf] %v1774
    %1791 = vst [vmem:[#allocation3 + $0x90] sm:$0xf] %v1775
    %1792 = vst [vmem:[#allocation3 + $0x94] sm:$0xf] %v1776
    %1793 = vst [vmem:[#allocation3 + $0x98] sm:$0xf] %v1777
    %1794 = vst [vmem:[#allocation3 + $0x9c] sm:$0xf] %v1778
    %1795 = vst [vmem:[#allocation3 + $0xa0] sm:$0xf] %v1779
    %1796 = vst [vmem:[#allocation3 + $0xa4] sm:$0xf] %v1780
    %1797 = vst [vmem:[#allocation3 + $0xa8] sm:$0xf] %v1781
    %1798 = vst [vmem:[#allocation3 + $0xac] sm:$0xf] %v1782
    %1799 = vst [vmem:[#allocation3 + $0xb0] sm:$0xf] %v1783
    %1800 = vst [vmem:[#allocation3 + $0xb4] sm:$0xf] %v1784
    %1801 = vst [vmem:[#allocation3 + $0xb8] sm:$0xf] %v1785
    %1802 = vst [vmem:[#allocation3 + $0xbc] sm:$0xf] %v1786
    %v1803 = vmul.f32 %v1142, %v1142
    %v1804 = vmul.f32 %v1143, %v1143
    %v1805 = vmul.f32 %v1144, %v1144
    %v1806 = vmul.f32 %v1145, %v1145
    %v1807 = vmul.f32 %v1146, %v1146
    %v1808 = vmul.f32 %v1147, %v1147
    %v1809 = vmul.f32 %v1148, %v1148
    %v1810 = vmul.f32 %v1149, %v1149
    %v1811 = vmul.f32 %v1150, %v1150
    %v1812 = vmul.f32 %v1151, %v1151
    %v1813 = vmul.f32 %v1152, %v1152
    %v1814 = vmul.f32 %v1153, %v1153
    %v1815 = vmul.f32 %v1154, %v1154
    %v1816 = vmul.f32 %v1155, %v1155
    %v1817 = vmul.f32 %v1156, %v1156
    %v1818 = vmul.f32 %v1157, %v1157
    %v1819 = vpack.c.bf16 %v1803, %v1803
    %v1820 = vpack.c.bf16 %v1804, %v1804
    %v1821 = vpack.c.bf16 %v1805, %v1805
    %v1822 = vpack.c.bf16 %v1806, %v1806
    %v1823 = vpack.c.bf16 %v1807, %v1807
    %v1824 = vpack.c.bf16 %v1808, %v1808
    %v1825 = vpack.c.bf16 %v1809, %v1809
    %v1826 = vpack.c.bf16 %v1810, %v1810
    %v1827 = vpack.c.bf16 %v1811, %v1811
    %v1828 = vpack.c.bf16 %v1812, %v1812
    %v1829 = vpack.c.bf16 %v1813, %v1813
    %v1830 = vpack.c.bf16 %v1814, %v1814
    %v1831 = vpack.c.bf16 %v1815, %v1815
    %v1832 = vpack.c.bf16 %v1816, %v1816
    %v1833 = vpack.c.bf16 %v1817, %v1817
    %v1834 = vpack.c.bf16 %v1818, %v1818
    %1835 = vst [vmem:[#allocation3 + $0xc0] sm:$0xf] %v1819
    %1836 = vst [vmem:[#allocation3 + $0xc4] sm:$0xf] %v1820
    %1837 = vst [vmem:[#allocation3 + $0xc8] sm:$0xf] %v1821
    %1838 = vst [vmem:[#allocation3 + $0xcc] sm:$0xf] %v1822
    %1839 = vst [vmem:[#allocation3 + $0xd0] sm:$0xf] %v1823
    %1840 = vst [vmem:[#allocation3 + $0xd4] sm:$0xf] %v1824
    %1841 = vst [vmem:[#allocation3 + $0xd8] sm:$0xf] %v1825
    %1842 = vst [vmem:[#allocation3 + $0xdc] sm:$0xf] %v1826
    %1843 = vst [vmem:[#allocation3 + $0xe0] sm:$0xf] %v1827
    %1844 = vst [vmem:[#allocation3 + $0xe4] sm:$0xf] %v1828
    %1845 = vst [vmem:[#allocation3 + $0xe8] sm:$0xf] %v1829
    %1846 = vst [vmem:[#allocation3 + $0xec] sm:$0xf] %v1830
    %1847 = vst [vmem:[#allocation3 + $0xf0] sm:$0xf] %v1831
    %1848 = vst [vmem:[#allocation3 + $0xf4] sm:$0xf] %v1832
    %1849 = vst [vmem:[#allocation3 + $0xf8] sm:$0xf] %v1833
    %1850 = vst [vmem:[#allocation3 + $0xfc] sm:$0xf] %v1834
    %v1851 = vmul.f32 %v1675, %v1675
    %v1852 = vmul.f32 %v1676, %v1676
    %v1853 = vmul.f32 %v1677, %v1677
    %v1854 = vmul.f32 %v1678, %v1678
    %v1855 = vmul.f32 %v1679, %v1679
    %v1856 = vmul.f32 %v1680, %v1680
    %v1857 = vmul.f32 %v1681, %v1681
    %v1858 = vmul.f32 %v1682, %v1682
    %v1859 = vmul.f32 %v1683, %v1683
    %v1860 = vmul.f32 %v1684, %v1684
    %v1861 = vmul.f32 %v1685, %v1685
    %v1862 = vmul.f32 %v1686, %v1686
    %v1863 = vmul.f32 %v1687, %v1687
    %v1864 = vmul.f32 %v1688, %v1688
    %v1865 = vmul.f32 %v1689, %v1689
    %v1866 = vmul.f32 %v1690, %v1690
    %v1867 = vpack.c.bf16 %v1851, %v1851
    %v1868 = vpack.c.bf16 %v1852, %v1852
    %v1869 = vpack.c.bf16 %v1853, %v1853
    %v1870 = vpack.c.bf16 %v1854, %v1854
    %v1871 = vpack.c.bf16 %v1855, %v1855
    %v1872 = vpack.c.bf16 %v1856, %v1856
    %v1873 = vpack.c.bf16 %v1857, %v1857
    %v1874 = vpack.c.bf16 %v1858, %v1858
    %v1875 = vpack.c.bf16 %v1859, %v1859
    %v1876 = vpack.c.bf16 %v1860, %v1860
    %v1877 = vpack.c.bf16 %v1861, %v1861
    %v1878 = vpack.c.bf16 %v1862, %v1862
    %v1879 = vpack.c.bf16 %v1863, %v1863
    %v1880 = vpack.c.bf16 %v1864, %v1864
    %v1881 = vpack.c.bf16 %v1865, %v1865
    %v1882 = vpack.c.bf16 %v1866, %v1866
    %1883 = vst [vmem:[#allocation3 + $0x100] sm:$0xf] %v1867
    %1884 = vst [vmem:[#allocation3 + $0x104] sm:$0xf] %v1868
    %1885 = vst [vmem:[#allocation3 + $0x108] sm:$0xf] %v1869
    %1886 = vst [vmem:[#allocation3 + $0x10c] sm:$0xf] %v1870
    %1887 = vst [vmem:[#allocation3 + $0x110] sm:$0xf] %v1871
    %1888 = vst [vmem:[#allocation3 + $0x114] sm:$0xf] %v1872
    %1889 = vst [vmem:[#allocation3 + $0x118] sm:$0xf] %v1873
    %1890 = vst [vmem:[#allocation3 + $0x11c] sm:$0xf] %v1874
    %1891 = vst [vmem:[#allocation3 + $0x120] sm:$0xf] %v1875
    %1892 = vst [vmem:[#allocation3 + $0x124] sm:$0xf] %v1876
    %1893 = vst [vmem:[#allocation3 + $0x128] sm:$0xf] %v1877
    %1894 = vst [vmem:[#allocation3 + $0x12c] sm:$0xf] %v1878
    %1895 = vst [vmem:[#allocation3 + $0x130] sm:$0xf] %v1879
    %1896 = vst [vmem:[#allocation3 + $0x134] sm:$0xf] %v1880
    %1897 = vst [vmem:[#allocation3 + $0x138] sm:$0xf] %v1881
    %1898 = vst [vmem:[#allocation3 + $0x13c] sm:$0xf] %v1882
    %v1899 = vld [vmem:[#allocation3] sm:$0xf]
    %v1900 = vld [vmem:[#allocation3 + $0x4] sm:$0xf]
    %v1901 = vld [vmem:[#allocation3 + $0x8] sm:$0xf]
    %v1902 = vld [vmem:[#allocation3 + $0xc] sm:$0xf]
    %v1903 = vld [vmem:[#allocation3 + $0x10] sm:$0xf]
    %v1904 = vld [vmem:[#allocation3 + $0x14] sm:$0xf]
    %v1905 = vld [vmem:[#allocation3 + $0x18] sm:$0xf]
    %v1906 = vld [vmem:[#allocation3 + $0x1c] sm:$0xf]
    %v1907 = vld [vmem:[#allocation3 + $0x20] sm:$0xf]
    %v1908 = vld [vmem:[#allocation3 + $0x24] sm:$0xf]
    %v1909 = vld [vmem:[#allocation3 + $0x28] sm:$0xf]
    %v1910 = vld [vmem:[#allocation3 + $0x2c] sm:$0xf]
    %v1911 = vld [vmem:[#allocation3 + $0x30] sm:$0xf]
    %v1912 = vld [vmem:[#allocation3 + $0x34] sm:$0xf]
    %v1913 = vld [vmem:[#allocation3 + $0x38] sm:$0xf]
    %v1914 = vld [vmem:[#allocation3 + $0x3c] sm:$0xf]
    %v1915 = vld [vmem:[#allocation3 + $0x40] sm:$0xf]
    %v1916 = vld [vmem:[#allocation3 + $0x44] sm:$0xf]
    %v1917 = vld [vmem:[#allocation3 + $0x48] sm:$0xf]
    %v1918 = vld [vmem:[#allocation3 + $0x4c] sm:$0xf]
    %v1919 = vld [vmem:[#allocation3 + $0x50] sm:$0xf]
    %v1920 = vld [vmem:[#allocation3 + $0x54] sm:$0xf]
    %v1921 = vld [vmem:[#allocation3 + $0x58] sm:$0xf]
    %v1922 = vld [vmem:[#allocation3 + $0x5c] sm:$0xf]
    %v1923 = vld [vmem:[#allocation3 + $0x60] sm:$0xf]
    %v1924 = vld [vmem:[#allocation3 + $0x64] sm:$0xf]
    %v1925 = vld [vmem:[#allocation3 + $0x68] sm:$0xf]
    %v1926 = vld [vmem:[#allocation3 + $0x6c] sm:$0xf]
    %v1927 = vld [vmem:[#allocation3 + $0x70] sm:$0xf]
    %v1928 = vld [vmem:[#allocation3 + $0x74] sm:$0xf]
    %v1929 = vld [vmem:[#allocation3 + $0x78] sm:$0xf]
    %v1930 = vld [vmem:[#allocation3 + $0x7c] sm:$0xf]
    %v1931 = vld [vmem:[#allocation3 + $0x80] sm:$0xf]
    %v1932 = vld [vmem:[#allocation3 + $0x84] sm:$0xf]
    %v1933 = vld [vmem:[#allocation3 + $0x88] sm:$0xf]
    %v1934 = vld [vmem:[#allocation3 + $0x8c] sm:$0xf]
    %v1935 = vld [vmem:[#allocation3 + $0x90] sm:$0xf]
    %v1936 = vld [vmem:[#allocation3 + $0x94] sm:$0xf]
    %v1937 = vld [vmem:[#allocation3 + $0x98] sm:$0xf]
    %v1938 = vld [vmem:[#allocation3 + $0x9c] sm:$0xf]
    %v1939 = vld [vmem:[#allocation3 + $0xa0] sm:$0xf]
    %v1940 = vld [vmem:[#allocation3 + $0xa4] sm:$0xf]
    %v1941 = vld [vmem:[#allocation3 + $0xa8] sm:$0xf]
    %v1942 = vld [vmem:[#allocation3 + $0xac] sm:$0xf]
    %v1943 = vld [vmem:[#allocation3 + $0xb0] sm:$0xf]
    %v1944 = vld [vmem:[#allocation3 + $0xb4] sm:$0xf]
    %v1945 = vld [vmem:[#allocation3 + $0xb8] sm:$0xf]
    %v1946 = vld [vmem:[#allocation3 + $0xbc] sm:$0xf]
    %v1947 = vld [vmem:[#allocation3 + $0xc0] sm:$0xf]
    %v1948 = vld [vmem:[#allocation3 + $0xc4] sm:$0xf]
    %v1949 = vld [vmem:[#allocation3 + $0xc8] sm:$0xf]
    %v1950 = vld [vmem:[#allocation3 + $0xcc] sm:$0xf]
    %v1951 = vld [vmem:[#allocation3 + $0xd0] sm:$0xf]
    %v1952 = vld [vmem:[#allocation3 + $0xd4] sm:$0xf]
    %v1953 = vld [vmem:[#allocation3 + $0xd8] sm:$0xf]
    %v1954 = vld [vmem:[#allocation3 + $0xdc] sm:$0xf]
    %v1955 = vld [vmem:[#allocation3 + $0xe0] sm:$0xf]
    %v1956 = vld [vmem:[#allocation3 + $0xe4] sm:$0xf]
    %v1957 = vld [vmem:[#allocation3 + $0xe8] sm:$0xf]
    %v1958 = vld [vmem:[#allocation3 + $0xec] sm:$0xf]
    %v1959 = vld [vmem:[#allocation3 + $0xf0] sm:$0xf]
    %v1960 = vld [vmem:[#allocation3 + $0xf4] sm:$0xf]
    %v1961 = vld [vmem:[#allocation3 + $0xf8] sm:$0xf]
    %v1962 = vld [vmem:[#allocation3 + $0xfc] sm:$0xf]
    %v1963 = vld [vmem:[#allocation3 + $0x100] sm:$0xf]
    %v1964 = vld [vmem:[#allocation3 + $0x104] sm:$0xf]
    %v1965 = vld [vmem:[#allocation3 + $0x108] sm:$0xf]
    %v1966 = vld [vmem:[#allocation3 + $0x10c] sm:$0xf]
    %v1967 = vld [vmem:[#allocation3 + $0x110] sm:$0xf]
    %v1968 = vld [vmem:[#allocation3 + $0x114] sm:$0xf]
    %v1969 = vld [vmem:[#allocation3 + $0x118] sm:$0xf]
    %v1970 = vld [vmem:[#allocation3 + $0x11c] sm:$0xf]
    %v1971 = vld [vmem:[#allocation3 + $0x120] sm:$0xf]
    %v1972 = vld [vmem:[#allocation3 + $0x124] sm:$0xf]
    %v1973 = vld [vmem:[#allocation3 + $0x128] sm:$0xf]
    %v1974 = vld [vmem:[#allocation3 + $0x12c] sm:$0xf]
    %v1975 = vld [vmem:[#allocation3 + $0x130] sm:$0xf]
    %v1976 = vld [vmem:[#allocation3 + $0x134] sm:$0xf]
    %v1977 = vld [vmem:[#allocation3 + $0x138] sm:$0xf]
    %v1978 = vld [vmem:[#allocation3 + $0x13c] sm:$0xf]
    %v2059 = vunpack.c.l.b16 %v1899
    %v2060 = vunpack.c.l.b16 %v1900
    %v2061 = vunpack.c.l.b16 %v1901
    %v2062 = vunpack.c.l.b16 %v1902
    %v2063 = vunpack.c.l.b16 %v1903
    %v2064 = vunpack.c.l.b16 %v1904
    %v2065 = vunpack.c.l.b16 %v1905
    %v2066 = vunpack.c.l.b16 %v1906
    %v2067 = vunpack.c.l.b16 %v1907
    %v2068 = vunpack.c.l.b16 %v1908
    %v2069 = vunpack.c.l.b16 %v1909
    %v2070 = vunpack.c.l.b16 %v1910
    %v2071 = vunpack.c.l.b16 %v1911
    %v2072 = vunpack.c.l.b16 %v1912
    %v2073 = vunpack.c.l.b16 %v1913
    %v2074 = vunpack.c.l.b16 %v1914
    %v2075 = vunpack.c.l.b16 %v1915
    %v2076 = vunpack.c.l.b16 %v1916
    %v2077 = vunpack.c.l.b16 %v1917
    %v2078 = vunpack.c.l.b16 %v1918
    %v2079 = vunpack.c.l.b16 %v1919
    %v2080 = vunpack.c.l.b16 %v1920
    %v2081 = vunpack.c.l.b16 %v1921
    %v2082 = vunpack.c.l.b16 %v1922
    %v2083 = vunpack.c.l.b16 %v1923
    %v2084 = vunpack.c.l.b16 %v1924
    %v2085 = vunpack.c.l.b16 %v1925
    %v2086 = vunpack.c.l.b16 %v1926
    %v2087 = vunpack.c.l.b16 %v1927
    %v2088 = vunpack.c.l.b16 %v1928
    %v2089 = vunpack.c.l.b16 %v1929
    %v2090 = vunpack.c.l.b16 %v1930
    %v2091 = vunpack.c.l.b16 %v1931
    %v2092 = vunpack.c.l.b16 %v1932
    %v2093 = vunpack.c.l.b16 %v1933
    %v2094 = vunpack.c.l.b16 %v1934
    %v2095 = vunpack.c.l.b16 %v1935
    %v2096 = vunpack.c.l.b16 %v1936
    %v2097 = vunpack.c.l.b16 %v1937
    %v2098 = vunpack.c.l.b16 %v1938
    %v2099 = vunpack.c.l.b16 %v1939
    %v2100 = vunpack.c.l.b16 %v1940
    %v2101 = vunpack.c.l.b16 %v1941
    %v2102 = vunpack.c.l.b16 %v1942
    %v2103 = vunpack.c.l.b16 %v1943
    %v2104 = vunpack.c.l.b16 %v1944
    %v2105 = vunpack.c.l.b16 %v1945
    %v2106 = vunpack.c.l.b16 %v1946
    %v2107 = vunpack.c.l.b16 %v1947
    %v2108 = vunpack.c.l.b16 %v1948
    %v2109 = vunpack.c.l.b16 %v1949
    %v2110 = vunpack.c.l.b16 %v1950
    %v2111 = vunpack.c.l.b16 %v1951
    %v2112 = vunpack.c.l.b16 %v1952
    %v2113 = vunpack.c.l.b16 %v1953
    %v2114 = vunpack.c.l.b16 %v1954
    %v2115 = vunpack.c.l.b16 %v1955
    %v2116 = vunpack.c.l.b16 %v1956
    %v2117 = vunpack.c.l.b16 %v1957
    %v2118 = vunpack.c.l.b16 %v1958
    %v2119 = vunpack.c.l.b16 %v1959
    %v2120 = vunpack.c.l.b16 %v1960
    %v2121 = vunpack.c.l.b16 %v1961
    %v2122 = vunpack.c.l.b16 %v1962
    %v2123 = vunpack.c.l.b16 %v1963
    %v2124 = vunpack.c.l.b16 %v1964
    %v2125 = vunpack.c.l.b16 %v1965
    %v2126 = vunpack.c.l.b16 %v1966
    %v2127 = vunpack.c.l.b16 %v1967
    %v2128 = vunpack.c.l.b16 %v1968
    %v2129 = vunpack.c.l.b16 %v1969
    %v2130 = vunpack.c.l.b16 %v1970
    %v2131 = vunpack.c.l.b16 %v1971
    %v2132 = vunpack.c.l.b16 %v1972
    %v2133 = vunpack.c.l.b16 %v1973
    %v2134 = vunpack.c.l.b16 %v1974
    %v2135 = vunpack.c.l.b16 %v1975
    %v2136 = vunpack.c.l.b16 %v1976
    %v2137 = vunpack.c.l.b16 %v1977
    %v2138 = vunpack.c.l.b16 %v1978
    %v2139 = vpack.c.b16 %v2060, %v2059
    %v2140 = vpack.c.b16 %v2062, %v2061
    %v2141 = vpack.c.b16 %v2064, %v2063
    %v2142 = vpack.c.b16 %v2066, %v2065
    %v2143 = vpack.c.b16 %v2068, %v2067
    %v2144 = vpack.c.b16 %v2070, %v2069
    %v2145 = vpack.c.b16 %v2072, %v2071
    %v2146 = vpack.c.b16 %v2074, %v2073
    %v2147 = vpack.c.b16 %v2076, %v2075
    %v2148 = vpack.c.b16 %v2078, %v2077
    %v2149 = vpack.c.b16 %v2080, %v2079
    %v2150 = vpack.c.b16 %v2082, %v2081
    %v2151 = vpack.c.b16 %v2084, %v2083
    %v2152 = vpack.c.b16 %v2086, %v2085
    %v2153 = vpack.c.b16 %v2088, %v2087
    %v2154 = vpack.c.b16 %v2090, %v2089
    %v2155 = vpack.c.b16 %v2092, %v2091
    %v2156 = vpack.c.b16 %v2094, %v2093
    %v2157 = vpack.c.b16 %v2096, %v2095
    %v2158 = vpack.c.b16 %v2098, %v2097
    %v2159 = vpack.c.b16 %v2100, %v2099
    %v2160 = vpack.c.b16 %v2102, %v2101
    %v2161 = vpack.c.b16 %v2104, %v2103
    %v2162 = vpack.c.b16 %v2106, %v2105
    %v2163 = vpack.c.b16 %v2108, %v2107
    %v2164 = vpack.c.b16 %v2110, %v2109
    %v2165 = vpack.c.b16 %v2112, %v2111
    %v2166 = vpack.c.b16 %v2114, %v2113
    %v2167 = vpack.c.b16 %v2116, %v2115
    %v2168 = vpack.c.b16 %v2118, %v2117
    %v2169 = vpack.c.b16 %v2120, %v2119
    %v2170 = vpack.c.b16 %v2122, %v2121
    %v2171 = vpack.c.b16 %v2124, %v2123
    %v2172 = vpack.c.b16 %v2126, %v2125
    %v2173 = vpack.c.b16 %v2128, %v2127
    %v2174 = vpack.c.b16 %v2130, %v2129
    %v2175 = vpack.c.b16 %v2132, %v2131
    %v2176 = vpack.c.b16 %v2134, %v2133
    %v2177 = vpack.c.b16 %v2136, %v2135
    %v2178 = vpack.c.b16 %v2138, %v2137
    %v2235 = vunpack.c.l.b16 %v595
    %v2236 = vunpack.c.l.b16 %v596
    %v2237 = vunpack.c.l.b16 %v597
    %v2238 = vunpack.c.l.b16 %v598
    %v2239 = vunpack.c.l.b16 %v599
    %v2240 = vunpack.c.l.b16 %v600
    %v2241 = vunpack.c.l.b16 %v601
    %v2242 = vunpack.c.l.b16 %v602
    %v2243 = vunpack.c.l.b16 %v603
    %v2244 = vunpack.c.l.b16 %v604
    %v2245 = vunpack.c.l.b16 %v605
    %v2246 = vunpack.c.l.b16 %v606
    %v2247 = vunpack.c.l.b16 %v607
    %v2248 = vunpack.c.l.b16 %v608
    %v2249 = vunpack.c.l.b16 %v609
    %v2250 = vunpack.c.l.b16 %v610
    %v2251 = vpack.c.b16 %v2236, %v2235
    %v2252 = vpack.c.b16 %v2238, %v2237
    %v2253 = vpack.c.b16 %v2240, %v2239
    %v2254 = vpack.c.b16 %v2242, %v2241
    %v2255 = vpack.c.b16 %v2244, %v2243
    %v2256 = vpack.c.b16 %v2246, %v2245
    %v2257 = vpack.c.b16 %v2248, %v2247
    %v2258 = vpack.c.b16 %v2250, %v2249
    %2267 = vmatpush.bf16.msra.mxu0 %v2258
    %2268 = vmatpush.bf16.msra.mxu0 %v2257
    %2269 = vmatpush.bf16.msra.mxu0 %v2256
    %2270 = vmatpush.bf16.msra.mxu0 %v2255
    %2271 = vmatpush.bf16.msra.mxu0 %v2254
    %2272 = vmatpush.bf16.msra.mxu0 %v2253
    %2273 = vmatpush.bf16.msra.mxu0 %v2252
    %2274 = vmatpush.bf16.msra.mxu0 %v2251
    %2275 = vmatmul.bf16.gmra.mxu0 %v2139
    %v2276 = vpop.f32.mrf.mxu0
    %v2277 = vadd.f32 0.0, %v2276
    %v2278 = vpop.f32.mrf.mxu0
    %v2279 = vadd.f32 0.0, %v2278
    %2280 = vmatmul.bf16.gmra.mxu0 %v2140
    %v2281 = vpop.f32.mrf.mxu0
    %v2282 = vadd.f32 0.0, %v2281
    %v2283 = vpop.f32.mrf.mxu0
    %v2284 = vadd.f32 0.0, %v2283
    %2285 = vmatmul.bf16.gmra.mxu0 %v2141
    %v2286 = vpop.f32.mrf.mxu0
    %v2287 = vadd.f32 0.0, %v2286
    %v2288 = vpop.f32.mrf.mxu0
    %v2289 = vadd.f32 0.0, %v2288
    %2290 = vmatmul.bf16.gmra.mxu0 %v2142
    %v2291 = vpop.f32.mrf.mxu0
    %v2292 = vadd.f32 0.0, %v2291
    %v2293 = vpop.f32.mrf.mxu0
    %v2294 = vadd.f32 0.0, %v2293
    %2295 = vmatmul.bf16.gmra.mxu0 %v2143
    %v2296 = vpop.f32.mrf.mxu0
    %v2297 = vadd.f32 0.0, %v2296
    %v2298 = vpop.f32.mrf.mxu0
    %v2299 = vadd.f32 0.0, %v2298
    %2300 = vmatmul.bf16.gmra.mxu0 %v2144
    %v2301 = vpop.f32.mrf.mxu0
    %v2302 = vadd.f32 0.0, %v2301
    %v2303 = vpop.f32.mrf.mxu0
    %v2304 = vadd.f32 0.0, %v2303
    %2305 = vmatmul.bf16.gmra.mxu0 %v2145
    %v2306 = vpop.f32.mrf.mxu0
    %v2307 = vadd.f32 0.0, %v2306
    %v2308 = vpop.f32.mrf.mxu0
    %v2309 = vadd.f32 0.0, %v2308
    %2310 = vmatmul.bf16.gmra.mxu0 %v2146
    %v2311 = vpop.f32.mrf.mxu0
    %v2312 = vadd.f32 0.0, %v2311
    %v2313 = vpop.f32.mrf.mxu0
    %v2314 = vadd.f32 0.0, %v2313
    %2315 = vmatmul.bf16.gmra.mxu0 %v2147
    %v2316 = vpop.f32.mrf.mxu0
    %v2317 = vadd.f32 0.0, %v2316
    %v2318 = vpop.f32.mrf.mxu0
    %v2319 = vadd.f32 0.0, %v2318
    %2320 = vmatmul.bf16.gmra.mxu0 %v2148
    %v2321 = vpop.f32.mrf.mxu0
    %v2322 = vadd.f32 0.0, %v2321
    %v2323 = vpop.f32.mrf.mxu0
    %v2324 = vadd.f32 0.0, %v2323
    %2325 = vmatmul.bf16.gmra.mxu0 %v2149
    %v2326 = vpop.f32.mrf.mxu0
    %v2327 = vadd.f32 0.0, %v2326
    %v2328 = vpop.f32.mrf.mxu0
    %v2329 = vadd.f32 0.0, %v2328
    %2330 = vmatmul.bf16.gmra.mxu0 %v2150
    %v2331 = vpop.f32.mrf.mxu0
    %v2332 = vadd.f32 0.0, %v2331
    %v2333 = vpop.f32.mrf.mxu0
    %v2334 = vadd.f32 0.0, %v2333
    %2335 = vmatmul.bf16.gmra.mxu0 %v2151
    %v2336 = vpop.f32.mrf.mxu0
    %v2337 = vadd.f32 0.0, %v2336
    %v2338 = vpop.f32.mrf.mxu0
    %v2339 = vadd.f32 0.0, %v2338
    %2340 = vmatmul.bf16.gmra.mxu0 %v2152
    %v2341 = vpop.f32.mrf.mxu0
    %v2342 = vadd.f32 0.0, %v2341
    %v2343 = vpop.f32.mrf.mxu0
    %v2344 = vadd.f32 0.0, %v2343
    %2345 = vmatmul.bf16.gmra.mxu0 %v2153
    %v2346 = vpop.f32.mrf.mxu0
    %v2347 = vadd.f32 0.0, %v2346
    %v2348 = vpop.f32.mrf.mxu0
    %v2349 = vadd.f32 0.0, %v2348
    %2350 = vmatmul.bf16.gmra.mxu0 %v2154
    %v2351 = vpop.f32.mrf.mxu0
    %v2352 = vadd.f32 0.0, %v2351
    %v2353 = vpop.f32.mrf.mxu0
    %v2354 = vadd.f32 0.0, %v2353
    %2355 = vmatmul.bf16.gmra.mxu0 %v2155
    %v2356 = vpop.f32.mrf.mxu0
    %v2357 = vadd.f32 0.0, %v2356
    %v2358 = vpop.f32.mrf.mxu0
    %v2359 = vadd.f32 0.0, %v2358
    %2360 = vmatmul.bf16.gmra.mxu0 %v2156
    %v2361 = vpop.f32.mrf.mxu0
    %v2362 = vadd.f32 0.0, %v2361
    %v2363 = vpop.f32.mrf.mxu0
    %v2364 = vadd.f32 0.0, %v2363
    %2365 = vmatmul.bf16.gmra.mxu0 %v2157
    %v2366 = vpop.f32.mrf.mxu0
    %v2367 = vadd.f32 0.0, %v2366
    %v2368 = vpop.f32.mrf.mxu0
    %v2369 = vadd.f32 0.0, %v2368
    %2370 = vmatmul.bf16.gmra.mxu0 %v2158
    %v2371 = vpop.f32.mrf.mxu0
    %v2372 = vadd.f32 0.0, %v2371
    %v2373 = vpop.f32.mrf.mxu0
    %v2374 = vadd.f32 0.0, %v2373
    %2375 = vmatmul.bf16.gmra.mxu0 %v2159
    %v2376 = vpop.f32.mrf.mxu0
    %v2377 = vadd.f32 0.0, %v2376
    %v2378 = vpop.f32.mrf.mxu0
    %v2379 = vadd.f32 0.0, %v2378
    %2380 = vmatmul.bf16.gmra.mxu0 %v2160
    %v2381 = vpop.f32.mrf.mxu0
    %v2382 = vadd.f32 0.0, %v2381
    %v2383 = vpop.f32.mrf.mxu0
    %v2384 = vadd.f32 0.0, %v2383
    %2385 = vmatmul.bf16.gmra.mxu0 %v2161
    %v2386 = vpop.f32.mrf.mxu0
    %v2387 = vadd.f32 0.0, %v2386
    %v2388 = vpop.f32.mrf.mxu0
    %v2389 = vadd.f32 0.0, %v2388
    %2390 = vmatmul.bf16.gmra.mxu0 %v2162
    %v2391 = vpop.f32.mrf.mxu0
    %v2392 = vadd.f32 0.0, %v2391
    %v2393 = vpop.f32.mrf.mxu0
    %v2394 = vadd.f32 0.0, %v2393
    %2395 = vmatmul.bf16.gmra.mxu0 %v2163
    %v2396 = vpop.f32.mrf.mxu0
    %v2397 = vadd.f32 0.0, %v2396
    %v2398 = vpop.f32.mrf.mxu0
    %v2399 = vadd.f32 0.0, %v2398
    %2400 = vmatmul.bf16.gmra.mxu0 %v2164
    %v2401 = vpop.f32.mrf.mxu0
    %v2402 = vadd.f32 0.0, %v2401
    %v2403 = vpop.f32.mrf.mxu0
    %v2404 = vadd.f32 0.0, %v2403
    %2405 = vmatmul.bf16.gmra.mxu0 %v2165
    %v2406 = vpop.f32.mrf.mxu0
    %v2407 = vadd.f32 0.0, %v2406
    %v2408 = vpop.f32.mrf.mxu0
    %v2409 = vadd.f32 0.0, %v2408
    %2410 = vmatmul.bf16.gmra.mxu0 %v2166
    %v2411 = vpop.f32.mrf.mxu0
    %v2412 = vadd.f32 0.0, %v2411
    %v2413 = vpop.f32.mrf.mxu0
    %v2414 = vadd.f32 0.0, %v2413
    %2415 = vmatmul.bf16.gmra.mxu0 %v2167
    %v2416 = vpop.f32.mrf.mxu0
    %v2417 = vadd.f32 0.0, %v2416
    %v2418 = vpop.f32.mrf.mxu0
    %v2419 = vadd.f32 0.0, %v2418
    %2420 = vmatmul.bf16.gmra.mxu0 %v2168
    %v2421 = vpop.f32.mrf.mxu0
    %v2422 = vadd.f32 0.0, %v2421
    %v2423 = vpop.f32.mrf.mxu0
    %v2424 = vadd.f32 0.0, %v2423
    %2425 = vmatmul.bf16.gmra.mxu0 %v2169
    %v2426 = vpop.f32.mrf.mxu0
    %v2427 = vadd.f32 0.0, %v2426
    %v2428 = vpop.f32.mrf.mxu0
    %v2429 = vadd.f32 0.0, %v2428
    %2430 = vmatmul.bf16.gmra.mxu0 %v2170
    %v2431 = vpop.f32.mrf.mxu0
    %v2432 = vadd.f32 0.0, %v2431
    %v2433 = vpop.f32.mrf.mxu0
    %v2434 = vadd.f32 0.0, %v2433
    %2435 = vmatmul.bf16.gmra.mxu0 %v2171
    %v2436 = vpop.f32.mrf.mxu0
    %v2437 = vadd.f32 0.0, %v2436
    %v2438 = vpop.f32.mrf.mxu0
    %v2439 = vadd.f32 0.0, %v2438
    %2440 = vmatmul.bf16.gmra.mxu0 %v2172
    %v2441 = vpop.f32.mrf.mxu0
    %v2442 = vadd.f32 0.0, %v2441
    %v2443 = vpop.f32.mrf.mxu0
    %v2444 = vadd.f32 0.0, %v2443
    %2445 = vmatmul.bf16.gmra.mxu0 %v2173
    %v2446 = vpop.f32.mrf.mxu0
    %v2447 = vadd.f32 0.0, %v2446
    %v2448 = vpop.f32.mrf.mxu0
    %v2449 = vadd.f32 0.0, %v2448
    %2450 = vmatmul.bf16.gmra.mxu0 %v2174
    %v2451 = vpop.f32.mrf.mxu0
    %v2452 = vadd.f32 0.0, %v2451
    %v2453 = vpop.f32.mrf.mxu0
    %v2454 = vadd.f32 0.0, %v2453
    %2455 = vmatmul.bf16.gmra.mxu0 %v2175
    %v2456 = vpop.f32.mrf.mxu0
    %v2457 = vadd.f32 0.0, %v2456
    %v2458 = vpop.f32.mrf.mxu0
    %v2459 = vadd.f32 0.0, %v2458
    %2460 = vmatmul.bf16.gmra.mxu0 %v2176
    %v2461 = vpop.f32.mrf.mxu0
    %v2462 = vadd.f32 0.0, %v2461
    %v2463 = vpop.f32.mrf.mxu0
    %v2464 = vadd.f32 0.0, %v2463
    %2465 = vmatmul.bf16.gmra.mxu0 %v2177
    %v2466 = vpop.f32.mrf.mxu0
    %v2467 = vadd.f32 0.0, %v2466
    %v2468 = vpop.f32.mrf.mxu0
    %v2469 = vadd.f32 0.0, %v2468
    %2470 = vmatmul.bf16.gmra.mxu0 %v2178
    %v2471 = vpop.f32.mrf.mxu0
    %v2472 = vadd.f32 0.0, %v2471
    %v2473 = vpop.f32.mrf.mxu0
    %v2474 = vadd.f32 0.0, %v2473
    %2475 = vdwg.mxu0
    // Predicated region
    $region38: #{tpu_custom_call.1} parent=1 // pred_check
      %p2476 = pneg %p65
    $region39: #{tpu_custom_call.1} parent=1 // pred_check_branch
      %2478 = sbr.rel (%p2476) target = $region41
    $region40: #{tpu_custom_call.1} parent=1 // pred_region
      %2479 = vst [vmem:[#allocation2] sm:$0xff] %v2277
      %2480 = vst [vmem:[#allocation2 + $0x8] sm:$0xff] %v2279
      %2481 = vst [vmem:[#allocation2 + $0x10] sm:$0xff] %v2282
      %2482 = vst [vmem:[#allocation2 + $0x18] sm:$0xff] %v2284
      %2483 = vst [vmem:[#allocation2 + $0x20] sm:$0xff] %v2287
      %2484 = vst [vmem:[#allocation2 + $0x28] sm:$0xff] %v2289
      %2485 = vst [vmem:[#allocation2 + $0x30] sm:$0xff] %v2292
      %2486 = vst [vmem:[#allocation2 + $0x38] sm:$0xff] %v2294
      %2487 = vst [vmem:[#allocation2 + $0x40] sm:$0xff] %v2297
      %2488 = vst [vmem:[#allocation2 + $0x48] sm:$0xff] %v2299
      %2489 = vst [vmem:[#allocation2 + $0x50] sm:$0xff] %v2302
      %2490 = vst [vmem:[#allocation2 + $0x58] sm:$0xff] %v2304
      %2491 = vst [vmem:[#allocation2 + $0x60] sm:$0xff] %v2307
      %2492 = vst [vmem:[#allocation2 + $0x68] sm:$0xff] %v2309
      %2493 = vst [vmem:[#allocation2 + $0x70] sm:$0xff] %v2312
      %2494 = vst [vmem:[#allocation2 + $0x78] sm:$0xff] %v2314
      %2495 = vst [vmem:[#allocation2 + $0x80] sm:$0xff] %v2317
      %2496 = vst [vmem:[#allocation2 + $0x88] sm:$0xff] %v2319
      %2497 = vst [vmem:[#allocation2 + $0x90] sm:$0xff] %v2322
      %2498 = vst [vmem:[#allocation2 + $0x98] sm:$0xff] %v2324
      %2499 = vst [vmem:[#allocation2 + $0xa0] sm:$0xff] %v2327
      %2500 = vst [vmem:[#allocation2 + $0xa8] sm:$0xff] %v2329
      %2501 = vst [vmem:[#allocation2 + $0xb0] sm:$0xff] %v2332
      %2502 = vst [vmem:[#allocation2 + $0xb8] sm:$0xff] %v2334
      %2503 = vst [vmem:[#allocation2 + $0xc0] sm:$0xff] %v2337
      %2504 = vst [vmem:[#allocation2 + $0xc8] sm:$0xff] %v2339
      %2505 = vst [vmem:[#allocation2 + $0xd0] sm:$0xff] %v2342
      %2506 = vst [vmem:[#allocation2 + $0xd8] sm:$0xff] %v2344
      %2507 = vst [vmem:[#allocation2 + $0xe0] sm:$0xff] %v2347
      %2508 = vst [vmem:[#allocation2 + $0xe8] sm:$0xff] %v2349
      %2509 = vst [vmem:[#allocation2 + $0xf0] sm:$0xff] %v2352
      %2510 = vst [vmem:[#allocation2 + $0xf8] sm:$0xff] %v2354
      %2511 = vst [vmem:[#allocation2 + $0x100] sm:$0xff] %v2357
      %2512 = vst [vmem:[#allocation2 + $0x108] sm:$0xff] %v2359
      %2513 = vst [vmem:[#allocation2 + $0x110] sm:$0xff] %v2362
      %2514 = vst [vmem:[#allocation2 + $0x118] sm:$0xff] %v2364
      %2515 = vst [vmem:[#allocation2 + $0x120] sm:$0xff] %v2367
      %2516 = vst [vmem:[#allocation2 + $0x128] sm:$0xff] %v2369
      %2517 = vst [vmem:[#allocation2 + $0x130] sm:$0xff] %v2372
      %2518 = vst [vmem:[#allocation2 + $0x138] sm:$0xff] %v2374
      %2519 = vst [vmem:[#allocation2 + $0x140] sm:$0xff] %v2377
      %2520 = vst [vmem:[#allocation2 + $0x148] sm:$0xff] %v2379
      %2521 = vst [vmem:[#allocation2 + $0x150] sm:$0xff] %v2382
      %2522 = vst [vmem:[#allocation2 + $0x158] sm:$0xff] %v2384
      %2523 = vst [vmem:[#allocation2 + $0x160] sm:$0xff] %v2387
      %2524 = vst [vmem:[#allocation2 + $0x168] sm:$0xff] %v2389
      %2525 = vst [vmem:[#allocation2 + $0x170] sm:$0xff] %v2392
      %2526 = vst [vmem:[#allocation2 + $0x178] sm:$0xff] %v2394
      %2527 = vst [vmem:[#allocation2 + $0x180] sm:$0xff] %v2397
      %2528 = vst [vmem:[#allocation2 + $0x188] sm:$0xff] %v2399
      %2529 = vst [vmem:[#allocation2 + $0x190] sm:$0xff] %v2402
      %2530 = vst [vmem:[#allocation2 + $0x198] sm:$0xff] %v2404
      %2531 = vst [vmem:[#allocation2 + $0x1a0] sm:$0xff] %v2407
      %2532 = vst [vmem:[#allocation2 + $0x1a8] sm:$0xff] %v2409
      %2533 = vst [vmem:[#allocation2 + $0x1b0] sm:$0xff] %v2412
      %2534 = vst [vmem:[#allocation2 + $0x1b8] sm:$0xff] %v2414
      %2535 = vst [vmem:[#allocation2 + $0x1c0] sm:$0xff] %v2417
      %2536 = vst [vmem:[#allocation2 + $0x1c8] sm:$0xff] %v2419
      %2537 = vst [vmem:[#allocation2 + $0x1d0] sm:$0xff] %v2422
      %2538 = vst [vmem:[#allocation2 + $0x1d8] sm:$0xff] %v2424
      %2539 = vst [vmem:[#allocation2 + $0x1e0] sm:$0xff] %v2427
      %2540 = vst [vmem:[#allocation2 + $0x1e8] sm:$0xff] %v2429
      %2541 = vst [vmem:[#allocation2 + $0x1f0] sm:$0xff] %v2432
      %2542 = vst [vmem:[#allocation2 + $0x1f8] sm:$0xff] %v2434
      %2543 = vst [vmem:[#allocation2 + $0x200] sm:$0xff] %v2437
      %2544 = vst [vmem:[#allocation2 + $0x208] sm:$0xff] %v2439
      %2545 = vst [vmem:[#allocation2 + $0x210] sm:$0xff] %v2442
      %2546 = vst [vmem:[#allocation2 + $0x218] sm:$0xff] %v2444
      %2547 = vst [vmem:[#allocation2 + $0x220] sm:$0xff] %v2447
      %2548 = vst [vmem:[#allocation2 + $0x228] sm:$0xff] %v2449
      %2549 = vst [vmem:[#allocation2 + $0x230] sm:$0xff] %v2452
      %2550 = vst [vmem:[#allocation2 + $0x238] sm:$0xff] %v2454
      %2551 = vst [vmem:[#allocation2 + $0x240] sm:$0xff] %v2457
      %2552 = vst [vmem:[#allocation2 + $0x248] sm:$0xff] %v2459
      %2553 = vst [vmem:[#allocation2 + $0x250] sm:$0xff] %v2462
      %2554 = vst [vmem:[#allocation2 + $0x258] sm:$0xff] %v2464
      %2555 = vst [vmem:[#allocation2 + $0x260] sm:$0xff] %v2467
      %2556 = vst [vmem:[#allocation2 + $0x268] sm:$0xff] %v2469
      %2557 = vst [vmem:[#allocation2 + $0x270] sm:$0xff] %v2472
      %2558 = vst [vmem:[#allocation2 + $0x278] sm:$0xff] %v2474
    $region41: #{tpu_custom_call.1} parent=1 // pred_fallthru
      _
    %p2559 = scmp.gt.s32.totalorder 0, 0
    // Predicated region
    $region42: #{tpu_custom_call.1} parent=1 // pred_check
      %p2560 = pneg %p2559
    $region43: #{tpu_custom_call.1} parent=1 // pred_check_branch
      %2562 = sbr.rel (%p2560) target = $region45
    $region44: #{tpu_custom_call.1} parent=1 // pred_region
      %v2563 = vld [vmem:[#allocation2] sm:$0xff]
      %v2564 = vld [vmem:[#allocation2 + $0x8] sm:$0xff]
      %v2565 = vld [vmem:[#allocation2 + $0x10] sm:$0xff]
      %v2566 = vld [vmem:[#allocation2 + $0x18] sm:$0xff]
      %v2567 = vld [vmem:[#allocation2 + $0x20] sm:$0xff]
      %v2568 = vld [vmem:[#allocation2 + $0x28] sm:$0xff]
      %v2569 = vld [vmem:[#allocation2 + $0x30] sm:$0xff]
      %v2570 = vld [vmem:[#allocation2 + $0x38] sm:$0xff]
      %v2571 = vld [vmem:[#allocation2 + $0x40] sm:$0xff]
      %v2572 = vld [vmem:[#allocation2 + $0x48] sm:$0xff]
      %v2573 = vld [vmem:[#allocation2 + $0x50] sm:$0xff]
      %v2574 = vld [vmem:[#allocation2 + $0x58] sm:$0xff]
      %v2575 = vld [vmem:[#allocation2 + $0x60] sm:$0xff]
      %v2576 = vld [vmem:[#allocation2 + $0x68] sm:$0xff]
      %v2577 = vld [vmem:[#allocation2 + $0x70] sm:$0xff]
      %v2578 = vld [vmem:[#allocation2 + $0x78] sm:$0xff]
      %v2579 = vld [vmem:[#allocation2 + $0x80] sm:$0xff]
      %v2580 = vld [vmem:[#allocation2 + $0x88] sm:$0xff]
      %v2581 = vld [vmem:[#allocation2 + $0x90] sm:$0xff]
      %v2582 = vld [vmem:[#allocation2 + $0x98] sm:$0xff]
      %v2583 = vld [vmem:[#allocation2 + $0xa0] sm:$0xff]
      %v2584 = vld [vmem:[#allocation2 + $0xa8] sm:$0xff]
      %v2585 = vld [vmem:[#allocation2 + $0xb0] sm:$0xff]
      %v2586 = vld [vmem:[#allocation2 + $0xb8] sm:$0xff]
      %v2587 = vld [vmem:[#allocation2 + $0xc0] sm:$0xff]
      %v2588 = vld [vmem:[#allocation2 + $0xc8] sm:$0xff]
      %v2589 = vld [vmem:[#allocation2 + $0xd0] sm:$0xff]
      %v2590 = vld [vmem:[#allocation2 + $0xd8] sm:$0xff]
      %v2591 = vld [vmem:[#allocation2 + $0xe0] sm:$0xff]
      %v2592 = vld [vmem:[#allocation2 + $0xe8] sm:$0xff]
      %v2593 = vld [vmem:[#allocation2 + $0xf0] sm:$0xff]
      %v2594 = vld [vmem:[#allocation2 + $0xf8] sm:$0xff]
      %v2595 = vld [vmem:[#allocation2 + $0x100] sm:$0xff]
      %v2596 = vld [vmem:[#allocation2 + $0x108] sm:$0xff]
      %v2597 = vld [vmem:[#allocation2 + $0x110] sm:$0xff]
      %v2598 = vld [vmem:[#allocation2 + $0x118] sm:$0xff]
      %v2599 = vld [vmem:[#allocation2 + $0x120] sm:$0xff]
      %v2600 = vld [vmem:[#allocation2 + $0x128] sm:$0xff]
      %v2601 = vld [vmem:[#allocation2 + $0x130] sm:$0xff]
      %v2602 = vld [vmem:[#allocation2 + $0x138] sm:$0xff]
      %v2603 = vld [vmem:[#allocation2 + $0x140] sm:$0xff]
      %v2604 = vld [vmem:[#allocation2 + $0x148] sm:$0xff]
      %v2605 = vld [vmem:[#allocation2 + $0x150] sm:$0xff]
      %v2606 = vld [vmem:[#allocation2 + $0x158] sm:$0xff]
      %v2607 = vld [vmem:[#allocation2 + $0x160] sm:$0xff]
      %v2608 = vld [vmem:[#allocation2 + $0x168] sm:$0xff]
      %v2609 = vld [vmem:[#allocation2 + $0x170] sm:$0xff]
      %v2610 = vld [vmem:[#allocation2 + $0x178] sm:$0xff]
      %v2611 = vld [vmem:[#allocation2 + $0x180] sm:$0xff]
      %v2612 = vld [vmem:[#allocation2 + $0x188] sm:$0xff]
      %v2613 = vld [vmem:[#allocation2 + $0x190] sm:$0xff]
      %v2614 = vld [vmem:[#allocation2 + $0x198] sm:$0xff]
      %v2615 = vld [vmem:[#allocation2 + $0x1a0] sm:$0xff]
      %v2616 = vld [vmem:[#allocation2 + $0x1a8] sm:$0xff]
      %v2617 = vld [vmem:[#allocation2 + $0x1b0] sm:$0xff]
      %v2618 = vld [vmem:[#allocation2 + $0x1b8] sm:$0xff]
      %v2619 = vld [vmem:[#allocation2 + $0x1c0] sm:$0xff]
      %v2620 = vld [vmem:[#allocation2 + $0x1c8] sm:$0xff]
      %v2621 = vld [vmem:[#allocation2 + $0x1d0] sm:$0xff]
      %v2622 = vld [vmem:[#allocation2 + $0x1d8] sm:$0xff]
      %v2623 = vld [vmem:[#allocation2 + $0x1e0] sm:$0xff]
      %v2624 = vld [vmem:[#allocation2 + $0x1e8] sm:$0xff]
      %v2625 = vld [vmem:[#allocation2 + $0x1f0] sm:$0xff]
      %v2626 = vld [vmem:[#allocation2 + $0x1f8] sm:$0xff]
      %v2627 = vld [vmem:[#allocation2 + $0x200] sm:$0xff]
      %v2628 = vld [vmem:[#allocation2 + $0x208] sm:$0xff]
      %v2629 = vld [vmem:[#allocation2 + $0x210] sm:$0xff]
      %v2630 = vld [vmem:[#allocation2 + $0x218] sm:$0xff]
      %v2631 = vld [vmem:[#allocation2 + $0x220] sm:$0xff]
      %v2632 = vld [vmem:[#allocation2 + $0x228] sm:$0xff]
      %v2633 = vld [vmem:[#allocation2 + $0x230] sm:$0xff]
      %v2634 = vld [vmem:[#allocation2 + $0x238] sm:$0xff]
      %v2635 = vld [vmem:[#allocation2 + $0x240] sm:$0xff]
      %v2636 = vld [vmem:[#allocation2 + $0x248] sm:$0xff]
      %v2637 = vld [vmem:[#allocation2 + $0x250] sm:$0xff]
      %v2638 = vld [vmem:[#allocation2 + $0x258] sm:$0xff]
      %v2639 = vld [vmem:[#allocation2 + $0x260] sm:$0xff]
      %v2640 = vld [vmem:[#allocation2 + $0x268] sm:$0xff]
      %v2641 = vld [vmem:[#allocation2 + $0x270] sm:$0xff]
      %v2642 = vld [vmem:[#allocation2 + $0x278] sm:$0xff]
      %v2643 = vadd.f32 %v2563, %v2277
      %v2644 = vadd.f32 %v2564, %v2279
      %v2645 = vadd.f32 %v2565, %v2282
      %v2646 = vadd.f32 %v2566, %v2284
      %v2647 = vadd.f32 %v2567, %v2287
      %v2648 = vadd.f32 %v2568, %v2289
      %v2649 = vadd.f32 %v2569, %v2292
      %v2650 = vadd.f32 %v2570, %v2294
      %v2651 = vadd.f32 %v2571, %v2297
      %v2652 = vadd.f32 %v2572, %v2299
      %v2653 = vadd.f32 %v2573, %v2302
      %v2654 = vadd.f32 %v2574, %v2304
      %v2655 = vadd.f32 %v2575, %v2307
      %v2656 = vadd.f32 %v2576, %v2309
      %v2657 = vadd.f32 %v2577, %v2312
      %v2658 = vadd.f32 %v2578, %v2314
      %v2659 = vadd.f32 %v2579, %v2317
      %v2660 = vadd.f32 %v2580, %v2319
      %v2661 = vadd.f32 %v2581, %v2322
      %v2662 = vadd.f32 %v2582, %v2324
      %v2663 = vadd.f32 %v2583, %v2327
      %v2664 = vadd.f32 %v2584, %v2329
      %v2665 = vadd.f32 %v2585, %v2332
      %v2666 = vadd.f32 %v2586, %v2334
      %v2667 = vadd.f32 %v2587, %v2337
      %v2668 = vadd.f32 %v2588, %v2339
      %v2669 = vadd.f32 %v2589, %v2342
      %v2670 = vadd.f32 %v2590, %v2344
      %v2671 = vadd.f32 %v2591, %v2347
      %v2672 = vadd.f32 %v2592, %v2349
      %v2673 = vadd.f32 %v2593, %v2352
      %v2674 = vadd.f32 %v2594, %v2354
      %v2675 = vadd.f32 %v2595, %v2357
      %v2676 = vadd.f32 %v2596, %v2359
      %v2677 = vadd.f32 %v2597, %v2362
      %v2678 = vadd.f32 %v2598, %v2364
      %v2679 = vadd.f32 %v2599, %v2367
      %v2680 = vadd.f32 %v2600, %v2369
      %v2681 = vadd.f32 %v2601, %v2372
      %v2682 = vadd.f32 %v2602, %v2374
      %v2683 = vadd.f32 %v2603, %v2377
      %v2684 = vadd.f32 %v2604, %v2379
      %v2685 = vadd.f32 %v2605, %v2382
      %v2686 = vadd.f32 %v2606, %v2384
      %v2687 = vadd.f32 %v2607, %v2387
      %v2688 = vadd.f32 %v2608, %v2389
      %v2689 = vadd.f32 %v2609, %v2392
      %v2690 = vadd.f32 %v2610, %v2394
      %v2691 = vadd.f32 %v2611, %v2397
      %v2692 = vadd.f32 %v2612, %v2399
      %v2693 = vadd.f32 %v2613, %v2402
      %v2694 = vadd.f32 %v2614, %v2404
      %v2695 = vadd.f32 %v2615, %v2407
      %v2696 = vadd.f32 %v2616, %v2409
      %v2697 = vadd.f32 %v2617, %v2412
      %v2698 = vadd.f32 %v2618, %v2414
      %v2699 = vadd.f32 %v2619, %v2417
      %v2700 = vadd.f32 %v2620, %v2419
      %v2701 = vadd.f32 %v2621, %v2422
      %v2702 = vadd.f32 %v2622, %v2424
      %v2703 = vadd.f32 %v2623, %v2427
      %v2704 = vadd.f32 %v2624, %v2429
      %v2705 = vadd.f32 %v2625, %v2432
      %v2706 = vadd.f32 %v2626, %v2434
      %v2707 = vadd.f32 %v2627, %v2437
      %v2708 = vadd.f32 %v2628, %v2439
      %v2709 = vadd.f32 %v2629, %v2442
      %v2710 = vadd.f32 %v2630, %v2444
      %v2711 = vadd.f32 %v2631, %v2447
      %v2712 = vadd.f32 %v2632, %v2449
      %v2713 = vadd.f32 %v2633, %v2452
      %v2714 = vadd.f32 %v2634, %v2454
      %v2715 = vadd.f32 %v2635, %v2457
      %v2716 = vadd.f32 %v2636, %v2459
      %v2717 = vadd.f32 %v2637, %v2462
      %v2718 = vadd.f32 %v2638, %v2464
      %v2719 = vadd.f32 %v2639, %v2467
      %v2720 = vadd.f32 %v2640, %v2469
      %v2721 = vadd.f32 %v2641, %v2472
      %v2722 = vadd.f32 %v2642, %v2474
      %2723 = vst [vmem:[#allocation2] sm:$0xff] %v2643
      %2724 = vst [vmem:[#allocation2 + $0x8] sm:$0xff] %v2644
      %2725 = vst [vmem:[#allocation2 + $0x10] sm:$0xff] %v2645
      %2726 = vst [vmem:[#allocation2 + $0x18] sm:$0xff] %v2646
      %2727 = vst [vmem:[#allocation2 + $0x20] sm:$0xff] %v2647
      %2728 = vst [vmem:[#allocation2 + $0x28] sm:$0xff] %v2648
      %2729 = vst [vmem:[#allocation2 + $0x30] sm:$0xff] %v2649
      %2730 = vst [vmem:[#allocation2 + $0x38] sm:$0xff] %v2650
      %2731 = vst [vmem:[#allocation2 + $0x40] sm:$0xff] %v2651
      %2732 = vst [vmem:[#allocation2 + $0x48] sm:$0xff] %v2652
      %2733 = vst [vmem:[#allocation2 + $0x50] sm:$0xff] %v2653
      %2734 = vst [vmem:[#allocation2 + $0x58] sm:$0xff] %v2654
      %2735 = vst [vmem:[#allocation2 + $0x60] sm:$0xff] %v2655
      %2736 = vst [vmem:[#allocation2 + $0x68] sm:$0xff] %v2656
      %2737 = vst [vmem:[#allocation2 + $0x70] sm:$0xff] %v2657
      %2738 = vst [vmem:[#allocation2 + $0x78] sm:$0xff] %v2658
      %2739 = vst [vmem:[#allocation2 + $0x80] sm:$0xff] %v2659
      %2740 = vst [vmem:[#allocation2 + $0x88] sm:$0xff] %v2660
      %2741 = vst [vmem:[#allocation2 + $0x90] sm:$0xff] %v2661
      %2742 = vst [vmem:[#allocation2 + $0x98] sm:$0xff] %v2662
      %2743 = vst [vmem:[#allocation2 + $0xa0] sm:$0xff] %v2663
      %2744 = vst [vmem:[#allocation2 + $0xa8] sm:$0xff] %v2664
      %2745 = vst [vmem:[#allocation2 + $0xb0] sm:$0xff] %v2665
      %2746 = vst [vmem:[#allocation2 + $0xb8] sm:$0xff] %v2666
      %2747 = vst [vmem:[#allocation2 + $0xc0] sm:$0xff] %v2667
      %2748 = vst [vmem:[#allocation2 + $0xc8] sm:$0xff] %v2668
      %2749 = vst [vmem:[#allocation2 + $0xd0] sm:$0xff] %v2669
      %2750 = vst [vmem:[#allocation2 + $0xd8] sm:$0xff] %v2670
      %2751 = vst [vmem:[#allocation2 + $0xe0] sm:$0xff] %v2671
      %2752 = vst [vmem:[#allocation2 + $0xe8] sm:$0xff] %v2672
      %2753 = vst [vmem:[#allocation2 + $0xf0] sm:$0xff] %v2673
      %2754 = vst [vmem:[#allocation2 + $0xf8] sm:$0xff] %v2674
      %2755 = vst [vmem:[#allocation2 + $0x100] sm:$0xff] %v2675
      %2756 = vst [vmem:[#allocation2 + $0x108] sm:$0xff] %v2676
      %2757 = vst [vmem:[#allocation2 + $0x110] sm:$0xff] %v2677
      %2758 = vst [vmem:[#allocation2 + $0x118] sm:$0xff] %v2678
      %2759 = vst [vmem:[#allocation2 + $0x120] sm:$0xff] %v2679
      %2760 = vst [vmem:[#allocation2 + $0x128] sm:$0xff] %v2680
      %2761 = vst [vmem:[#allocation2 + $0x130] sm:$0xff] %v2681
      %2762 = vst [vmem:[#allocation2 + $0x138] sm:$0xff] %v2682
      %2763 = vst [vmem:[#allocation2 + $0x140] sm:$0xff] %v2683
      %2764 = vst [vmem:[#allocation2 + $0x148] sm:$0xff] %v2684
      %2765 = vst [vmem:[#allocation2 + $0x150] sm:$0xff] %v2685
      %2766 = vst [vmem:[#allocation2 + $0x158] sm:$0xff] %v2686
      %2767 = vst [vmem:[#allocation2 + $0x160] sm:$0xff] %v2687
      %2768 = vst [vmem:[#allocation2 + $0x168] sm:$0xff] %v2688
      %2769 = vst [vmem:[#allocation2 + $0x170] sm:$0xff] %v2689
      %2770 = vst [vmem:[#allocation2 + $0x178] sm:$0xff] %v2690
      %2771 = vst [vmem:[#allocation2 + $0x180] sm:$0xff] %v2691
      %2772 = vst [vmem:[#allocation2 + $0x188] sm:$0xff] %v2692
      %2773 = vst [vmem:[#allocation2 + $0x190] sm:$0xff] %v2693
      %2774 = vst [vmem:[#allocation2 + $0x198] sm:$0xff] %v2694
      %2775 = vst [vmem:[#allocation2 + $0x1a0] sm:$0xff] %v2695
      %2776 = vst [vmem:[#allocation2 + $0x1a8] sm:$0xff] %v2696
      %2777 = vst [vmem:[#allocation2 + $0x1b0] sm:$0xff] %v2697
      %2778 = vst [vmem:[#allocation2 + $0x1b8] sm:$0xff] %v2698
      %2779 = vst [vmem:[#allocation2 + $0x1c0] sm:$0xff] %v2699
      %2780 = vst [vmem:[#allocation2 + $0x1c8] sm:$0xff] %v2700
      %2781 = vst [vmem:[#allocation2 + $0x1d0] sm:$0xff] %v2701
      %2782 = vst [vmem:[#allocation2 + $0x1d8] sm:$0xff] %v2702
      %2783 = vst [vmem:[#allocation2 + $0x1e0] sm:$0xff] %v2703
      %2784 = vst [vmem:[#allocation2 + $0x1e8] sm:$0xff] %v2704
      %2785 = vst [vmem:[#allocation2 + $0x1f0] sm:$0xff] %v2705
      %2786 = vst [vmem:[#allocation2 + $0x1f8] sm:$0xff] %v2706
      %2787 = vst [vmem:[#allocation2 + $0x200] sm:$0xff] %v2707
      %2788 = vst [vmem:[#allocation2 + $0x208] sm:$0xff] %v2708
      %2789 = vst [vmem:[#allocation2 + $0x210] sm:$0xff] %v2709
      %2790 = vst [vmem:[#allocation2 + $0x218] sm:$0xff] %v2710
      %2791 = vst [vmem:[#allocation2 + $0x220] sm:$0xff] %v2711
      %2792 = vst [vmem:[#allocation2 + $0x228] sm:$0xff] %v2712
      %2793 = vst [vmem:[#allocation2 + $0x230] sm:$0xff] %v2713
      %2794 = vst [vmem:[#allocation2 + $0x238] sm:$0xff] %v2714
      %2795 = vst [vmem:[#allocation2 + $0x240] sm:$0xff] %v2715
      %2796 = vst [vmem:[#allocation2 + $0x248] sm:$0xff] %v2716
      %2797 = vst [vmem:[#allocation2 + $0x250] sm:$0xff] %v2717
      %2798 = vst [vmem:[#allocation2 + $0x258] sm:$0xff] %v2718
      %2799 = vst [vmem:[#allocation2 + $0x260] sm:$0xff] %v2719
      %2800 = vst [vmem:[#allocation2 + $0x268] sm:$0xff] %v2720
      %2801 = vst [vmem:[#allocation2 + $0x270] sm:$0xff] %v2721
      %2802 = vst [vmem:[#allocation2 + $0x278] sm:$0xff] %v2722
    $region45: #{tpu_custom_call.1} parent=1 // pred_fallthru
      _
    // Predicated region
    $region46: #{tpu_custom_call.1} parent=1 // pred_check
      %p2803 = pneg %p65
    $region47: #{tpu_custom_call.1} parent=1 // pred_check_branch
      %2805 = sbr.rel (%p2803) target = $region49
    $region48: #{tpu_custom_call.1} parent=1 // pred_region
      %s2806 = sshra.s32 %s59, 3
      %s2807 = sand.u32 %s59, 7
      %s2808 = smul.addr %s2806, 4
      %s2809 = scalar_lea.vmem [#allocation4], %s2808
      %v2810 = vld [vmem:[%s2809] sm:$0xf]
      %v2811 = vld [vmem:[%s2809 + $0x4] sm:$0xf]
      %v2812 = vld [vmem:[%s2809 + $0x8] sm:$0xf]
      %v2813 = vld [vmem:[%s2809 + $0xc] sm:$0xf]
      %v2814 = vld [vmem:[%s2809 + $0x10] sm:$0xf]
      %v2815 = vld [vmem:[%s2809 + $0x14] sm:$0xf]
      %v2816 = vld [vmem:[%s2809 + $0x18] sm:$0xf]
      %v2817 = vld [vmem:[%s2809 + $0x1c] sm:$0xf]
      %v2818 = vld [vmem:[%s2809 + $0x20] sm:$0xf]
      %v2819 = vld [vmem:[%s2809 + $0x24] sm:$0xf]
      %v2820 = vld [vmem:[%s2809 + $0x28] sm:$0xf]
      %v2821 = vld [vmem:[%s2809 + $0x2c] sm:$0xf]
      %v2822 = vld [vmem:[%s2809 + $0x30] sm:$0xf]
      %v2823 = vld [vmem:[%s2809 + $0x34] sm:$0xf]
      %v2824 = vld [vmem:[%s2809 + $0x38] sm:$0xf]
      %v2825 = vld [vmem:[%s2809 + $0x3c] sm:$0xf]
      %v2826 = vunpack.c.l.bf16 %v2810
      %v2827 = vunpack.c.l.bf16 %v2811
      %v2828 = vunpack.c.l.bf16 %v2812
      %v2829 = vunpack.c.l.bf16 %v2813
      %v2830 = vunpack.c.l.bf16 %v2814
      %v2831 = vunpack.c.l.bf16 %v2815
      %v2832 = vunpack.c.l.bf16 %v2816
      %v2833 = vunpack.c.l.bf16 %v2817
      %v2834 = vunpack.c.l.bf16 %v2818
      %v2835 = vunpack.c.l.bf16 %v2819
      %v2836 = vunpack.c.l.bf16 %v2820
      %v2837 = vunpack.c.l.bf16 %v2821
      %v2838 = vunpack.c.l.bf16 %v2822
      %v2839 = vunpack.c.l.bf16 %v2823
      %v2840 = vunpack.c.l.bf16 %v2824
      %v2841 = vunpack.c.l.bf16 %v2825
      %v2842 = vld [vmem:[#allocation2] sm:$0xff]
      %v2843 = vld [vmem:[#allocation2 + $0x8] sm:$0xff]
      %v2844 = vld [vmem:[#allocation2 + $0x10] sm:$0xff]
      %v2845 = vld [vmem:[#allocation2 + $0x18] sm:$0xff]
      %v2846 = vld [vmem:[#allocation2 + $0x20] sm:$0xff]
      %v2847 = vld [vmem:[#allocation2 + $0x28] sm:$0xff]
      %v2848 = vld [vmem:[#allocation2 + $0x30] sm:$0xff]
      %v2849 = vld [vmem:[#allocation2 + $0x38] sm:$0xff]
      %v2850 = vld [vmem:[#allocation2 + $0x40] sm:$0xff]
      %v2851 = vld [vmem:[#allocation2 + $0x48] sm:$0xff]
      %v2852 = vld [vmem:[#allocation2 + $0x50] sm:$0xff]
      %v2853 = vld [vmem:[#allocation2 + $0x58] sm:$0xff]
      %v2854 = vld [vmem:[#allocation2 + $0x60] sm:$0xff]
      %v2855 = vld [vmem:[#allocation2 + $0x68] sm:$0xff]
      %v2856 = vld [vmem:[#allocation2 + $0x70] sm:$0xff]
      %v2857 = vld [vmem:[#allocation2 + $0x78] sm:$0xff]
      %v2858 = vld [vmem:[#allocation2 + $0x80] sm:$0xff]
      %v2859 = vld [vmem:[#allocation2 + $0x88] sm:$0xff]
      %v2860 = vld [vmem:[#allocation2 + $0x90] sm:$0xff]
      %v2861 = vld [vmem:[#allocation2 + $0x98] sm:$0xff]
      %v2862 = vld [vmem:[#allocation2 + $0xa0] sm:$0xff]
      %v2863 = vld [vmem:[#allocation2 + $0xa8] sm:$0xff]
      %v2864 = vld [vmem:[#allocation2 + $0xb0] sm:$0xff]
      %v2865 = vld [vmem:[#allocation2 + $0xb8] sm:$0xff]
      %v2866 = vld [vmem:[#allocation2 + $0xc0] sm:$0xff]
      %v2867 = vld [vmem:[#allocation2 + $0xc8] sm:$0xff]
      %v2868 = vld [vmem:[#allocation2 + $0xd0] sm:$0xff]
      %v2869 = vld [vmem:[#allocation2 + $0xd8] sm:$0xff]
      %v2870 = vld [vmem:[#allocation2 + $0xe0] sm:$0xff]
      %v2871 = vld [vmem:[#allocation2 + $0xe8] sm:$0xff]
      %v2872 = vld [vmem:[#allocation2 + $0xf0] sm:$0xff]
      %v2873 = vld [vmem:[#allocation2 + $0xf8] sm:$0xff]
      %v2874 = vld [vmem:[#allocation2 + $0x100] sm:$0xff]
      %v2875 = vld [vmem:[#allocation2 + $0x108] sm:$0xff]
      %v2876 = vld [vmem:[#allocation2 + $0x110] sm:$0xff]
      %v2877 = vld [vmem:[#allocation2 + $0x118] sm:$0xff]
      %v2878 = vld [vmem:[#allocation2 + $0x120] sm:$0xff]
      %v2879 = vld [vmem:[#allocation2 + $0x128] sm:$0xff]
      %v2880 = vld [vmem:[#allocation2 + $0x130] sm:$0xff]
      %v2881 = vld [vmem:[#allocation2 + $0x138] sm:$0xff]
      %v2882 = vld [vmem:[#allocation2 + $0x140] sm:$0xff]
      %v2883 = vld [vmem:[#allocation2 + $0x148] sm:$0xff]
      %v2884 = vld [vmem:[#allocation2 + $0x150] sm:$0xff]
      %v2885 = vld [vmem:[#allocation2 + $0x158] sm:$0xff]
      %v2886 = vld [vmem:[#allocation2 + $0x160] sm:$0xff]
      %v2887 = vld [vmem:[#allocation2 + $0x168] sm:$0xff]
      %v2888 = vld [vmem:[#allocation2 + $0x170] sm:$0xff]
      %v2889 = vld [vmem:[#allocation2 + $0x178] sm:$0xff]
      %v2890 = vld [vmem:[#allocation2 + $0x180] sm:$0xff]
      %v2891 = vld [vmem:[#allocation2 + $0x188] sm:$0xff]
      %v2892 = vld [vmem:[#allocation2 + $0x190] sm:$0xff]
      %v2893 = vld [vmem:[#allocation2 + $0x198] sm:$0xff]
      %v2894 = vld [vmem:[#allocation2 + $0x1a0] sm:$0xff]
      %v2895 = vld [vmem:[#allocation2 + $0x1a8] sm:$0xff]
      %v2896 = vld [vmem:[#allocation2 + $0x1b0] sm:$0xff]
      %v2897 = vld [vmem:[#allocation2 + $0x1b8] sm:$0xff]
      %v2898 = vld [vmem:[#allocation2 + $0x1c0] sm:$0xff]
      %v2899 = vld [vmem:[#allocation2 + $0x1c8] sm:$0xff]
      %v2900 = vld [vmem:[#allocation2 + $0x1d0] sm:$0xff]
      %v2901 = vld [vmem:[#allocation2 + $0x1d8] sm:$0xff]
      %v2902 = vld [vmem:[#allocation2 + $0x1e0] sm:$0xff]
      %v2903 = vld [vmem:[#allocation2 + $0x1e8] sm:$0xff]
      %v2904 = vld [vmem:[#allocation2 + $0x1f0] sm:$0xff]
      %v2905 = vld [vmem:[#allocation2 + $0x1f8] sm:$0xff]
      %v2906 = vld [vmem:[#allocation2 + $0x200] sm:$0xff]
      %v2907 = vld [vmem:[#allocation2 + $0x208] sm:$0xff]
      %v2908 = vld [vmem:[#allocation2 + $0x210] sm:$0xff]
      %v2909 = vld [vmem:[#allocation2 + $0x218] sm:$0xff]
      %v2910 = vld [vmem:[#allocation2 + $0x220] sm:$0xff]
      %v2911 = vld [vmem:[#allocation2 + $0x228] sm:$0xff]
      %v2912 = vld [vmem:[#allocation2 + $0x230] sm:$0xff]
      %v2913 = vld [vmem:[#allocation2 + $0x238] sm:$0xff]
      %v2914 = vld [vmem:[#allocation2 + $0x240] sm:$0xff]
      %v2915 = vld [vmem:[#allocation2 + $0x248] sm:$0xff]
      %v2916 = vld [vmem:[#allocation2 + $0x250] sm:$0xff]
      %v2917 = vld [vmem:[#allocation2 + $0x258] sm:$0xff]
      %v2918 = vld [vmem:[#allocation2 + $0x260] sm:$0xff]
      %v2919 = vld [vmem:[#allocation2 + $0x268] sm:$0xff]
      %v2920 = vld [vmem:[#allocation2 + $0x270] sm:$0xff]
      %v2921 = vld [vmem:[#allocation2 + $0x278] sm:$0xff]
      %v2922 = vmul.f32 %v2826, %v2842
      %v2923 = vmul.f32 %v2827, %v2843
      %v2924 = vmul.f32 %v2828, %v2844
      %v2925 = vmul.f32 %v2829, %v2845
      %v2926 = vmul.f32 %v2830, %v2846
      %v2927 = vmul.f32 %v2831, %v2847
      %v2928 = vmul.f32 %v2832, %v2848
      %v2929 = vmul.f32 %v2833, %v2849
      %v2930 = vmul.f32 %v2834, %v2850
      %v2931 = vmul.f32 %v2835, %v2851
      %v2932 = vmul.f32 %v2836, %v2852
      %v2933 = vmul.f32 %v2837, %v2853
      %v2934 = vmul.f32 %v2838, %v2854
      %v2935 = vmul.f32 %v2839, %v2855
      %v2936 = vmul.f32 %v2840, %v2856
      %v2937 = vmul.f32 %v2841, %v2857
      %v2938 = vmul.f32 %v2826, %v2858
      %v2939 = vmul.f32 %v2827, %v2859
      %v2940 = vmul.f32 %v2828, %v2860
      %v2941 = vmul.f32 %v2829, %v2861
      %v2942 = vmul.f32 %v2830, %v2862
      %v2943 = vmul.f32 %v2831, %v2863
      %v2944 = vmul.f32 %v2832, %v2864
      %v2945 = vmul.f32 %v2833, %v2865
      %v2946 = vmul.f32 %v2834, %v2866
      %v2947 = vmul.f32 %v2835, %v2867
      %v2948 = vmul.f32 %v2836, %v2868
      %v2949 = vmul.f32 %v2837, %v2869
      %v2950 = vmul.f32 %v2838, %v2870
      %v2951 = vmul.f32 %v2839, %v2871
      %v2952 = vmul.f32 %v2840, %v2872
      %v2953 = vmul.f32 %v2841, %v2873
      %v2954 = vadd.f32 %v2826, %v2827
      %v2955 = vadd.f32 %v2954, %v2828
      %v2956 = vadd.f32 %v2955, %v2829
      %v2957 = vadd.f32 %v2956, %v2830
      %v2958 = vadd.f32 %v2957, %v2831
      %v2959 = vadd.f32 %v2958, %v2832
      %v2960 = vadd.f32 %v2959, %v2833
      %v2961 = vadd.f32 %v2960, %v2834
      %v2962 = vadd.f32 %v2961, %v2835
      %v2963 = vadd.f32 %v2962, %v2836
      %v2964 = vadd.f32 %v2963, %v2837
      %v2965 = vadd.f32 %v2964, %v2838
      %v2966 = vadd.f32 %v2965, %v2839
      %v2967 = vadd.f32 %v2966, %v2840
      %v2968 = vadd.f32 %v2967, %v2841
      %v2969 = vrot.slane %v2968, 4
      %v2970 = vadd.f32 %v2968, %v2969
      %v2971 = vrot.slane %v2970, 2
      %v2972 = vadd.f32 %v2970, %v2971
      %v2973 = vrot.slane %v2972, 1
      %v2974 = vadd.f32 %v2972, %v2973
      %v2975 = vadd.f32 %v2922, %v2923
      %v2976 = vadd.f32 %v2975, %v2924
      %v2977 = vadd.f32 %v2976, %v2925
      %v2978 = vadd.f32 %v2977, %v2926
      %v2979 = vadd.f32 %v2978, %v2927
      %v2980 = vadd.f32 %v2979, %v2928
      %v2981 = vadd.f32 %v2980, %v2929
      %v2982 = vadd.f32 %v2981, %v2930
      %v2983 = vadd.f32 %v2982, %v2931
      %v2984 = vadd.f32 %v2983, %v2932
      %v2985 = vadd.f32 %v2984, %v2933
      %v2986 = vadd.f32 %v2985, %v2934
      %v2987 = vadd.f32 %v2986, %v2935
      %v2988 = vadd.f32 %v2987, %v2936
      %v2989 = vadd.f32 %v2988, %v2937
      %v2990 = vrot.slane %v2989, 4
      %v2991 = vadd.f32 %v2989, %v2990
      %v2992 = vrot.slane %v2991, 2
      %v2993 = vadd.f32 %v2991, %v2992
      %v2994 = vrot.slane %v2993, 1
      %v2995 = vadd.f32 %v2993, %v2994
      %v2996 = vadd.f32 %v2938, %v2939
      %v2997 = vadd.f32 %v2996, %v2940
      %v2998 = vadd.f32 %v2997, %v2941
      %v2999 = vadd.f32 %v2998, %v2942
      %v3000 = vadd.f32 %v2999, %v2943
      %v3001 = vadd.f32 %v3000, %v2944
      %v3002 = vadd.f32 %v3001, %v2945
      %v3003 = vadd.f32 %v3002, %v2946
      %v3004 = vadd.f32 %v3003, %v2947
      %v3005 = vadd.f32 %v3004, %v2948
      %v3006 = vadd.f32 %v3005, %v2949
      %v3007 = vadd.f32 %v3006, %v2950
      %v3008 = vadd.f32 %v3007, %v2951
      %v3009 = vadd.f32 %v3008, %v2952
      %v3010 = vadd.f32 %v3009, %v2953
      %v3011 = vrot.slane %v3010, 4
      %v3012 = vadd.f32 %v3010, %v3011
      %v3013 = vrot.slane %v3012, 2
      %v3014 = vadd.f32 %v3012, %v3013
      %v3015 = vrot.slane %v3014, 1
      %v3016 = vadd.f32 %v3014, %v3015
      %v3017 = vmul.f32 %v2922, %v2858
      %v3018 = vmul.f32 %v2923, %v2859
      %v3019 = vmul.f32 %v2924, %v2860
      %v3020 = vmul.f32 %v2925, %v2861
      %v3021 = vmul.f32 %v2926, %v2862
      %v3022 = vmul.f32 %v2927, %v2863
      %v3023 = vmul.f32 %v2928, %v2864
      %v3024 = vmul.f32 %v2929, %v2865
      %v3025 = vmul.f32 %v2930, %v2866
      %v3026 = vmul.f32 %v2931, %v2867
      %v3027 = vmul.f32 %v2932, %v2868
      %v3028 = vmul.f32 %v2933, %v2869
      %v3029 = vmul.f32 %v2934, %v2870
      %v3030 = vmul.f32 %v2935, %v2871
      %v3031 = vmul.f32 %v2936, %v2872
      %v3032 = vmul.f32 %v2937, %v2873
      %v3033 = vadd.f32 %v3017, %v3018
      %v3034 = vadd.f32 %v3033, %v3019
      %v3035 = vadd.f32 %v3034, %v3020
      %v3036 = vadd.f32 %v3035, %v3021
      %v3037 = vadd.f32 %v3036, %v3022
      %v3038 = vadd.f32 %v3037, %v3023
      %v3039 = vadd.f32 %v3038, %v3024
      %v3040 = vadd.f32 %v3039, %v3025
      %v3041 = vadd.f32 %v3040, %v3026
      %v3042 = vadd.f32 %v3041, %v3027
      %v3043 = vadd.f32 %v3042, %v3028
      %v3044 = vadd.f32 %v3043, %v3029
      %v3045 = vadd.f32 %v3044, %v3030
      %v3046 = vadd.f32 %v3045, %v3031
      %v3047 = vadd.f32 %v3046, %v3032
      %v3048 = vrot.slane %v3047, 4
      %v3049 = vadd.f32 %v3047, %v3048
      %v3050 = vrot.slane %v3049, 2
      %v3051 = vadd.f32 %v3049, %v3050
      %v3052 = vrot.slane %v3051, 1
      %v3053 = vadd.f32 %v3051, %v3052
      %v3054 = vmul.f32 %v2922, %v2842
      %v3055 = vmul.f32 %v2923, %v2843
      %v3056 = vmul.f32 %v2924, %v2844
      %v3057 = vmul.f32 %v2925, %v2845
      %v3058 = vmul.f32 %v2926, %v2846
      %v3059 = vmul.f32 %v2927, %v2847
      %v3060 = vmul.f32 %v2928, %v2848
      %v3061 = vmul.f32 %v2929, %v2849
      %v3062 = vmul.f32 %v2930, %v2850
      %v3063 = vmul.f32 %v2931, %v2851
      %v3064 = vmul.f32 %v2932, %v2852
      %v3065 = vmul.f32 %v2933, %v2853
      %v3066 = vmul.f32 %v2934, %v2854
      %v3067 = vmul.f32 %v2935, %v2855
      %v3068 = vmul.f32 %v2936, %v2856
      %v3069 = vmul.f32 %v2937, %v2857
      %v3070 = vadd.f32 %v3054, %v3055
      %v3071 = vadd.f32 %v3070, %v3056
      %v3072 = vadd.f32 %v3071, %v3057
      %v3073 = vadd.f32 %v3072, %v3058
      %v3074 = vadd.f32 %v3073, %v3059
      %v3075 = vadd.f32 %v3074, %v3060
      %v3076 = vadd.f32 %v3075, %v3061
      %v3077 = vadd.f32 %v3076, %v3062
      %v3078 = vadd.f32 %v3077, %v3063
      %v3079 = vadd.f32 %v3078, %v3064
      %v3080 = vadd.f32 %v3079, %v3065
      %v3081 = vadd.f32 %v3080, %v3066
      %v3082 = vadd.f32 %v3081, %v3067
      %v3083 = vadd.f32 %v3082, %v3068
      %v3084 = vadd.f32 %v3083, %v3069
      %v3085 = vrot.slane %v3084, 4
      %v3086 = vadd.f32 %v3084, %v3085
      %v3087 = vrot.slane %v3086, 2
      %v3088 = vadd.f32 %v3086, %v3087
      %v3089 = vrot.slane %v3088, 1
      %v3090 = vadd.f32 %v3088, %v3089
      %v3091 = vmul.f32 %v2938, %v2858
      %v3092 = vmul.f32 %v2939, %v2859
      %v3093 = vmul.f32 %v2940, %v2860
      %v3094 = vmul.f32 %v2941, %v2861
      %v3095 = vmul.f32 %v2942, %v2862
      %v3096 = vmul.f32 %v2943, %v2863
      %v3097 = vmul.f32 %v2944, %v2864
      %v3098 = vmul.f32 %v2945, %v2865
      %v3099 = vmul.f32 %v2946, %v2866
      %v3100 = vmul.f32 %v2947, %v2867
      %v3101 = vmul.f32 %v2948, %v2868
      %v3102 = vmul.f32 %v2949, %v2869
      %v3103 = vmul.f32 %v2950, %v2870
      %v3104 = vmul.f32 %v2951, %v2871
      %v3105 = vmul.f32 %v2952, %v2872
      %v3106 = vmul.f32 %v2953, %v2873
      %v3107 = vadd.f32 %v3091, %v3092
      %v3108 = vadd.f32 %v3107, %v3093
      %v3109 = vadd.f32 %v3108, %v3094
      %v3110 = vadd.f32 %v3109, %v3095
      %v3111 = vadd.f32 %v3110, %v3096
      %v3112 = vadd.f32 %v3111, %v3097
      %v3113 = vadd.f32 %v3112, %v3098
      %v3114 = vadd.f32 %v3113, %v3099
      %v3115 = vadd.f32 %v3114, %v3100
      %v3116 = vadd.f32 %v3115, %v3101
      %v3117 = vadd.f32 %v3116, %v3102
      %v3118 = vadd.f32 %v3117, %v3103
      %v3119 = vadd.f32 %v3118, %v3104
      %v3120 = vadd.f32 %v3119, %v3105
      %v3121 = vadd.f32 %v3120, %v3106
      %v3122 = vrot.slane %v3121, 4
      %v3123 = vadd.f32 %v3121, %v3122
      %v3124 = vrot.slane %v3123, 2
      %v3125 = vadd.f32 %v3123, %v3124
      %v3126 = vrot.slane %v3125, 1
      %v3127 = vadd.f32 %v3125, %v3126
      %v3128 = vmul.f32 %v2826, %v2874
      %v3129 = vmul.f32 %v2827, %v2875
      %v3130 = vmul.f32 %v2828, %v2876
      %v3131 = vmul.f32 %v2829, %v2877
      %v3132 = vmul.f32 %v2830, %v2878
      %v3133 = vmul.f32 %v2831, %v2879
      %v3134 = vmul.f32 %v2832, %v2880
      %v3135 = vmul.f32 %v2833, %v2881
      %v3136 = vmul.f32 %v2834, %v2882
      %v3137 = vmul.f32 %v2835, %v2883
      %v3138 = vmul.f32 %v2836, %v2884
      %v3139 = vmul.f32 %v2837, %v2885
      %v3140 = vmul.f32 %v2838, %v2886
      %v3141 = vmul.f32 %v2839, %v2887
      %v3142 = vmul.f32 %v2840, %v2888
      %v3143 = vmul.f32 %v2841, %v2889
      %v3144 = vadd.f32 %v3128, %v3129
      %v3145 = vadd.f32 %v3144, %v3130
      %v3146 = vadd.f32 %v3145, %v3131
      %v3147 = vadd.f32 %v3146, %v3132
      %v3148 = vadd.f32 %v3147, %v3133
      %v3149 = vadd.f32 %v3148, %v3134
      %v3150 = vadd.f32 %v3149, %v3135
      %v3151 = vadd.f32 %v3150, %v3136
      %v3152 = vadd.f32 %v3151, %v3137
      %v3153 = vadd.f32 %v3152, %v3138
      %v3154 = vadd.f32 %v3153, %v3139
      %v3155 = vadd.f32 %v3154, %v3140
      %v3156 = vadd.f32 %v3155, %v3141
      %v3157 = vadd.f32 %v3156, %v3142
      %v3158 = vadd.f32 %v3157, %v3143
      %v3159 = vrot.slane %v3158, 4
      %v3160 = vadd.f32 %v3158, %v3159
      %v3161 = vrot.slane %v3160, 2
      %v3162 = vadd.f32 %v3160, %v3161
      %v3163 = vrot.slane %v3162, 1
      %v3164 = vadd.f32 %v3162, %v3163
      %v3165 = vmul.f32 %v2826, %v2890
      %v3166 = vmul.f32 %v2827, %v2891
      %v3167 = vmul.f32 %v2828, %v2892
      %v3168 = vmul.f32 %v2829, %v2893
      %v3169 = vmul.f32 %v2830, %v2894
      %v3170 = vmul.f32 %v2831, %v2895
      %v3171 = vmul.f32 %v2832, %v2896
      %v3172 = vmul.f32 %v2833, %v2897
      %v3173 = vmul.f32 %v2834, %v2898
      %v3174 = vmul.f32 %v2835, %v2899
      %v3175 = vmul.f32 %v2836, %v2900
      %v3176 = vmul.f32 %v2837, %v2901
      %v3177 = vmul.f32 %v2838, %v2902
      %v3178 = vmul.f32 %v2839, %v2903
      %v3179 = vmul.f32 %v2840, %v2904
      %v3180 = vmul.f32 %v2841, %v2905
      %v3181 = vadd.f32 %v3165, %v3166
      %v3182 = vadd.f32 %v3181, %v3167
      %v3183 = vadd.f32 %v3182, %v3168
      %v3184 = vadd.f32 %v3183, %v3169
      %v3185 = vadd.f32 %v3184, %v3170
      %v3186 = vadd.f32 %v3185, %v3171
      %v3187 = vadd.f32 %v3186, %v3172
      %v3188 = vadd.f32 %v3187, %v3173
      %v3189 = vadd.f32 %v3188, %v3174
      %v3190 = vadd.f32 %v3189, %v3175
      %v3191 = vadd.f32 %v3190, %v3176
      %v3192 = vadd.f32 %v3191, %v3177
      %v3193 = vadd.f32 %v3192, %v3178
      %v3194 = vadd.f32 %v3193, %v3179
      %v3195 = vadd.f32 %v3194, %v3180
      %v3196 = vrot.slane %v3195, 4
      %v3197 = vadd.f32 %v3195, %v3196
      %v3198 = vrot.slane %v3197, 2
      %v3199 = vadd.f32 %v3197, %v3198
      %v3200 = vrot.slane %v3199, 1
      %v3201 = vadd.f32 %v3199, %v3200
      %v3202 = vmul.f32 %v2826, %v2906
      %v3203 = vmul.f32 %v2827, %v2907
      %v3204 = vmul.f32 %v2828, %v2908
      %v3205 = vmul.f32 %v2829, %v2909
      %v3206 = vmul.f32 %v2830, %v2910
      %v3207 = vmul.f32 %v2831, %v2911
      %v3208 = vmul.f32 %v2832, %v2912
      %v3209 = vmul.f32 %v2833, %v2913
      %v3210 = vmul.f32 %v2834, %v2914
      %v3211 = vmul.f32 %v2835, %v2915
      %v3212 = vmul.f32 %v2836, %v2916
      %v3213 = vmul.f32 %v2837, %v2917
      %v3214 = vmul.f32 %v2838, %v2918
      %v3215 = vmul.f32 %v2839, %v2919
      %v3216 = vmul.f32 %v2840, %v2920
      %v3217 = vmul.f32 %v2841, %v2921
      %v3218 = vadd.f32 %v3202, %v3203
      %v3219 = vadd.f32 %v3218, %v3204
      %v3220 = vadd.f32 %v3219, %v3205
      %v3221 = vadd.f32 %v3220, %v3206
      %v3222 = vadd.f32 %v3221, %v3207
      %v3223 = vadd.f32 %v3222, %v3208
      %v3224 = vadd.f32 %v3223, %v3209
      %v3225 = vadd.f32 %v3224, %v3210
      %v3226 = vadd.f32 %v3225, %v3211
      %v3227 = vadd.f32 %v3226, %v3212
      %v3228 = vadd.f32 %v3227, %v3213
      %v3229 = vadd.f32 %v3228, %v3214
      %v3230 = vadd.f32 %v3229, %v3215
      %v3231 = vadd.f32 %v3230, %v3216
      %v3232 = vadd.f32 %v3231, %v3217
      %v3233 = vrot.slane %v3232, 4
      %v3234 = vadd.f32 %v3232, %v3233
      %v3235 = vrot.slane %v3234, 2
      %v3236 = vadd.f32 %v3234, %v3235
      %v3237 = vrot.slane %v3236, 1
      %v3238 = vadd.f32 %v3236, %v3237
      %vm3239 = vcmask 1040384
      %v3240 = vsel %vm3239, %v2974, %v2995
      %vm3241 = vcmask 1041408
      %v3242 = vsel %vm3241, %v3240, %v3016
      %vm3243 = vcmask 1042432
      %v3244 = vsel %vm3243, %v3242, %v3053
      %v3245 = vsel %vm624, %v3244, %v3090
      %vm3246 = vcmask 1044480
      %v3247 = vsel %vm3246, %v3245, %v3127
      %vm3248 = vcmask 1045504
      %v3249 = vsel %vm3248, %v3247, %v3164
      %vm3250 = vcmask 1046528
      %v3251 = vsel %vm3250, %v3249, %v3201
      %v3252 = vsel %vm3239, %v3238, 0.0
      %v3253 = vld [vmem:[#allocation5] sm:$0xff]
      %v3254 = vld [vmem:[#allocation5 + $0x8] sm:$0xff]
      %v3255 = vadd.f32 %v3253, %v3251
      %v3256 = vadd.f32 %v3254, %v3252
      %3257 = vst [vmem:[#allocation5] sm:$0xff] %v3255
      %3258 = vst [vmem:[#allocation5 + $0x8] sm:$0xff] %v3256
    $region49: #{tpu_custom_call.1} parent=1 // pred_fallthru
      _
    // Predicated region
    $region50: #{tpu_custom_call.1} parent=1 // pred_check
      _
    $region51: #{tpu_custom_call.1} parent=1 // pred_check_branch
      %3260 = sbr.rel (%p66) target = $region53
    $region52: #{tpu_custom_call.1} parent=1 // pred_region
      %v3261 = vld [vmem:[#allocation5] sm:$0xff]
      %v3262 = vld [vmem:[#allocation5 + $0x8] sm:$0xff]
      %v3263 = vadd.f32 %v3261, 1e-12
      %v3264 = vrcp.pop %v3263
      %v3265 = vmul.f32 %v3263, %v3264
      %v3266 = vsub.f32 1.0, %v3265
      %v3267 = vmul.f32 %v3264, %v3266
      %v3268 = vadd.f32 %v3264, %v3267
      %vm3269 = vweird.f32 %v3263
      %vm3270 = vweird.f32 %v3264
      %vm3271 = vmor %vm3269, %vm3270
      %v3272 = vsel %vm3271, %v3264, %v3268
      %v3273 = vand.u32 2147483647, %v3263
      %vm3274 = vcmp.eq.f32.partialorder %v3273, 8.507059e+37
      %v3275 = vand.u32 %v3263, 2147483648
      %v3276 = vor.u32 1.1754944e-38, %v3275
      %v3277 = vsel %vm3274, %v3276, %v3272
      %v3278 = vmul.f32 1.0, %v3277
      %v3279 = vmul.f32 %v3261, 2.0
      %v3281 = vrot.slane %v3278, 5
      %v3283 = vmul.f32 %v3279, %v3281
      %v3285 = vrot.slane %v3283, 5
      %v3287 = vsub.f32 %v3261, %v3285
      %v3289 = vrot.slane %v3261, 1
      %v3291 = vmul.f32 %v3261, %v3289
      %v3292 = vrot.slane %v3278, 7
      %v3294 = vmul.f32 %v3291, %v3292
      %v3295 = vmul.f32 %v3294, %v3292
      %v3297 = vrot.slane %v3295, 3
      %v3299 = vadd.f32 %v3287, %v3297
      %v3300 = vrot.slane %v3278, 4
      %v3302 = vmul.f32 %v3279, %v3300
      %v3304 = vrot.slane %v3302, 5
      %v3306 = vsub.f32 %v3261, %v3304
      %v3307 = vmul.f32 %v3261, %v3261
      %v3308 = vmul.f32 %v3307, %v3292
      %v3309 = vmul.f32 %v3308, %v3292
      %v3311 = vrot.slane %v3309, 2
      %v3313 = vadd.f32 %v3306, %v3311
      %v3314 = vrot.slane %v3278, 3
      %v3316 = vmul.f32 %v3279, %v3314
      %v3318 = vrot.slane %v3316, 5
      %v3320 = vsub.f32 %v3262, %v3318
      %v3321 = vrot.slane %v3278, 6
      %v3323 = vmul.f32 %v3307, %v3321
      %v3324 = vmul.f32 %v3323, %v3321
      %v3326 = vrot.slane %v3324, 2
      %v3328 = vadd.f32 %v3320, %v3326
      %v3330 = vrot.slane %v3328, 1
      %v3332 = vmul.f32 %v3313, %v3330
      %v3333 = vmax.f32 %v3332, 1e-12
      %v3334 = vrsqrt.pop %v3333
      %v3335 = vmul.f32 %v3334, %v3333
      %v3336 = vmul.f32 %v3335, %v3334
      %v3337 = vmul.f32 0.5, %v3336
      %v3338 = vsub.f32 1.5, %v3337
      %v3339 = vmul.f32 %v3334, %v3338
      %vm3340 = vweird.f32 %v3333
      %vm3341 = vweird.f32 %v3334
      %vm3342 = vmor %vm3340, %vm3341
      %v3343 = vsel %vm3342, %v3334, %v3339
      %v3345 = vrot.slane %v3343, 1
      %v3347 = vmul.f32 %v3299, %v3345
      %v3348 = vlaneseq
      %v3349 = vand.u32 %v3348, 127
      %v3350 = vstv %s61
      %v3351 = vadd.s32 %v3350, %v3349
      %vm3352 = vcmp.lt.s32.totalorder %v3351, 16
      %v3353 = vsel %vm3352, %v3347, 0.0
      %3354 = vst [vmem:[#allocation13 - $0x6] sm:$0x40] %v3353
    $region53: #{tpu_custom_call.1} parent=1 // pred_fallthru
      _
    // Predicated region
    $region54: #{tpu_custom_call.1} parent=1 // pred_check
      _
    $region55: #{tpu_custom_call.1} parent=1 // pred_check_branch
      %3356 = sbr.rel (0) target = $region57
    $region56: #{tpu_custom_call.1} parent=1 // pred_region
      %3358 = vsyncadd [#allocation8], 0
      %s3360 = sshll.u32 [#allocation13], 4
      %s3361 = int_to_ptr.vmem [resolvable:$true] %s3360
      %s3362 = sshll.u32 %s4, 4
      %s3363 = int_to_ptr.hbm [resolvable:$true] %s3362
      %3365 = dma.vmem_to_hbm [thread:$0]  %s3361, 16, %s3363, [#allocation8]
    $region57: #{tpu_custom_call.1} parent=1 // pred_fallthru
      _
    // Predicated region
    $region58: #{tpu_custom_call.1} parent=1 // pred_check
      _
    $region59: #{tpu_custom_call.1} parent=1 // pred_check_branch
      %3367 = sbr.rel (0) target = $region61
    $region60: #{tpu_custom_call.1} parent=1 // pred_region
      %3369 = dma.done [#allocation8], 16
    $region61: #{tpu_custom_call.1} parent=1 // pred_fallthru
      _
    %3370 = vsyncpa [#allocation7], 1
    %3371 = vsyncpa [#allocation12], 1
    %3372 = vsyncpa [#allocation8], 1
    %3373 = vsyncpa [#allocation9], 1

</llo_original>
